<compile_context>
chip_gen: v6e
topology: v6e:2x2x1
jax: 0.10.0
libtpu: 0.0.40
codegen_flags: <defaults>
</compile_context>

<pallas_src>
import functools

import jax
import jax.numpy as jnp
from jax.experimental import pallas as pl
from jax.experimental.pallas import tpu as pltpu


_INV_SQRT2 = 0.7071067811865476


# ---------------------------------------------------------------------------
# In-kernel helpers
# ---------------------------------------------------------------------------
def _layernorm(x, w, b, eps=1e-5):
    # x: (R, E); w, b: (1, E)  (PyTorch LayerNorm: biased variance, eps=1e-5)
    mu = jnp.mean(x, axis=-1, keepdims=True)
    var = jnp.mean((x - mu) ** 2, axis=-1, keepdims=True)
    return (x - mu) * jax.lax.rsqrt(var + eps) * w + b


def _gelu_exact(x):
    # nn.GELU() default = exact erf formulation
    return 0.5 * x * (1.0 + jax.lax.erf(x * _INV_SQRT2))


# ---------------------------------------------------------------------------
# Single fused kernel: embed -> depth x encoder block -> classification head
# ---------------------------------------------------------------------------
def _vit_kernel(patch_ref, pw_ref, add_ref,
                wqkv_ref, bqkv_ref, wo_ref, bo_ref,
                ln1w_ref, ln1b_ref, ln2w_ref, ln2b_ref,
                w1_ref, b1_ref, w2_ref, b2_ref,
                clnw_ref, clnb_ref, hw_ref, hb_ref,
                out_ref, *, num_heads, depth, emb_size, tokens_per_batch):
    E = emb_size
    H = num_heads
    d = E // H
    R = patch_ref.shape[0]                 # padded row count (multiple of 8)
    N = tokens_per_batch
    inv_scale = 1.0 / (E ** 0.5)           # applied AFTER softmax (ref quirk)

    # ---- Embedding: conv(k=2,s=2) as ONE dense matmul over all rows -------
    # cls / padding rows of patch_ref are zero; add_ref carries
    # (cls + pos[0]) on cls rows and (conv_bias + pos) on patch rows.
    x = jnp.dot(patch_ref[...], pw_ref[...],
                preferred_element_type=jnp.float32) + add_ref[...]    # (R, E)

    # ---- Loop-invariant masks, generated in-kernel (hoisted) --------------
    # (a) per-head column selectors: head_sel[h][r, c] = 1.0 iff c in head h.
    col_idx = jax.lax.broadcasted_iota(jnp.int32, (R, E), 1)
    head_sel = [((col_idx >= h * d) & (col_idx < (h + 1) * d)).astype(jnp.float32)
                for h in range(H)]
    # (b) block-diagonal batch mask over packed rows, tiled per head along the
    #     sublane axis: attn_mask[h*R + i, j] = 0 same batch, -1e30 otherwise.
    #     Padding rows (>= B*N) form their own block, so they never leak into
    #     real rows' softmax and never hit a 0/0.
    ri = jax.lax.broadcasted_iota(jnp.int32, (R, R), 0)
    ci = jax.lax.broadcasted_iota(jnp.int32, (R, R), 1)
    same = None
    for b in range((R + N - 1) // N):
        lo, hi = b * N, (b + 1) * N
        blk = ((ri >= lo) & (ri < hi)) & ((ci >= lo) & (ci < hi))
        same = blk if same is None else (same | blk)
    base_mask = jnp.where(same, 0.0, -1e30).astype(jnp.float32)        # (R, R)
    attn_mask = jnp.concatenate([base_mask] * H, axis=0)               # (H*R, R)

    # ---- Encoder blocks (static unrolled; weights resident in VMEM) -------
    for l in range(depth):
        # LayerNorm 1
        h1 = _layernorm(x, ln1w_ref[l], ln1b_ref[l])

        # Fused QKV projection over all rows
        qkv = jnp.dot(h1, wqkv_ref[l],
                      preferred_element_type=jnp.float32) + bqkv_ref[l]
        q = qkv[:, 0:E]
        k = qkv[:, E:2 * E]
        v = qkv[:, 2 * E:3 * E]

        # Head-stacked queries: rows [h*R:(h+1)*R] hold q with non-head
        # columns zeroed -> scores for ALL heads in a single matmul.
        q_stack = jnp.concatenate([q * head_sel[h] for h in range(H)], axis=0)

        s = jax.lax.dot_general(q_stack, k, (((1,), (1,)), ((), ())),
                                preferred_element_type=jnp.float32)    # (H*R, R)
        s = s + attn_mask
        m = jnp.max(s, axis=-1, keepdims=True)
        e = jnp.exp(s - m)
        denom = jnp.sum(e, axis=-1, keepdims=True)
        # 1/sqrt(E) folded into the normalization (post-softmax, as in ref);
        # reciprocal goes to the otherwise-idle EUP slot.
        att = e * (inv_scale * pl.reciprocal(denom, approx=True))

        # Context for all heads in one matmul, then head-select + fold.
        ctx = jnp.dot(att, v, preferred_element_type=jnp.float32)      # (H*R, E)
        attn_out = ctx[0:R] * head_sel[0]
        for h in range(1, H):
            attn_out = attn_out + ctx[h * R:(h + 1) * R] * head_sel[h]
        attn_out = attn_out + h1           # MHA-internal residual (LN1 output)

        mha = jnp.dot(attn_out, wo_ref[l],
                      preferred_element_type=jnp.float32) + bo_ref[l]

        # LayerNorm 2 + FFN (its own residual; NO outer block residual)
        h2 = _layernorm(mha, ln2w_ref[l], ln2b_ref[l])
        f = jnp.dot(h2, w1_ref[l], preferred_element_type=jnp.float32) + b1_ref[l]
        f = _gelu_exact(f)
        f = jnp.dot(f, w2_ref[l], preferred_element_type=jnp.float32) + b2_ref[l]
        x = f + h2

    # ---- Classification head: LayerNorm + Linear, lane-dense store --------
    hc = _layernorm(x, clnw_ref[...], clnb_ref[...])
    out_ref[...] = jnp.dot(hc, hw_ref[...],
                           preferred_element_type=jnp.float32) + hb_ref[...]


# ---------------------------------------------------------------------------
# JAX glue: patch extraction + host-side layout prep + the single pallas_call
# ---------------------------------------------------------------------------
def extract_patches(x):
    # x: (B, C, H, W) NCHW -> (B, (H//2)*(W//2), C*4), flattened in (c, ki, kj)
    B, C, Himg, Wimg = x.shape
    x = x.reshape(B, C, Himg // 2, 2, Wimg // 2, 2)
    x = jnp.transpose(x, (0, 2, 4, 1, 3, 5))       # (B, h, w, C, 2, 2)
    return x.reshape(B, (Himg // 2) * (Wimg // 2), C * 4)


@functools.partial(jax.jit, static_argnames=("num_heads",))
def vit_forward(x_nchw, params, num_heads):
    B, C, Himg, Wimg = x_nchw.shape
    Np = (Himg // 2) * (Wimg // 2)
    N = Np + 1
    E = params["patch_w"].shape[1]
    n_classes = params["head_w"].shape[1]
    blocks = params["blocks"]
    depth = len(blocks)

    BN = B * N
    R = ((BN + 7) // 8) * 8                  # pad rows to a sublane multiple
    NC = ((n_classes + 127) // 128) * 128    # pad classes to a lane multiple

    # Patch rows with a zero row per batch at the cls position -> (BN, C*4),
    # then zero-pad rows up to R.
    patches = extract_patches(x_nchw)
    P = patches.shape[-1]
    patches_ext = jnp.concatenate(
        [jnp.zeros((B, 1, P), patches.dtype), patches], axis=1).reshape(BN, P)
    patches_ext = jnp.pad(patches_ext, ((0, R - BN), (0, 0)))

    # Additive term: cls row gets (cls + pos[0]); patch rows (conv_bias + pos)
    add_term = jnp.concatenate(
        [params["cls"] + params["pos"][0:1, :],
         params["patch_b"] + params["pos"][1:, :]], axis=0)            # (N, E)
    add_term = jnp.tile(add_term, (B, 1))                              # (BN, E)
    add_term = jnp.pad(add_term, ((0, R - BN), (0, 0)))                # (R, E)

    # Lane-dense classifier weights (pad output columns to NC)
    head_w = jnp.pad(params["head_w"], ((0, 0), (0, NC - n_classes)))
    head_b = jnp.pad(params["head_b"], ((0, 0), (0, NC - n_classes)))

    # Stack per-layer weights along a leading depth axis (VMEM-resident)
    stack = lambda key: jnp.stack([blk[key] for blk in blocks], axis=0)
    wqkv = jnp.stack([jnp.concatenate([blk["wq"], blk["wk"], blk["wv"]], axis=1)
                      for blk in blocks], axis=0)                      # (D, E, 3E)
    bqkv = jnp.stack([jnp.concatenate([blk["bq"], blk["bk"], blk["bv"]], axis=1)
                      for blk in blocks], axis=0)                      # (D, 1, 3E)

    operands = (patches_ext, params["patch_w"], add_term,
                wqkv, bqkv, stack("wo"), stack("bo"),
                stack("ln1_w"), stack("ln1_b"), stack("ln2_w"), stack("ln2_b"),
                stack("w1"), stack("b1"), stack("w2"), stack("b2"),
                params["cls_ln_w"], params["cls_ln_b"], head_w, head_b)

    kernel = functools.partial(_vit_kernel, num_heads=num_heads,
                               depth=depth, emb_size=E, tokens_per_batch=N)
    vmem_spec = pl.BlockSpec(memory_space=pltpu.MemorySpace.VMEM)
    out = pl.pallas_call(
        kernel,
        out_shape=jax.ShapeDtypeStruct((R, NC), jnp.float32),
        in_specs=[vmem_spec] * len(operands),
        out_specs=vmem_spec,
        # no grid: single launch, everything full-block resident in VMEM
    )(*operands)

    return out[:BN, :n_classes].reshape(B, N, n_classes)


# ---------------------------------------------------------------------------
# Deterministic parameter init (shapes follow the module __init__)
# ---------------------------------------------------------------------------
def init_params(key, C, Himg, Wimg, E, depth, n_classes, expansion=4):
    n_patches = (Himg // 2) * (Wimg // 2)
    keys = jax.random.split(key, 4 + depth)

    def dense(k, fan_in, fan_out):
        kw, kb = jax.random.split(k)
        w = jax.random.normal(kw, (fan_in, fan_out), jnp.float32) * 0.02
        b = jax.random.normal(kb, (1, fan_out), jnp.float32) * 0.02
        return w, b

    p = {}
    # Embedding: Conv2d(C, E, k=2, s=2) weight (E, C, 2, 2) flattened -> (C*4, E)
    p["patch_w"], p["patch_b"] = dense(keys[0], C * 4, E)
    p["cls"] = jax.random.normal(keys[1], (1, E), jnp.float32)
    p["pos"] = jax.random.normal(keys[2], (n_patches + 1, E), jnp.float32)

    blocks = []
    for i in range(depth):
        sub = jax.random.split(keys[3 + i], 6)
        blk = {"ln1_w": jnp.ones((1, E), jnp.float32),
               "ln1_b": jnp.zeros((1, E), jnp.float32),
               "ln2_w": jnp.ones((1, E), jnp.float32),
               "ln2_b": jnp.zeros((1, E), jnp.float32)}
        blk["wq"], blk["bq"] = dense(sub[0], E, E)
        blk["wk"], blk["bk"] = dense(sub[1], E, E)
        blk["wv"], blk["bv"] = dense(sub[2], E, E)
        blk["wo"], blk["bo"] = dense(sub[3], E, E)
        blk["w1"], blk["b1"] = dense(sub[4], E, expansion * E)
        blk["w2"], blk["b2"] = dense(sub[5], expansion * E, E)
        blocks.append(blk)
    p["blocks"] = blocks

    p["cls_ln_w"] = jnp.ones((1, E), jnp.float32)
    p["cls_ln_b"] = jnp.zeros((1, E), jnp.float32)
    p["head_w"], p["head_b"] = dense(keys[3 + depth], E, n_classes)
    return p


# ---------------------------------------------------------------------------
if __name__ == "__main__":
    # Small shapes consistent with the module: img 8x8 -> 16 patches + cls = 17
    B, C, Himg, Wimg = 2, 3, 8, 8
    EMB, HEADS, DEPTH, NCLS = 32, 8, 2, 16

    x = jax.random.normal(jax.random.PRNGKey(0), (B, C, Himg, Wimg), jnp.float32)
    params = init_params(jax.random.PRNGKey(1), C, Himg, Wimg, EMB, DEPTH, NCLS)

    out = vit_forward(x, params, num_heads=HEADS)
    out = jax.block_until_ready(out)

    n_tokens = (Himg // 2) * (Wimg // 2) + 1
    assert out.shape == (B, n_tokens, NCLS), out.shape
    assert out.dtype == jnp.float32
    assert bool(jnp.all(jnp.isfinite(out)))
    print("KERNEL_OK")
</pallas_src>

<mosaic_0001>
module attributes {stable_mosaic.version = 11 : i64} {
  func.func @_vit_kernel(%arg0: memref<40x12xf32, #tpu.memory_space<vmem>>, %arg1: memref<12x32xf32, #tpu.memory_space<vmem>>, %arg2: memref<40x32xf32, #tpu.memory_space<vmem>>, %arg3: memref<2x32x96xf32, #tpu.memory_space<vmem>>, %arg4: memref<2x1x96xf32, #tpu.memory_space<vmem>>, %arg5: memref<2x32x32xf32, #tpu.memory_space<vmem>>, %arg6: memref<2x1x32xf32, #tpu.memory_space<vmem>>, %arg7: memref<2x1x32xf32, #tpu.memory_space<vmem>>, %arg8: memref<2x1x32xf32, #tpu.memory_space<vmem>>, %arg9: memref<2x1x32xf32, #tpu.memory_space<vmem>>, %arg10: memref<2x1x32xf32, #tpu.memory_space<vmem>>, %arg11: memref<2x32x128xf32, #tpu.memory_space<vmem>>, %arg12: memref<2x1x128xf32, #tpu.memory_space<vmem>>, %arg13: memref<2x128x32xf32, #tpu.memory_space<vmem>>, %arg14: memref<2x1x32xf32, #tpu.memory_space<vmem>>, %arg15: memref<1x32xf32, #tpu.memory_space<vmem>>, %arg16: memref<1x32xf32, #tpu.memory_space<vmem>>, %arg17: memref<32x128xf32, #tpu.memory_space<vmem>>, %arg18: memref<1x128xf32, #tpu.memory_space<vmem>>, %arg19: memref<40x128xf32, #tpu.memory_space<vmem>>) attributes {dimension_semantics = [], scalar_prefetch = 0 : i64, scratch_operands = 0 : i64, tpu.core_type = #tpu.core_type<tc>} {
    %c0 = arith.constant 0 : index
    %c0_0 = arith.constant 0 : index
    %0 = vector.load %arg0[%c0, %c0_0] : memref<40x12xf32, #tpu.memory_space<vmem>>, vector<40x12xf32>
    %c0_1 = arith.constant 0 : index
    %c0_2 = arith.constant 0 : index
    %1 = vector.load %arg1[%c0_1, %c0_2] : memref<12x32xf32, #tpu.memory_space<vmem>>, vector<12x32xf32>
    %cst = arith.constant dense<0.000000e+00> : vector<40x32xf32>
    %2 = tpu.matmul %0, %1, %cst {dimension_numbers = #tpu.dot_dimension_numbers<[1], [0], [0], [1], [0, 0, 1, 1], [], []>} : vector<40x12xf32>, vector<12x32xf32>, vector<40x32xf32> -> vector<40x32xf32>
    %c0_3 = arith.constant 0 : index
    %c0_4 = arith.constant 0 : index
    %3 = vector.load %arg2[%c0_3, %c0_4] : memref<40x32xf32, #tpu.memory_space<vmem>>, vector<40x32xf32>
    %4 = arith.addf %2, %3 : vector<40x32xf32>
    %5 = tpu.iota {dimensions = array<i32: 1>} : vector<40x32xi32>
    %c0_i32 = arith.constant 0 : i32
    %6 = vector.broadcast %c0_i32 : i32 to vector<40x32xi32>
    %7 = arith.cmpi sge, %5, %6 : vector<40x32xi32>
    %c4_i32 = arith.constant 4 : i32
    %8 = vector.broadcast %c4_i32 : i32 to vector<40x32xi32>
    %9 = arith.cmpi slt, %5, %8 : vector<40x32xi32>
    %10 = arith.andi %7, %9 : vector<40x32xi1>
    %11 = arith.extui %10 : vector<40x32xi1> to vector<40x32xi32>
    %12 = arith.sitofp %11 : vector<40x32xi32> to vector<40x32xf32>
    %c4_i32_5 = arith.constant 4 : i32
    %13 = vector.broadcast %c4_i32_5 : i32 to vector<40x32xi32>
    %14 = arith.cmpi sge, %5, %13 : vector<40x32xi32>
    %c8_i32 = arith.constant 8 : i32
    %15 = vector.broadcast %c8_i32 : i32 to vector<40x32xi32>
    %16 = arith.cmpi slt, %5, %15 : vector<40x32xi32>
    %17 = arith.andi %14, %16 : vector<40x32xi1>
    %18 = arith.extui %17 : vector<40x32xi1> to vector<40x32xi32>
    %19 = arith.sitofp %18 : vector<40x32xi32> to vector<40x32xf32>
    %c8_i32_6 = arith.constant 8 : i32
    %20 = vector.broadcast %c8_i32_6 : i32 to vector<40x32xi32>
    %21 = arith.cmpi sge, %5, %20 : vector<40x32xi32>
    %c12_i32 = arith.constant 12 : i32
    %22 = vector.broadcast %c12_i32 : i32 to vector<40x32xi32>
    %23 = arith.cmpi slt, %5, %22 : vector<40x32xi32>
    %24 = arith.andi %21, %23 : vector<40x32xi1>
    %25 = arith.extui %24 : vector<40x32xi1> to vector<40x32xi32>
    %26 = arith.sitofp %25 : vector<40x32xi32> to vector<40x32xf32>
    %c12_i32_7 = arith.constant 12 : i32
    %27 = vector.broadcast %c12_i32_7 : i32 to vector<40x32xi32>
    %28 = arith.cmpi sge, %5, %27 : vector<40x32xi32>
    %c16_i32 = arith.constant 16 : i32
    %29 = vector.broadcast %c16_i32 : i32 to vector<40x32xi32>
    %30 = arith.cmpi slt, %5, %29 : vector<40x32xi32>
    %31 = arith.andi %28, %30 : vector<40x32xi1>
    %32 = arith.extui %31 : vector<40x32xi1> to vector<40x32xi32>
    %33 = arith.sitofp %32 : vector<40x32xi32> to vector<40x32xf32>
    %c16_i32_8 = arith.constant 16 : i32
    %34 = vector.broadcast %c16_i32_8 : i32 to vector<40x32xi32>
    %35 = arith.cmpi sge, %5, %34 : vector<40x32xi32>
    %c20_i32 = arith.constant 20 : i32
    %36 = vector.broadcast %c20_i32 : i32 to vector<40x32xi32>
    %37 = arith.cmpi slt, %5, %36 : vector<40x32xi32>
    %38 = arith.andi %35, %37 : vector<40x32xi1>
    %39 = arith.extui %38 : vector<40x32xi1> to vector<40x32xi32>
    %40 = arith.sitofp %39 : vector<40x32xi32> to vector<40x32xf32>
    %c20_i32_9 = arith.constant 20 : i32
    %41 = vector.broadcast %c20_i32_9 : i32 to vector<40x32xi32>
    %42 = arith.cmpi sge, %5, %41 : vector<40x32xi32>
    %c24_i32 = arith.constant 24 : i32
    %43 = vector.broadcast %c24_i32 : i32 to vector<40x32xi32>
    %44 = arith.cmpi slt, %5, %43 : vector<40x32xi32>
    %45 = arith.andi %42, %44 : vector<40x32xi1>
    %46 = arith.extui %45 : vector<40x32xi1> to vector<40x32xi32>
    %47 = arith.sitofp %46 : vector<40x32xi32> to vector<40x32xf32>
    %c24_i32_10 = arith.constant 24 : i32
    %48 = vector.broadcast %c24_i32_10 : i32 to vector<40x32xi32>
    %49 = arith.cmpi sge, %5, %48 : vector<40x32xi32>
    %c28_i32 = arith.constant 28 : i32
    %50 = vector.broadcast %c28_i32 : i32 to vector<40x32xi32>
    %51 = arith.cmpi slt, %5, %50 : vector<40x32xi32>
    %52 = arith.andi %49, %51 : vector<40x32xi1>
    %53 = arith.extui %52 : vector<40x32xi1> to vector<40x32xi32>
    %54 = arith.sitofp %53 : vector<40x32xi32> to vector<40x32xf32>
    %c28_i32_11 = arith.constant 28 : i32
    %55 = vector.broadcast %c28_i32_11 : i32 to vector<40x32xi32>
    %56 = arith.cmpi sge, %5, %55 : vector<40x32xi32>
    %c32_i32 = arith.constant 32 : i32
    %57 = vector.broadcast %c32_i32 : i32 to vector<40x32xi32>
    %58 = arith.cmpi slt, %5, %57 : vector<40x32xi32>
    %59 = arith.andi %56, %58 : vector<40x32xi1>
    %60 = arith.extui %59 : vector<40x32xi1> to vector<40x32xi32>
    %61 = arith.sitofp %60 : vector<40x32xi32> to vector<40x32xf32>
    %62 = tpu.iota {dimensions = array<i32: 0>} : vector<40x40xi32>
    %63 = tpu.iota {dimensions = array<i32: 1>} : vector<40x40xi32>
    %c0_i32_12 = arith.constant 0 : i32
    %64 = vector.broadcast %c0_i32_12 : i32 to vector<40x40xi32>
    %65 = arith.cmpi sge, %62, %64 : vector<40x40xi32>
    %c17_i32 = arith.constant 17 : i32
    %66 = vector.broadcast %c17_i32 : i32 to vector<40x40xi32>
    %67 = arith.cmpi slt, %62, %66 : vector<40x40xi32>
    %68 = arith.andi %65, %67 : vector<40x40xi1>
    %c0_i32_13 = arith.constant 0 : i32
    %69 = vector.broadcast %c0_i32_13 : i32 to vector<40x40xi32>
    %70 = arith.cmpi sge, %63, %69 : vector<40x40xi32>
    %c17_i32_14 = arith.constant 17 : i32
    %71 = vector.broadcast %c17_i32_14 : i32 to vector<40x40xi32>
    %72 = arith.cmpi slt, %63, %71 : vector<40x40xi32>
    %73 = arith.andi %70, %72 : vector<40x40xi1>
    %74 = arith.andi %68, %73 : vector<40x40xi1>
    %c17_i32_15 = arith.constant 17 : i32
    %75 = vector.broadcast %c17_i32_15 : i32 to vector<40x40xi32>
    %76 = arith.cmpi sge, %62, %75 : vector<40x40xi32>
    %c34_i32 = arith.constant 34 : i32
    %77 = vector.broadcast %c34_i32 : i32 to vector<40x40xi32>
    %78 = arith.cmpi slt, %62, %77 : vector<40x40xi32>
    %79 = arith.andi %76, %78 : vector<40x40xi1>
    %c17_i32_16 = arith.constant 17 : i32
    %80 = vector.broadcast %c17_i32_16 : i32 to vector<40x40xi32>
    %81 = arith.cmpi sge, %63, %80 : vector<40x40xi32>
    %c34_i32_17 = arith.constant 34 : i32
    %82 = vector.broadcast %c34_i32_17 : i32 to vector<40x40xi32>
    %83 = arith.cmpi slt, %63, %82 : vector<40x40xi32>
    %84 = arith.andi %81, %83 : vector<40x40xi1>
    %85 = arith.andi %79, %84 : vector<40x40xi1>
    %86 = arith.ori %74, %85 : vector<40x40xi1>
    %c34_i32_18 = arith.constant 34 : i32
    %87 = vector.broadcast %c34_i32_18 : i32 to vector<40x40xi32>
    %88 = arith.cmpi sge, %62, %87 : vector<40x40xi32>
    %c51_i32 = arith.constant 51 : i32
    %89 = vector.broadcast %c51_i32 : i32 to vector<40x40xi32>
    %90 = arith.cmpi slt, %62, %89 : vector<40x40xi32>
    %91 = arith.andi %88, %90 : vector<40x40xi1>
    %c34_i32_19 = arith.constant 34 : i32
    %92 = vector.broadcast %c34_i32_19 : i32 to vector<40x40xi32>
    %93 = arith.cmpi sge, %63, %92 : vector<40x40xi32>
    %c51_i32_20 = arith.constant 51 : i32
    %94 = vector.broadcast %c51_i32_20 : i32 to vector<40x40xi32>
    %95 = arith.cmpi slt, %63, %94 : vector<40x40xi32>
    %96 = arith.andi %93, %95 : vector<40x40xi1>
    %97 = arith.andi %91, %96 : vector<40x40xi1>
    %98 = arith.ori %86, %97 : vector<40x40xi1>
    %cst_21 = arith.constant 0.000000e+00 : f32
    %cst_22 = arith.constant -1.000000e+30 : f32
    %99 = vector.broadcast %cst_21 : f32 to vector<40x40xf32>
    %100 = vector.broadcast %cst_22 : f32 to vector<40x40xf32>
    %101 = arith.select %98, %99, %100 : vector<40x40xi1>, vector<40x40xf32>
    %102 = tpu.concatenate %101, %101, %101, %101, %101, %101, %101, %101 in 0 : vector<40x40xf32>, vector<40x40xf32>, vector<40x40xf32>, vector<40x40xf32>, vector<40x40xf32>, vector<40x40xf32>, vector<40x40xf32>, vector<40x40xf32> -> vector<320x40xf32>
    %c0_23 = arith.constant 0 : index
    %c0_24 = arith.constant 0 : index
    %c0_25 = arith.constant 0 : index
    %103 = vector.load %arg7[%c0_23, %c0_24, %c0_25] : memref<2x1x32xf32, #tpu.memory_space<vmem>>, vector<1x1x32xf32>
    %104 = vector.shape_cast %103 : vector<1x1x32xf32> to vector<1x32xf32>
    %c0_26 = arith.constant 0 : index
    %c0_27 = arith.constant 0 : index
    %c0_28 = arith.constant 0 : index
    %105 = vector.load %arg8[%c0_26, %c0_27, %c0_28] : memref<2x1x32xf32, #tpu.memory_space<vmem>>, vector<1x1x32xf32>
    %106 = vector.shape_cast %105 : vector<1x1x32xf32> to vector<1x32xf32>
    %cst_29 = arith.constant dense<0.000000e+00> : vector<40xf32>
    %107 = vector.multi_reduction <add>, %4, %cst_29 [1] : vector<40x32xf32> to vector<40xf32>
    %108 = vector.shape_cast %107 : vector<40xf32> to vector<40x1xf32>
    %cst_30 = arith.constant 3.200000e+01 : f32
    %109 = vector.broadcast %cst_30 : f32 to vector<40x1xf32>
    %110 = arith.divf %108, %109 : vector<40x1xf32>
    %111 = vector.broadcast %110 : vector<40x1xf32> to vector<40x32xf32>
    %112 = arith.subf %4, %111 : vector<40x32xf32>
    %113 = arith.mulf %112, %112 : vector<40x32xf32>
    %cst_31 = arith.constant dense<0.000000e+00> : vector<40xf32>
    %114 = vector.multi_reduction <add>, %113, %cst_31 [1] : vector<40x32xf32> to vector<40xf32>
    %115 = vector.shape_cast %114 : vector<40xf32> to vector<40x1xf32>
    %cst_32 = arith.constant 3.200000e+01 : f32
    %116 = vector.broadcast %cst_32 : f32 to vector<40x1xf32>
    %117 = arith.divf %115, %116 : vector<40x1xf32>
    %118 = vector.broadcast %110 : vector<40x1xf32> to vector<40x32xf32>
    %119 = arith.subf %4, %118 : vector<40x32xf32>
    %cst_33 = arith.constant 9.99999974E-6 : f32
    %120 = vector.broadcast %cst_33 : f32 to vector<40x1xf32>
    %121 = arith.addf %117, %120 : vector<40x1xf32>
    %122 = math.rsqrt %121 : vector<40x1xf32>
    %123 = vector.broadcast %122 : vector<40x1xf32> to vector<40x32xf32>
    %124 = arith.mulf %119, %123 : vector<40x32xf32>
    %125 = vector.broadcast %104 : vector<1x32xf32> to vector<40x32xf32>
    %126 = arith.mulf %124, %125 : vector<40x32xf32>
    %127 = vector.broadcast %106 : vector<1x32xf32> to vector<40x32xf32>
    %128 = arith.addf %126, %127 : vector<40x32xf32>
    %c0_34 = arith.constant 0 : index
    %c0_35 = arith.constant 0 : index
    %c0_36 = arith.constant 0 : index
    %129 = vector.load %arg3[%c0_34, %c0_35, %c0_36] : memref<2x32x96xf32, #tpu.memory_space<vmem>>, vector<1x32x96xf32>
    %130 = vector.shape_cast %129 : vector<1x32x96xf32> to vector<32x96xf32>
    %cst_37 = arith.constant dense<0.000000e+00> : vector<40x96xf32>
    %131 = tpu.matmul %128, %130, %cst_37 {dimension_numbers = #tpu.dot_dimension_numbers<[1], [0], [0], [1], [0, 0, 1, 1], [], []>} : vector<40x32xf32>, vector<32x96xf32>, vector<40x96xf32> -> vector<40x96xf32>
    %c0_38 = arith.constant 0 : index
    %c0_39 = arith.constant 0 : index
    %c0_40 = arith.constant 0 : index
    %132 = vector.load %arg4[%c0_38, %c0_39, %c0_40] : memref<2x1x96xf32, #tpu.memory_space<vmem>>, vector<1x1x96xf32>
    %133 = vector.shape_cast %132 : vector<1x1x96xf32> to vector<1x96xf32>
    %134 = vector.broadcast %133 : vector<1x96xf32> to vector<40x96xf32>
    %135 = arith.addf %131, %134 : vector<40x96xf32>
    %136 = vector.extract_strided_slice %135 {offsets = [0, 0], sizes = [40, 32], strides = [1, 1]} : vector<40x96xf32> to vector<40x32xf32>
    %137 = vector.extract_strided_slice %135 {offsets = [0, 32], sizes = [40, 32], strides = [1, 1]} : vector<40x96xf32> to vector<40x32xf32>
    %138 = vector.extract_strided_slice %135 {offsets = [0, 64], sizes = [40, 32], strides = [1, 1]} : vector<40x96xf32> to vector<40x32xf32>
    %139 = arith.mulf %136, %12 : vector<40x32xf32>
    %140 = arith.mulf %136, %19 : vector<40x32xf32>
    %141 = arith.mulf %136, %26 : vector<40x32xf32>
    %142 = arith.mulf %136, %33 : vector<40x32xf32>
    %143 = arith.mulf %136, %40 : vector<40x32xf32>
    %144 = arith.mulf %136, %47 : vector<40x32xf32>
    %145 = arith.mulf %136, %54 : vector<40x32xf32>
    %146 = arith.mulf %136, %61 : vector<40x32xf32>
    %147 = tpu.concatenate %139, %140, %141, %142, %143, %144, %145, %146 in 0 : vector<40x32xf32>, vector<40x32xf32>, vector<40x32xf32>, vector<40x32xf32>, vector<40x32xf32>, vector<40x32xf32>, vector<40x32xf32>, vector<40x32xf32> -> vector<320x32xf32>
    %cst_41 = arith.constant dense<0.000000e+00> : vector<320x40xf32>
    %148 = tpu.matmul %147, %137, %cst_41 {dimension_numbers = #tpu.dot_dimension_numbers<[1], [1], [0], [0], [0, 0, 1, 0], [], []>} : vector<320x32xf32>, vector<40x32xf32>, vector<320x40xf32> -> vector<320x40xf32>
    %149 = arith.addf %148, %102 : vector<320x40xf32>
    %cst_42 = arith.constant dense<0xFF800000> : vector<320xf32>
    %150 = vector.multi_reduction <maximumf>, %149, %cst_42 [1] : vector<320x40xf32> to vector<320xf32>
    %151 = vector.shape_cast %150 : vector<320xf32> to vector<320x1xf32>
    %152 = vector.broadcast %151 : vector<320x1xf32> to vector<320x40xf32>
    %153 = arith.subf %149, %152 : vector<320x40xf32>
    %154 = math.exp %153 : vector<320x40xf32>
    %cst_43 = arith.constant dense<0.000000e+00> : vector<320xf32>
    %155 = vector.multi_reduction <add>, %154, %cst_43 [1] : vector<320x40xf32> to vector<320xf32>
    %156 = vector.shape_cast %155 : vector<320xf32> to vector<320x1xf32>
    %157 = tpu.reciprocal %156 {approx = true} : vector<320x1xf32> -> vector<320x1xf32>
    %cst_44 = arith.constant 0.176776692 : f32
    %158 = vector.broadcast %cst_44 : f32 to vector<320x1xf32>
    %159 = arith.mulf %158, %157 : vector<320x1xf32>
    %160 = vector.broadcast %159 : vector<320x1xf32> to vector<320x40xf32>
    %161 = arith.mulf %154, %160 : vector<320x40xf32>
    %cst_45 = arith.constant dense<0.000000e+00> : vector<320x32xf32>
    %162 = tpu.matmul %161, %138, %cst_45 {dimension_numbers = #tpu.dot_dimension_numbers<[1], [0], [0], [1], [0, 0, 1, 1], [], []>} : vector<320x40xf32>, vector<40x32xf32>, vector<320x32xf32> -> vector<320x32xf32>
    %163 = vector.extract_strided_slice %162 {offsets = [0, 0], sizes = [40, 32], strides = [1, 1]} : vector<320x32xf32> to vector<40x32xf32>
    %164 = arith.mulf %163, %12 : vector<40x32xf32>
    %165 = vector.extract_strided_slice %162 {offsets = [40, 0], sizes = [40, 32], strides = [1, 1]} : vector<320x32xf32> to vector<40x32xf32>
    %166 = arith.mulf %165, %19 : vector<40x32xf32>
    %167 = arith.addf %164, %166 : vector<40x32xf32>
    %168 = vector.extract_strided_slice %162 {offsets = [80, 0], sizes = [40, 32], strides = [1, 1]} : vector<320x32xf32> to vector<40x32xf32>
    %169 = arith.mulf %168, %26 : vector<40x32xf32>
    %170 = arith.addf %167, %169 : vector<40x32xf32>
    %171 = vector.extract_strided_slice %162 {offsets = [120, 0], sizes = [40, 32], strides = [1, 1]} : vector<320x32xf32> to vector<40x32xf32>
    %172 = arith.mulf %171, %33 : vector<40x32xf32>
    %173 = arith.addf %170, %172 : vector<40x32xf32>
    %174 = vector.extract_strided_slice %162 {offsets = [160, 0], sizes = [40, 32], strides = [1, 1]} : vector<320x32xf32> to vector<40x32xf32>
    %175 = arith.mulf %174, %40 : vector<40x32xf32>
    %176 = arith.addf %173, %175 : vector<40x32xf32>
    %177 = vector.extract_strided_slice %162 {offsets = [200, 0], sizes = [40, 32], strides = [1, 1]} : vector<320x32xf32> to vector<40x32xf32>
    %178 = arith.mulf %177, %47 : vector<40x32xf32>
    %179 = arith.addf %176, %178 : vector<40x32xf32>
    %180 = vector.extract_strided_slice %162 {offsets = [240, 0], sizes = [40, 32], strides = [1, 1]} : vector<320x32xf32> to vector<40x32xf32>
    %181 = arith.mulf %180, %54 : vector<40x32xf32>
    %182 = arith.addf %179, %181 : vector<40x32xf32>
    %183 = vector.extract_strided_slice %162 {offsets = [280, 0], sizes = [40, 32], strides = [1, 1]} : vector<320x32xf32> to vector<40x32xf32>
    %184 = arith.mulf %183, %61 : vector<40x32xf32>
    %185 = arith.addf %182, %184 : vector<40x32xf32>
    %186 = arith.addf %185, %128 : vector<40x32xf32>
    %c0_46 = arith.constant 0 : index
    %c0_47 = arith.constant 0 : index
    %c0_48 = arith.constant 0 : index
    %187 = vector.load %arg5[%c0_46, %c0_47, %c0_48] : memref<2x32x32xf32, #tpu.memory_space<vmem>>, vector<1x32x32xf32>
    %188 = vector.shape_cast %187 : vector<1x32x32xf32> to vector<32x32xf32>
    %cst_49 = arith.constant dense<0.000000e+00> : vector<40x32xf32>
    %189 = tpu.matmul %186, %188, %cst_49 {dimension_numbers = #tpu.dot_dimension_numbers<[1], [0], [0], [1], [0, 0, 1, 1], [], []>} : vector<40x32xf32>, vector<32x32xf32>, vector<40x32xf32> -> vector<40x32xf32>
    %c0_50 = arith.constant 0 : index
    %c0_51 = arith.constant 0 : index
    %c0_52 = arith.constant 0 : index
    %190 = vector.load %arg6[%c0_50, %c0_51, %c0_52] : memref<2x1x32xf32, #tpu.memory_space<vmem>>, vector<1x1x32xf32>
    %191 = vector.shape_cast %190 : vector<1x1x32xf32> to vector<1x32xf32>
    %192 = vector.broadcast %191 : vector<1x32xf32> to vector<40x32xf32>
    %193 = arith.addf %189, %192 : vector<40x32xf32>
    %c0_53 = arith.constant 0 : index
    %c0_54 = arith.constant 0 : index
    %c0_55 = arith.constant 0 : index
    %194 = vector.load %arg9[%c0_53, %c0_54, %c0_55] : memref<2x1x32xf32, #tpu.memory_space<vmem>>, vector<1x1x32xf32>
    %195 = vector.shape_cast %194 : vector<1x1x32xf32> to vector<1x32xf32>
    %c0_56 = arith.constant 0 : index
    %c0_57 = arith.constant 0 : index
    %c0_58 = arith.constant 0 : index
    %196 = vector.load %arg10[%c0_56, %c0_57, %c0_58] : memref<2x1x32xf32, #tpu.memory_space<vmem>>, vector<1x1x32xf32>
    %197 = vector.shape_cast %196 : vector<1x1x32xf32> to vector<1x32xf32>
    %cst_59 = arith.constant dense<0.000000e+00> : vector<40xf32>
    %198 = vector.multi_reduction <add>, %193, %cst_59 [1] : vector<40x32xf32> to vector<40xf32>
    %199 = vector.shape_cast %198 : vector<40xf32> to vector<40x1xf32>
    %cst_60 = arith.constant 3.200000e+01 : f32
    %200 = vector.broadcast %cst_60 : f32 to vector<40x1xf32>
    %201 = arith.divf %199, %200 : vector<40x1xf32>
    %202 = vector.broadcast %201 : vector<40x1xf32> to vector<40x32xf32>
    %203 = arith.subf %193, %202 : vector<40x32xf32>
    %204 = arith.mulf %203, %203 : vector<40x32xf32>
    %cst_61 = arith.constant dense<0.000000e+00> : vector<40xf32>
    %205 = vector.multi_reduction <add>, %204, %cst_61 [1] : vector<40x32xf32> to vector<40xf32>
    %206 = vector.shape_cast %205 : vector<40xf32> to vector<40x1xf32>
    %cst_62 = arith.constant 3.200000e+01 : f32
    %207 = vector.broadcast %cst_62 : f32 to vector<40x1xf32>
    %208 = arith.divf %206, %207 : vector<40x1xf32>
    %209 = vector.broadcast %201 : vector<40x1xf32> to vector<40x32xf32>
    %210 = arith.subf %193, %209 : vector<40x32xf32>
    %cst_63 = arith.constant 9.99999974E-6 : f32
    %211 = vector.broadcast %cst_63 : f32 to vector<40x1xf32>
    %212 = arith.addf %208, %211 : vector<40x1xf32>
    %213 = math.rsqrt %212 : vector<40x1xf32>
    %214 = vector.broadcast %213 : vector<40x1xf32> to vector<40x32xf32>
    %215 = arith.mulf %210, %214 : vector<40x32xf32>
    %216 = vector.broadcast %195 : vector<1x32xf32> to vector<40x32xf32>
    %217 = arith.mulf %215, %216 : vector<40x32xf32>
    %218 = vector.broadcast %197 : vector<1x32xf32> to vector<40x32xf32>
    %219 = arith.addf %217, %218 : vector<40x32xf32>
    %c0_64 = arith.constant 0 : index
    %c0_65 = arith.constant 0 : index
    %c0_66 = arith.constant 0 : index
    %220 = vector.load %arg11[%c0_64, %c0_65, %c0_66] : memref<2x32x128xf32, #tpu.memory_space<vmem>>, vector<1x32x128xf32>
    %221 = vector.shape_cast %220 : vector<1x32x128xf32> to vector<32x128xf32>
    %cst_67 = arith.constant dense<0.000000e+00> : vector<40x128xf32>
    %222 = tpu.matmul %219, %221, %cst_67 {dimension_numbers = #tpu.dot_dimension_numbers<[1], [0], [0], [1], [0, 0, 1, 1], [], []>} : vector<40x32xf32>, vector<32x128xf32>, vector<40x128xf32> -> vector<40x128xf32>
    %c0_68 = arith.constant 0 : index
    %c0_69 = arith.constant 0 : index
    %c0_70 = arith.constant 0 : index
    %223 = vector.load %arg12[%c0_68, %c0_69, %c0_70] : memref<2x1x128xf32, #tpu.memory_space<vmem>>, vector<1x1x128xf32>
    %224 = vector.shape_cast %223 : vector<1x1x128xf32> to vector<1x128xf32>
    %225 = vector.broadcast %224 : vector<1x128xf32> to vector<40x128xf32>
    %226 = arith.addf %222, %225 : vector<40x128xf32>
    %cst_71 = arith.constant 5.000000e-01 : f32
    %227 = vector.broadcast %cst_71 : f32 to vector<40x128xf32>
    %228 = arith.mulf %227, %226 : vector<40x128xf32>
    %cst_72 = arith.constant 0.707106769 : f32
    %229 = vector.broadcast %cst_72 : f32 to vector<40x128xf32>
    %230 = arith.mulf %226, %229 : vector<40x128xf32>
    %231 = math.erf %230 : vector<40x128xf32>
    %cst_73 = arith.constant 1.000000e+00 : f32
    %232 = vector.broadcast %cst_73 : f32 to vector<40x128xf32>
    %233 = arith.addf %232, %231 : vector<40x128xf32>
    %234 = arith.mulf %228, %233 : vector<40x128xf32>
    %c0_74 = arith.constant 0 : index
    %c0_75 = arith.constant 0 : index
    %c0_76 = arith.constant 0 : index
    %235 = vector.load %arg13[%c0_74, %c0_75, %c0_76] : memref<2x128x32xf32, #tpu.memory_space<vmem>>, vector<1x128x32xf32>
    %236 = vector.shape_cast %235 : vector<1x128x32xf32> to vector<128x32xf32>
    %cst_77 = arith.constant dense<0.000000e+00> : vector<40x32xf32>
    %237 = tpu.matmul %234, %236, %cst_77 {dimension_numbers = #tpu.dot_dimension_numbers<[1], [0], [0], [1], [0, 0, 1, 1], [], []>} : vector<40x128xf32>, vector<128x32xf32>, vector<40x32xf32> -> vector<40x32xf32>
    %c0_78 = arith.constant 0 : index
    %c0_79 = arith.constant 0 : index
    %c0_80 = arith.constant 0 : index
    %238 = vector.load %arg14[%c0_78, %c0_79, %c0_80] : memref<2x1x32xf32, #tpu.memory_space<vmem>>, vector<1x1x32xf32>
    %239 = vector.shape_cast %238 : vector<1x1x32xf32> to vector<1x32xf32>
    %240 = vector.broadcast %239 : vector<1x32xf32> to vector<40x32xf32>
    %241 = arith.addf %237, %240 : vector<40x32xf32>
    %242 = arith.addf %241, %219 : vector<40x32xf32>
    %c1 = arith.constant 1 : index
    %c0_81 = arith.constant 0 : index
    %c0_82 = arith.constant 0 : index
    %243 = vector.load %arg7[%c1, %c0_81, %c0_82] : memref<2x1x32xf32, #tpu.memory_space<vmem>>, vector<1x1x32xf32>
    %244 = vector.shape_cast %243 : vector<1x1x32xf32> to vector<1x32xf32>
    %c1_83 = arith.constant 1 : index
    %c0_84 = arith.constant 0 : index
    %c0_85 = arith.constant 0 : index
    %245 = vector.load %arg8[%c1_83, %c0_84, %c0_85] : memref<2x1x32xf32, #tpu.memory_space<vmem>>, vector<1x1x32xf32>
    %246 = vector.shape_cast %245 : vector<1x1x32xf32> to vector<1x32xf32>
    %cst_86 = arith.constant dense<0.000000e+00> : vector<40xf32>
    %247 = vector.multi_reduction <add>, %242, %cst_86 [1] : vector<40x32xf32> to vector<40xf32>
    %248 = vector.shape_cast %247 : vector<40xf32> to vector<40x1xf32>
    %cst_87 = arith.constant 3.200000e+01 : f32
    %249 = vector.broadcast %cst_87 : f32 to vector<40x1xf32>
    %250 = arith.divf %248, %249 : vector<40x1xf32>
    %251 = vector.broadcast %250 : vector<40x1xf32> to vector<40x32xf32>
    %252 = arith.subf %242, %251 : vector<40x32xf32>
    %253 = arith.mulf %252, %252 : vector<40x32xf32>
    %cst_88 = arith.constant dense<0.000000e+00> : vector<40xf32>
    %254 = vector.multi_reduction <add>, %253, %cst_88 [1] : vector<40x32xf32> to vector<40xf32>
    %255 = vector.shape_cast %254 : vector<40xf32> to vector<40x1xf32>
    %cst_89 = arith.constant 3.200000e+01 : f32
    %256 = vector.broadcast %cst_89 : f32 to vector<40x1xf32>
    %257 = arith.divf %255, %256 : vector<40x1xf32>
    %258 = vector.broadcast %250 : vector<40x1xf32> to vector<40x32xf32>
    %259 = arith.subf %242, %258 : vector<40x32xf32>
    %cst_90 = arith.constant 9.99999974E-6 : f32
    %260 = vector.broadcast %cst_90 : f32 to vector<40x1xf32>
    %261 = arith.addf %257, %260 : vector<40x1xf32>
    %262 = math.rsqrt %261 : vector<40x1xf32>
    %263 = vector.broadcast %262 : vector<40x1xf32> to vector<40x32xf32>
    %264 = arith.mulf %259, %263 : vector<40x32xf32>
    %265 = vector.broadcast %244 : vector<1x32xf32> to vector<40x32xf32>
    %266 = arith.mulf %264, %265 : vector<40x32xf32>
    %267 = vector.broadcast %246 : vector<1x32xf32> to vector<40x32xf32>
    %268 = arith.addf %266, %267 : vector<40x32xf32>
    %c1_91 = arith.constant 1 : index
    %c0_92 = arith.constant 0 : index
    %c0_93 = arith.constant 0 : index
    %269 = vector.load %arg3[%c1_91, %c0_92, %c0_93] : memref<2x32x96xf32, #tpu.memory_space<vmem>>, vector<1x32x96xf32>
    %270 = vector.shape_cast %269 : vector<1x32x96xf32> to vector<32x96xf32>
    %cst_94 = arith.constant dense<0.000000e+00> : vector<40x96xf32>
    %271 = tpu.matmul %268, %270, %cst_94 {dimension_numbers = #tpu.dot_dimension_numbers<[1], [0], [0], [1], [0, 0, 1, 1], [], []>} : vector<40x32xf32>, vector<32x96xf32>, vector<40x96xf32> -> vector<40x96xf32>
    %c1_95 = arith.constant 1 : index
    %c0_96 = arith.constant 0 : index
    %c0_97 = arith.constant 0 : index
    %272 = vector.load %arg4[%c1_95, %c0_96, %c0_97] : memref<2x1x96xf32, #tpu.memory_space<vmem>>, vector<1x1x96xf32>
    %273 = vector.shape_cast %272 : vector<1x1x96xf32> to vector<1x96xf32>
    %274 = vector.broadcast %273 : vector<1x96xf32> to vector<40x96xf32>
    %275 = arith.addf %271, %274 : vector<40x96xf32>
    %276 = vector.extract_strided_slice %275 {offsets = [0, 0], sizes = [40, 32], strides = [1, 1]} : vector<40x96xf32> to vector<40x32xf32>
    %277 = vector.extract_strided_slice %275 {offsets = [0, 32], sizes = [40, 32], strides = [1, 1]} : vector<40x96xf32> to vector<40x32xf32>
    %278 = vector.extract_strided_slice %275 {offsets = [0, 64], sizes = [40, 32], strides = [1, 1]} : vector<40x96xf32> to vector<40x32xf32>
    %279 = arith.mulf %276, %12 : vector<40x32xf32>
    %280 = arith.mulf %276, %19 : vector<40x32xf32>
    %281 = arith.mulf %276, %26 : vector<40x32xf32>
    %282 = arith.mulf %276, %33 : vector<40x32xf32>
    %283 = arith.mulf %276, %40 : vector<40x32xf32>
    %284 = arith.mulf %276, %47 : vector<40x32xf32>
    %285 = arith.mulf %276, %54 : vector<40x32xf32>
    %286 = arith.mulf %276, %61 : vector<40x32xf32>
    %287 = tpu.concatenate %279, %280, %281, %282, %283, %284, %285, %286 in 0 : vector<40x32xf32>, vector<40x32xf32>, vector<40x32xf32>, vector<40x32xf32>, vector<40x32xf32>, vector<40x32xf32>, vector<40x32xf32>, vector<40x32xf32> -> vector<320x32xf32>
    %cst_98 = arith.constant dense<0.000000e+00> : vector<320x40xf32>
    %288 = tpu.matmul %287, %277, %cst_98 {dimension_numbers = #tpu.dot_dimension_numbers<[1], [1], [0], [0], [0, 0, 1, 0], [], []>} : vector<320x32xf32>, vector<40x32xf32>, vector<320x40xf32> -> vector<320x40xf32>
    %289 = arith.addf %288, %102 : vector<320x40xf32>
    %cst_99 = arith.constant dense<0xFF800000> : vector<320xf32>
    %290 = vector.multi_reduction <maximumf>, %289, %cst_99 [1] : vector<320x40xf32> to vector<320xf32>
    %291 = vector.shape_cast %290 : vector<320xf32> to vector<320x1xf32>
    %292 = vector.broadcast %291 : vector<320x1xf32> to vector<320x40xf32>
    %293 = arith.subf %289, %292 : vector<320x40xf32>
    %294 = math.exp %293 : vector<320x40xf32>
    %cst_100 = arith.constant dense<0.000000e+00> : vector<320xf32>
    %295 = vector.multi_reduction <add>, %294, %cst_100 [1] : vector<320x40xf32> to vector<320xf32>
    %296 = vector.shape_cast %295 : vector<320xf32> to vector<320x1xf32>
    %297 = tpu.reciprocal %296 {approx = true} : vector<320x1xf32> -> vector<320x1xf32>
    %cst_101 = arith.constant 0.176776692 : f32
    %298 = vector.broadcast %cst_101 : f32 to vector<320x1xf32>
    %299 = arith.mulf %298, %297 : vector<320x1xf32>
    %300 = vector.broadcast %299 : vector<320x1xf32> to vector<320x40xf32>
    %301 = arith.mulf %294, %300 : vector<320x40xf32>
    %cst_102 = arith.constant dense<0.000000e+00> : vector<320x32xf32>
    %302 = tpu.matmul %301, %278, %cst_102 {dimension_numbers = #tpu.dot_dimension_numbers<[1], [0], [0], [1], [0, 0, 1, 1], [], []>} : vector<320x40xf32>, vector<40x32xf32>, vector<320x32xf32> -> vector<320x32xf32>
    %303 = vector.extract_strided_slice %302 {offsets = [0, 0], sizes = [40, 32], strides = [1, 1]} : vector<320x32xf32> to vector<40x32xf32>
    %304 = arith.mulf %303, %12 : vector<40x32xf32>
    %305 = vector.extract_strided_slice %302 {offsets = [40, 0], sizes = [40, 32], strides = [1, 1]} : vector<320x32xf32> to vector<40x32xf32>
    %306 = arith.mulf %305, %19 : vector<40x32xf32>
    %307 = arith.addf %304, %306 : vector<40x32xf32>
    %308 = vector.extract_strided_slice %302 {offsets = [80, 0], sizes = [40, 32], strides = [1, 1]} : vector<320x32xf32> to vector<40x32xf32>
    %309 = arith.mulf %308, %26 : vector<40x32xf32>
    %310 = arith.addf %307, %309 : vector<40x32xf32>
    %311 = vector.extract_strided_slice %302 {offsets = [120, 0], sizes = [40, 32], strides = [1, 1]} : vector<320x32xf32> to vector<40x32xf32>
    %312 = arith.mulf %311, %33 : vector<40x32xf32>
    %313 = arith.addf %310, %312 : vector<40x32xf32>
    %314 = vector.extract_strided_slice %302 {offsets = [160, 0], sizes = [40, 32], strides = [1, 1]} : vector<320x32xf32> to vector<40x32xf32>
    %315 = arith.mulf %314, %40 : vector<40x32xf32>
    %316 = arith.addf %313, %315 : vector<40x32xf32>
    %317 = vector.extract_strided_slice %302 {offsets = [200, 0], sizes = [40, 32], strides = [1, 1]} : vector<320x32xf32> to vector<40x32xf32>
    %318 = arith.mulf %317, %47 : vector<40x32xf32>
    %319 = arith.addf %316, %318 : vector<40x32xf32>
    %320 = vector.extract_strided_slice %302 {offsets = [240, 0], sizes = [40, 32], strides = [1, 1]} : vector<320x32xf32> to vector<40x32xf32>
    %321 = arith.mulf %320, %54 : vector<40x32xf32>
    %322 = arith.addf %319, %321 : vector<40x32xf32>
    %323 = vector.extract_strided_slice %302 {offsets = [280, 0], sizes = [40, 32], strides = [1, 1]} : vector<320x32xf32> to vector<40x32xf32>
    %324 = arith.mulf %323, %61 : vector<40x32xf32>
    %325 = arith.addf %322, %324 : vector<40x32xf32>
    %326 = arith.addf %325, %268 : vector<40x32xf32>
    %c1_103 = arith.constant 1 : index
    %c0_104 = arith.constant 0 : index
    %c0_105 = arith.constant 0 : index
    %327 = vector.load %arg5[%c1_103, %c0_104, %c0_105] : memref<2x32x32xf32, #tpu.memory_space<vmem>>, vector<1x32x32xf32>
    %328 = vector.shape_cast %327 : vector<1x32x32xf32> to vector<32x32xf32>
    %cst_106 = arith.constant dense<0.000000e+00> : vector<40x32xf32>
    %329 = tpu.matmul %326, %328, %cst_106 {dimension_numbers = #tpu.dot_dimension_numbers<[1], [0], [0], [1], [0, 0, 1, 1], [], []>} : vector<40x32xf32>, vector<32x32xf32>, vector<40x32xf32> -> vector<40x32xf32>
    %c1_107 = arith.constant 1 : index
    %c0_108 = arith.constant 0 : index
    %c0_109 = arith.constant 0 : index
    %330 = vector.load %arg6[%c1_107, %c0_108, %c0_109] : memref<2x1x32xf32, #tpu.memory_space<vmem>>, vector<1x1x32xf32>
    %331 = vector.shape_cast %330 : vector<1x1x32xf32> to vector<1x32xf32>
    %332 = vector.broadcast %331 : vector<1x32xf32> to vector<40x32xf32>
    %333 = arith.addf %329, %332 : vector<40x32xf32>
    %c1_110 = arith.constant 1 : index
    %c0_111 = arith.constant 0 : index
    %c0_112 = arith.constant 0 : index
    %334 = vector.load %arg9[%c1_110, %c0_111, %c0_112] : memref<2x1x32xf32, #tpu.memory_space<vmem>>, vector<1x1x32xf32>
    %335 = vector.shape_cast %334 : vector<1x1x32xf32> to vector<1x32xf32>
    %c1_113 = arith.constant 1 : index
    %c0_114 = arith.constant 0 : index
    %c0_115 = arith.constant 0 : index
    %336 = vector.load %arg10[%c1_113, %c0_114, %c0_115] : memref<2x1x32xf32, #tpu.memory_space<vmem>>, vector<1x1x32xf32>
    %337 = vector.shape_cast %336 : vector<1x1x32xf32> to vector<1x32xf32>
    %cst_116 = arith.constant dense<0.000000e+00> : vector<40xf32>
    %338 = vector.multi_reduction <add>, %333, %cst_116 [1] : vector<40x32xf32> to vector<40xf32>
    %339 = vector.shape_cast %338 : vector<40xf32> to vector<40x1xf32>
    %cst_117 = arith.constant 3.200000e+01 : f32
    %340 = vector.broadcast %cst_117 : f32 to vector<40x1xf32>
    %341 = arith.divf %339, %340 : vector<40x1xf32>
    %342 = vector.broadcast %341 : vector<40x1xf32> to vector<40x32xf32>
    %343 = arith.subf %333, %342 : vector<40x32xf32>
    %344 = arith.mulf %343, %343 : vector<40x32xf32>
    %cst_118 = arith.constant dense<0.000000e+00> : vector<40xf32>
    %345 = vector.multi_reduction <add>, %344, %cst_118 [1] : vector<40x32xf32> to vector<40xf32>
    %346 = vector.shape_cast %345 : vector<40xf32> to vector<40x1xf32>
    %cst_119 = arith.constant 3.200000e+01 : f32
    %347 = vector.broadcast %cst_119 : f32 to vector<40x1xf32>
    %348 = arith.divf %346, %347 : vector<40x1xf32>
    %349 = vector.broadcast %341 : vector<40x1xf32> to vector<40x32xf32>
    %350 = arith.subf %333, %349 : vector<40x32xf32>
    %cst_120 = arith.constant 9.99999974E-6 : f32
    %351 = vector.broadcast %cst_120 : f32 to vector<40x1xf32>
    %352 = arith.addf %348, %351 : vector<40x1xf32>
    %353 = math.rsqrt %352 : vector<40x1xf32>
    %354 = vector.broadcast %353 : vector<40x1xf32> to vector<40x32xf32>
    %355 = arith.mulf %350, %354 : vector<40x32xf32>
    %356 = vector.broadcast %335 : vector<1x32xf32> to vector<40x32xf32>
    %357 = arith.mulf %355, %356 : vector<40x32xf32>
    %358 = vector.broadcast %337 : vector<1x32xf32> to vector<40x32xf32>
    %359 = arith.addf %357, %358 : vector<40x32xf32>
    %c1_121 = arith.constant 1 : index
    %c0_122 = arith.constant 0 : index
    %c0_123 = arith.constant 0 : index
    %360 = vector.load %arg11[%c1_121, %c0_122, %c0_123] : memref<2x32x128xf32, #tpu.memory_space<vmem>>, vector<1x32x128xf32>
    %361 = vector.shape_cast %360 : vector<1x32x128xf32> to vector<32x128xf32>
    %cst_124 = arith.constant dense<0.000000e+00> : vector<40x128xf32>
    %362 = tpu.matmul %359, %361, %cst_124 {dimension_numbers = #tpu.dot_dimension_numbers<[1], [0], [0], [1], [0, 0, 1, 1], [], []>} : vector<40x32xf32>, vector<32x128xf32>, vector<40x128xf32> -> vector<40x128xf32>
    %c1_125 = arith.constant 1 : index
    %c0_126 = arith.constant 0 : index
    %c0_127 = arith.constant 0 : index
    %363 = vector.load %arg12[%c1_125, %c0_126, %c0_127] : memref<2x1x128xf32, #tpu.memory_space<vmem>>, vector<1x1x128xf32>
    %364 = vector.shape_cast %363 : vector<1x1x128xf32> to vector<1x128xf32>
    %365 = vector.broadcast %364 : vector<1x128xf32> to vector<40x128xf32>
    %366 = arith.addf %362, %365 : vector<40x128xf32>
    %cst_128 = arith.constant 5.000000e-01 : f32
    %367 = vector.broadcast %cst_128 : f32 to vector<40x128xf32>
    %368 = arith.mulf %367, %366 : vector<40x128xf32>
    %cst_129 = arith.constant 0.707106769 : f32
    %369 = vector.broadcast %cst_129 : f32 to vector<40x128xf32>
    %370 = arith.mulf %366, %369 : vector<40x128xf32>
    %371 = math.erf %370 : vector<40x128xf32>
    %cst_130 = arith.constant 1.000000e+00 : f32
    %372 = vector.broadcast %cst_130 : f32 to vector<40x128xf32>
    %373 = arith.addf %372, %371 : vector<40x128xf32>
    %374 = arith.mulf %368, %373 : vector<40x128xf32>
    %c1_131 = arith.constant 1 : index
    %c0_132 = arith.constant 0 : index
    %c0_133 = arith.constant 0 : index
    %375 = vector.load %arg13[%c1_131, %c0_132, %c0_133] : memref<2x128x32xf32, #tpu.memory_space<vmem>>, vector<1x128x32xf32>
    %376 = vector.shape_cast %375 : vector<1x128x32xf32> to vector<128x32xf32>
    %cst_134 = arith.constant dense<0.000000e+00> : vector<40x32xf32>
    %377 = tpu.matmul %374, %376, %cst_134 {dimension_numbers = #tpu.dot_dimension_numbers<[1], [0], [0], [1], [0, 0, 1, 1], [], []>} : vector<40x128xf32>, vector<128x32xf32>, vector<40x32xf32> -> vector<40x32xf32>
    %c1_135 = arith.constant 1 : index
    %c0_136 = arith.constant 0 : index
    %c0_137 = arith.constant 0 : index
    %378 = vector.load %arg14[%c1_135, %c0_136, %c0_137] : memref<2x1x32xf32, #tpu.memory_space<vmem>>, vector<1x1x32xf32>
    %379 = vector.shape_cast %378 : vector<1x1x32xf32> to vector<1x32xf32>
    %380 = vector.broadcast %379 : vector<1x32xf32> to vector<40x32xf32>
    %381 = arith.addf %377, %380 : vector<40x32xf32>
    %382 = arith.addf %381, %359 : vector<40x32xf32>
    %c0_138 = arith.constant 0 : index
    %c0_139 = arith.constant 0 : index
    %383 = vector.load %arg15[%c0_138, %c0_139] : memref<1x32xf32, #tpu.memory_space<vmem>>, vector<1x32xf32>
    %c0_140 = arith.constant 0 : index
    %c0_141 = arith.constant 0 : index
    %384 = vector.load %arg16[%c0_140, %c0_141] : memref<1x32xf32, #tpu.memory_space<vmem>>, vector<1x32xf32>
    %cst_142 = arith.constant dense<0.000000e+00> : vector<40xf32>
    %385 = vector.multi_reduction <add>, %382, %cst_142 [1] : vector<40x32xf32> to vector<40xf32>
    %386 = vector.shape_cast %385 : vector<40xf32> to vector<40x1xf32>
    %cst_143 = arith.constant 3.200000e+01 : f32
    %387 = vector.broadcast %cst_143 : f32 to vector<40x1xf32>
    %388 = arith.divf %386, %387 : vector<40x1xf32>
    %389 = vector.broadcast %388 : vector<40x1xf32> to vector<40x32xf32>
    %390 = arith.subf %382, %389 : vector<40x32xf32>
    %391 = arith.mulf %390, %390 : vector<40x32xf32>
    %cst_144 = arith.constant dense<0.000000e+00> : vector<40xf32>
    %392 = vector.multi_reduction <add>, %391, %cst_144 [1] : vector<40x32xf32> to vector<40xf32>
    %393 = vector.shape_cast %392 : vector<40xf32> to vector<40x1xf32>
    %cst_145 = arith.constant 3.200000e+01 : f32
    %394 = vector.broadcast %cst_145 : f32 to vector<40x1xf32>
    %395 = arith.divf %393, %394 : vector<40x1xf32>
    %396 = vector.broadcast %388 : vector<40x1xf32> to vector<40x32xf32>
    %397 = arith.subf %382, %396 : vector<40x32xf32>
    %cst_146 = arith.constant 9.99999974E-6 : f32
    %398 = vector.broadcast %cst_146 : f32 to vector<40x1xf32>
    %399 = arith.addf %395, %398 : vector<40x1xf32>
    %400 = math.rsqrt %399 : vector<40x1xf32>
    %401 = vector.broadcast %400 : vector<40x1xf32> to vector<40x32xf32>
    %402 = arith.mulf %397, %401 : vector<40x32xf32>
    %403 = vector.broadcast %383 : vector<1x32xf32> to vector<40x32xf32>
    %404 = arith.mulf %402, %403 : vector<40x32xf32>
    %405 = vector.broadcast %384 : vector<1x32xf32> to vector<40x32xf32>
    %406 = arith.addf %404, %405 : vector<40x32xf32>
    %c0_147 = arith.constant 0 : index
    %c0_148 = arith.constant 0 : index
    %407 = vector.load %arg17[%c0_147, %c0_148] : memref<32x128xf32, #tpu.memory_space<vmem>>, vector<32x128xf32>
    %cst_149 = arith.constant dense<0.000000e+00> : vector<40x128xf32>
    %408 = tpu.matmul %406, %407, %cst_149 {dimension_numbers = #tpu.dot_dimension_numbers<[1], [0], [0], [1], [0, 0, 1, 1], [], []>} : vector<40x32xf32>, vector<32x128xf32>, vector<40x128xf32> -> vector<40x128xf32>
    %c0_150 = arith.constant 0 : index
    %c0_151 = arith.constant 0 : index
    %409 = vector.load %arg18[%c0_150, %c0_151] : memref<1x128xf32, #tpu.memory_space<vmem>>, vector<1x128xf32>
    %410 = vector.broadcast %409 : vector<1x128xf32> to vector<40x128xf32>
    %411 = arith.addf %408, %410 : vector<40x128xf32>
    %c0_152 = arith.constant 0 : index
    %c0_153 = arith.constant 0 : index
    %412 = vector.load %arg19[%c0_152, %c0_153] : memref<40x128xf32, #tpu.memory_space<vmem>>, vector<40x128xf32>
    tpu.vector_store %arg19[%c0_152, %c0_153], %411 {strides = array<i32>} : memref<40x128xf32, #tpu.memory_space<vmem>>, vector<40x128xf32>,
    return
  }
}

</mosaic_0001>

<llo_original>
// kernel: tile.9
$region0: #{tile.9}
  %s0 = inlined_call_operand.vmem [shape: f32[2,17,32], index: 0, kind: input, shape index: {}]
  %s1 = inlined_call_operand.vmem [shape: f32[34,32], index: 1, kind: output, shape index: {}]
  %v2 = vld [vmem:[%s0] sm:$0xff]
  %vm3 = vcmask 261120
  %4 = vst.msk [vmem:[%s1] sm:$0xff] %vm3, %v2
  %s5 = scalar_lea.vmem %s0, 8
  %v6 = vld [vmem:[%s5] sm:$0xff]
  %vm7 = vcmask 261120
  %s8 = scalar_lea.vmem %s1, 8
  %9 = vst.msk [vmem:[%s8] sm:$0xff] %vm7, %v6
  %s10 = scalar_lea.vmem %s0, 16
  %s11 = smov 3
  %v12 = vld [vmem:[%s10] ss:$8 sm:%s11]
  %vm13 = vcmask 261120
  %s14 = scalar_lea.vmem %s1, 16
  %15 = vst.msk [vmem:[%s14] sm:$0x3] %vm13, %v12
  %s16 = scalar_lea.vmem %s0, 25
  %v17 = vld [vmem:[%s16] sm:$0xff]
  %vm18 = vcmask 261120
  %s19 = scalar_lea.vmem %s1, 18
  %20 = vst.msk [vmem:[%s19] sm:$0xff] %vm18, %v17
  %s21 = scalar_lea.vmem %s0, 33
  %v22 = vld [vmem:[%s21] sm:$0xff]
  %vm23 = vcmask 261120
  %s24 = scalar_lea.vmem %s1, 26
  %25 = vst.msk [vmem:[%s24] sm:$0xff] %vm23, %v22

// kernel: vit_forward.1
$region0: #{vit_forward.1}
  #allocation0 [shape = 'u32[]', space=smem, size = 0x4, offset = 0x4, fixed_abs, tag = 'smem constant byte address 0x4 - core index']
  #allocation1 [shape = 'u32[144,128]{1,0:T(1,128)}', space=vmem, size = 0x12000, scoped, tag = 'internal scratch']
  %s0 = inlined_call_operand.vmem [shape: f32[40,12], index: 0, kind: input, shape index: {}]
  %s1 = inlined_call_operand.vmem [shape: f32[12,32], index: 1, kind: input, shape index: {}]
  %s2 = inlined_call_operand.vmem [shape: f32[40,32], index: 2, kind: input, shape index: {}]
  %s3 = inlined_call_operand.vmem [shape: f32[2,32,96], index: 3, kind: input, shape index: {}]
  %s4 = inlined_call_operand.vmem [shape: f32[2,1,96], index: 4, kind: input, shape index: {}]
  %s5 = inlined_call_operand.vmem [shape: f32[2,32,32], index: 5, kind: input, shape index: {}]
  %s6 = inlined_call_operand.vmem [shape: f32[2,1,32], index: 6, kind: input, shape index: {}]
  %s7 = inlined_call_operand.vmem [shape: f32[2,1,32], index: 7, kind: input, shape index: {}]
  %s8 = inlined_call_operand.vmem [shape: f32[2,1,32], index: 8, kind: input, shape index: {}]
  %s9 = inlined_call_operand.vmem [shape: f32[2,1,32], index: 9, kind: input, shape index: {}]
  %s10 = inlined_call_operand.vmem [shape: f32[2,1,32], index: 10, kind: input, shape index: {}]
  %s11 = inlined_call_operand.vmem [shape: f32[2,32,128], index: 11, kind: input, shape index: {}]
  %s12 = inlined_call_operand.vmem [shape: f32[2,1,128], index: 12, kind: input, shape index: {}]
  %s13 = inlined_call_operand.vmem [shape: f32[2,128,32], index: 13, kind: input, shape index: {}]
  %s14 = inlined_call_operand.vmem [shape: f32[2,1,32], index: 14, kind: input, shape index: {}]
  %s15 = inlined_call_operand.vmem [shape: f32[1,32], index: 15, kind: input, shape index: {}]
  %s16 = inlined_call_operand.vmem [shape: f32[1,32], index: 16, kind: input, shape index: {}]
  %s17 = inlined_call_operand.vmem [shape: f32[32,128], index: 17, kind: input, shape index: {}]
  %s18 = inlined_call_operand.vmem [shape: f32[1,128], index: 18, kind: input, shape index: {}]
  %s19 = inlined_call_operand.vmem [shape: f32[40,128], index: 19, kind: output, shape index: {}]
  %s20 = sld [smem:[#allocation0]]
  $region86: #{vit_forward.1} parent=0
    _
  %s22 = ssub.s32 1, %s20
  %s23 = scalar_select 0, %s22, %s20
  // Predicated region
  $region2: #{vit_forward.1} parent=0 // pred_check
    _
  $region3: #{vit_forward.1} parent=0 // pred_check_branch
    %25 = sbr.rel (0) target = $region5
  $region4: #{vit_forward.1} parent=0 // pred_region
    _
  $region5: #{vit_forward.1} parent=0 // pred_fallthru
    _
  // Predicated region
  $region6: #{vit_forward.1} parent=0 // pred_check
    _
  $region7: #{vit_forward.1} parent=0 // pred_check_branch
    %27 = sbr.rel (0) target = $region9
  $region8: #{vit_forward.1} parent=0 // pred_region
    _
  $region9: #{vit_forward.1} parent=0 // pred_fallthru
    _
  // Predicated region
  $region10: #{vit_forward.1} parent=0 // pred_check
    _
  $region11: #{vit_forward.1} parent=0 // pred_check_branch
    %29 = sbr.rel (0) target = $region13
  $region12: #{vit_forward.1} parent=0 // pred_region
    _
  $region13: #{vit_forward.1} parent=0 // pred_fallthru
    _
  // Predicated region
  $region14: #{vit_forward.1} parent=0 // pred_check
    _
  $region15: #{vit_forward.1} parent=0 // pred_check_branch
    %31 = sbr.rel (0) target = $region17
  $region16: #{vit_forward.1} parent=0 // pred_region
    _
  $region17: #{vit_forward.1} parent=0 // pred_fallthru
    _
  // Predicated region
  $region18: #{vit_forward.1} parent=0 // pred_check
    _
  $region19: #{vit_forward.1} parent=0 // pred_check_branch
    %33 = sbr.rel (0) target = $region21
  $region20: #{vit_forward.1} parent=0 // pred_region
    _
  $region21: #{vit_forward.1} parent=0 // pred_fallthru
    _
  // Predicated region
  $region22: #{vit_forward.1} parent=0 // pred_check
    _
  $region23: #{vit_forward.1} parent=0 // pred_check_branch
    %35 = sbr.rel (0) target = $region25
  $region24: #{vit_forward.1} parent=0 // pred_region
    _
  $region25: #{vit_forward.1} parent=0 // pred_fallthru
    _
  // Predicated region
  $region26: #{vit_forward.1} parent=0 // pred_check
    _
  $region27: #{vit_forward.1} parent=0 // pred_check_branch
    %37 = sbr.rel (0) target = $region29
  $region28: #{vit_forward.1} parent=0 // pred_region
    _
  $region29: #{vit_forward.1} parent=0 // pred_fallthru
    _
  // Predicated region
  $region30: #{vit_forward.1} parent=0 // pred_check
    _
  $region31: #{vit_forward.1} parent=0 // pred_check_branch
    %39 = sbr.rel (0) target = $region33
  $region32: #{vit_forward.1} parent=0 // pred_region
    _
  $region33: #{vit_forward.1} parent=0 // pred_fallthru
    _
  // Predicated region
  $region34: #{vit_forward.1} parent=0 // pred_check
    _
  $region35: #{vit_forward.1} parent=0 // pred_check_branch
    %41 = sbr.rel (0) target = $region37
  $region36: #{vit_forward.1} parent=0 // pred_region
    _
  $region37: #{vit_forward.1} parent=0 // pred_fallthru
    _
  // Predicated region
  $region38: #{vit_forward.1} parent=0 // pred_check
    _
  $region39: #{vit_forward.1} parent=0 // pred_check_branch
    %43 = sbr.rel (0) target = $region41
  $region40: #{vit_forward.1} parent=0 // pred_region
    _
  $region41: #{vit_forward.1} parent=0 // pred_fallthru
    _
  // Predicated region
  $region42: #{vit_forward.1} parent=0 // pred_check
    _
  $region43: #{vit_forward.1} parent=0 // pred_check_branch
    %45 = sbr.rel (0) target = $region45
  $region44: #{vit_forward.1} parent=0 // pred_region
    _
  $region45: #{vit_forward.1} parent=0 // pred_fallthru
    _
  // Predicated region
  $region46: #{vit_forward.1} parent=0 // pred_check
    _
  $region47: #{vit_forward.1} parent=0 // pred_check_branch
    %47 = sbr.rel (0) target = $region49
  $region48: #{vit_forward.1} parent=0 // pred_region
    _
  $region49: #{vit_forward.1} parent=0 // pred_fallthru
    _
  // Predicated region
  $region50: #{vit_forward.1} parent=0 // pred_check
    _
  $region51: #{vit_forward.1} parent=0 // pred_check_branch
    %49 = sbr.rel (0) target = $region53
  $region52: #{vit_forward.1} parent=0 // pred_region
    _
  $region53: #{vit_forward.1} parent=0 // pred_fallthru
    _
  // Predicated region
  $region54: #{vit_forward.1} parent=0 // pred_check
    _
  $region55: #{vit_forward.1} parent=0 // pred_check_branch
    %51 = sbr.rel (0) target = $region57
  $region56: #{vit_forward.1} parent=0 // pred_region
    _
  $region57: #{vit_forward.1} parent=0 // pred_fallthru
    _
  // Predicated region
  $region58: #{vit_forward.1} parent=0 // pred_check
    _
  $region59: #{vit_forward.1} parent=0 // pred_check_branch
    %53 = sbr.rel (0) target = $region61
  $region60: #{vit_forward.1} parent=0 // pred_region
    _
  $region61: #{vit_forward.1} parent=0 // pred_fallthru
    _
  // Predicated region
  $region62: #{vit_forward.1} parent=0 // pred_check
    _
  $region63: #{vit_forward.1} parent=0 // pred_check_branch
    %55 = sbr.rel (0) target = $region65
  $region64: #{vit_forward.1} parent=0 // pred_region
    _
  $region65: #{vit_forward.1} parent=0 // pred_fallthru
    _
  // Predicated region
  $region66: #{vit_forward.1} parent=0 // pred_check
    _
  $region67: #{vit_forward.1} parent=0 // pred_check_branch
    %57 = sbr.rel (0) target = $region69
  $region68: #{vit_forward.1} parent=0 // pred_region
    _
  $region69: #{vit_forward.1} parent=0 // pred_fallthru
    _
  // Predicated region
  $region70: #{vit_forward.1} parent=0 // pred_check
    _
  $region71: #{vit_forward.1} parent=0 // pred_check_branch
    %59 = sbr.rel (0) target = $region73
  $region72: #{vit_forward.1} parent=0 // pred_region
    _
  $region73: #{vit_forward.1} parent=0 // pred_fallthru
    _
  // Predicated region
  $region74: #{vit_forward.1} parent=0 // pred_check
    _
  $region75: #{vit_forward.1} parent=0 // pred_check_branch
    %61 = sbr.rel (0) target = $region77
  $region76: #{vit_forward.1} parent=0 // pred_region
    _
  $region77: #{vit_forward.1} parent=0 // pred_fallthru
    _
  %v62 = vld [vmem:[%s0] sm:$0xff]
  %v63 = vld [vmem:[%s0 + $0x8] sm:$0xff]
  %v64 = vld [vmem:[%s0 + $0x10] sm:$0xff]
  %v65 = vld [vmem:[%s0 + $0x18] sm:$0xff]
  %v66 = vld [vmem:[%s0 + $0x20] sm:$0xff]
  %v67 = vld [vmem:[%s1] sm:$0xff]
  %v68 = vld [vmem:[%s1 + $0x8] sm:$0xf]
  %v69 = vld [vmem:[%s2] sm:$0xff]
  %v70 = vld [vmem:[%s2 + $0x8] sm:$0xff]
  %v71 = vld [vmem:[%s2 + $0x10] sm:$0xff]
  %v72 = vld [vmem:[%s2 + $0x18] sm:$0xff]
  %v73 = vld [vmem:[%s2 + $0x20] sm:$0xff]
  %vm74 = vcmask 97280
  %v76 = vsel %vm74, %v62, 0
  %v79 = vsel %vm74, %v63, 0
  %v82 = vsel %vm74, %v64, 0
  %v85 = vsel %vm74, %v65, 0
  %v88 = vsel %vm74, %v66, 0
  %vm90 = vcmask 1043456
  %v92 = vsel %vm90, %v68, 0
  %94 = vmatprep.subr.mxu0 0.0
  %95 = vmatpush1.msra.mxu0 0.0
  %96 = vmatprep.subr.mxu0 0.0
  %97 = vmatpush1.msra.mxu0 0.0
  %98 = vmatprep.subr.mxu0 0.0
  %99 = vmatpush1.msra.mxu0 0.0
  %100 = vmatprep.subr.mxu0 0.0
  %101 = vmatpush1.msra.mxu0 0.0
  %102 = vmatprep.subr.mxu0 0.0
  %103 = vmatpush1.msra.mxu0 0.0
  %104 = vmatprep.subr.mxu0 0.0
  %105 = vmatpush1.msra.mxu0 0.0
  %106 = vmatprep.subr.mxu0 0.0
  %107 = vmatpush1.msra.mxu0 0.0
  %108 = vmatprep.subr.mxu0 0.0
  %109 = vmatpush1.msra.mxu0 0.0
  %110 = vmatprep.subr.mxu0 0.0
  %111 = vmatpush1.msra.mxu0 0.0
  %112 = vmatprep.subr.mxu0 0.0
  %113 = vmatpush1.msra.mxu0 0.0
  %114 = vmatprep.subr.mxu0 0.0
  %115 = vmatpush1.msra.mxu0 0.0
  %116 = vmatprep.subr.mxu0 0.0
  %117 = vmatpush1.msra.mxu0 0.0
  %118 = vmatprep.subr.mxu0 0.0
  %119 = vmatpush1.msra.mxu0 0.0
  %120 = vmatprep.subr.mxu0 0.0
  %121 = vmatpush1.msra.mxu0 0.0
  %122 = vmatprep.subr.mxu0 0.0
  %123 = vmatpush1.msra.mxu0 %v92
  %124 = vmatprep.subr.mxu0 0.0
  %125 = vmatpush1.msra.mxu0 %v67
  %126 = vmatprep.subr.mxu0 0.0
  %127 = vmatpush2.msra.mxu0 0.0
  %128 = vmatprep.subr.mxu0 0.0
  %129 = vmatpush2.msra.mxu0 0.0
  %130 = vmatprep.subr.mxu0 0.0
  %131 = vmatpush2.msra.mxu0 0.0
  %132 = vmatprep.subr.mxu0 0.0
  %133 = vmatpush2.msra.mxu0 0.0
  %134 = vmatprep.subr.mxu0 0.0
  %135 = vmatpush2.msra.mxu0 0.0
  %136 = vmatprep.subr.mxu0 0.0
  %137 = vmatpush2.msra.mxu0 0.0
  %138 = vmatprep.subr.mxu0 0.0
  %139 = vmatpush2.msra.mxu0 0.0
  %140 = vmatprep.subr.mxu0 0.0
  %141 = vmatpush2.msra.mxu0 0.0
  %142 = vmatprep.subr.mxu0 0.0
  %143 = vmatpush2.msra.mxu0 0.0
  %144 = vmatprep.subr.mxu0 0.0
  %145 = vmatpush2.msra.mxu0 0.0
  %146 = vmatprep.subr.mxu0 0.0
  %147 = vmatpush2.msra.mxu0 0.0
  %148 = vmatprep.subr.mxu0 0.0
  %149 = vmatpush2.msra.mxu0 0.0
  %150 = vmatprep.subr.mxu0 0.0
  %151 = vmatpush2.msra.mxu0 0.0
  %152 = vmatprep.subr.mxu0 0.0
  %153 = vmatpush2.msra.mxu0 0.0
  %154 = vmatprep.subr.mxu0 0.0
  %155 = vmatpush2.msra.mxu0 0.0
  %156 = vmatprep.subr.mxu0 0.0
  %157 = vmatpush2.msra.mxu0 0.0
  %158 = vmatprep.mubr.f32.mxu0 0.0
  %159 = vmatmul.mubr.f32.gmra.mxu0 %v76
  %v160 = vpop.f32.mrf.mxu0
  %v161 = vadd.f32 %v69, %v160
  %v162 = vpop.f32.mrf.mxu0
  %163 = vmatprep.mubr.f32.mxu0 0.0
  %164 = vmatmul.mubr.f32.gmra.mxu0 %v79
  %v165 = vpop.f32.mrf.mxu0
  %v166 = vadd.f32 %v70, %v165
  %v167 = vpop.f32.mrf.mxu0
  %168 = vmatprep.mubr.f32.mxu0 0.0
  %169 = vmatmul.mubr.f32.gmra.mxu0 %v82
  %v170 = vpop.f32.mrf.mxu0
  %v171 = vadd.f32 %v71, %v170
  %v172 = vpop.f32.mrf.mxu0
  %173 = vmatprep.mubr.f32.mxu0 0.0
  %174 = vmatmul.mubr.f32.gmra.mxu0 %v85
  %v175 = vpop.f32.mrf.mxu0
  %v176 = vadd.f32 %v72, %v175
  %v177 = vpop.f32.mrf.mxu0
  %178 = vmatprep.mubr.f32.mxu0 0.0
  %179 = vmatmul.mubr.f32.gmra.mxu0 %v88
  %v180 = vpop.f32.mrf.mxu0
  %v181 = vadd.f32 %v73, %v180
  %v182 = vpop.f32.mrf.mxu0
  %183 = vdwg.mxu0
  %v184 = vlaneseq
  %v185 = vand.u32 %v184, 127
  %vm186 = vcmp.ge.s32.totalorder %v185, 0
  %vm187 = vcmp.lt.s32.totalorder %v185, 4
  %vm188 = vmand %vm186, %vm187
  %v189 = vsel %vm188, 1, 0
  %v190 = vcvt.s32.f32 %v189
  %vm191 = vcmp.ge.s32.totalorder %v185, 4
  %vm192 = vcmp.lt.s32.totalorder %v185, 8
  %vm193 = vmand %vm191, %vm192
  %v194 = vsel %vm193, 1, 0
  %v195 = vcvt.s32.f32 %v194
  %vm196 = vcmp.ge.s32.totalorder %v185, 8
  %vm197 = vcmp.lt.s32.totalorder %v185, 12
  %vm198 = vmand %vm196, %vm197
  %v199 = vsel %vm198, 1, 0
  %v200 = vcvt.s32.f32 %v199
  %vm201 = vcmp.ge.s32.totalorder %v185, 12
  %vm202 = vcmp.lt.s32.totalorder %v185, 16
  %vm203 = vmand %vm201, %vm202
  %v204 = vsel %vm203, 1, 0
  %v205 = vcvt.s32.f32 %v204
  %vm206 = vcmp.ge.s32.totalorder %v185, 16
  %vm207 = vcmp.lt.s32.totalorder %v185, 20
  %vm208 = vmand %vm206, %vm207
  %v209 = vsel %vm208, 1, 0
  %v210 = vcvt.s32.f32 %v209
  %vm211 = vcmp.ge.s32.totalorder %v185, 20
  %vm212 = vcmp.lt.s32.totalorder %v185, 24
  %vm213 = vmand %vm211, %vm212
  %v214 = vsel %vm213, 1, 0
  %v215 = vcvt.s32.f32 %v214
  %vm216 = vcmp.ge.s32.totalorder %v185, 24
  %vm217 = vcmp.lt.s32.totalorder %v185, 28
  %vm218 = vmand %vm216, %vm217
  %v219 = vsel %vm218, 1, 0
  %v220 = vcvt.s32.f32 %v219
  %vm221 = vcmp.ge.s32.totalorder %v185, 28
  %vm222 = vcmp.lt.s32.totalorder %v185, 32
  %vm223 = vmand %vm221, %vm222
  %v224 = vsel %vm223, 1, 0
  %v225 = vcvt.s32.f32 %v224
  %v226 = vlaneseq
  %v227 = vshrl.u32 %v226, 7
  %v228 = vadd.s32 %v227, 8
  %v229 = vadd.s32 %v227, 16
  %v230 = vadd.s32 %v227, 24
  %v231 = vadd.s32 %v227, 32
  %vm232 = vcmp.ge.s32.totalorder %v227, 0
  %vm233 = vcmp.ge.s32.totalorder %v228, 0
  %vm234 = vcmp.ge.s32.totalorder %v229, 0
  %vm235 = vcmp.ge.s32.totalorder %v230, 0
  %vm236 = vcmp.ge.s32.totalorder %v231, 0
  %vm237 = vcmp.lt.s32.totalorder %v227, 17
  %vm238 = vcmp.lt.s32.totalorder %v228, 17
  %vm239 = vcmp.lt.s32.totalorder %v229, 17
  %vm240 = vcmp.lt.s32.totalorder %v230, 17
  %vm241 = vcmp.lt.s32.totalorder %v231, 17
  %vm242 = vmand %vm232, %vm237
  %vm243 = vmand %vm233, %vm238
  %vm244 = vmand %vm234, %vm239
  %vm245 = vmand %vm235, %vm240
  %vm246 = vmand %vm236, %vm241
  %vm247 = vcmp.lt.s32.totalorder %v185, 17
  %vm248 = vmand %vm186, %vm247
  %vm249 = vmand %vm242, %vm248
  %vm250 = vmand %vm243, %vm248
  %vm251 = vmand %vm244, %vm248
  %vm252 = vmand %vm245, %vm248
  %vm253 = vmand %vm246, %vm248
  %vm254 = vcmp.ge.s32.totalorder %v227, 17
  %vm255 = vcmp.ge.s32.totalorder %v228, 17
  %vm256 = vcmp.ge.s32.totalorder %v229, 17
  %vm257 = vcmp.ge.s32.totalorder %v230, 17
  %vm258 = vcmp.ge.s32.totalorder %v231, 17
  %vm259 = vcmp.lt.s32.totalorder %v227, 34
  %vm260 = vcmp.lt.s32.totalorder %v228, 34
  %vm261 = vcmp.lt.s32.totalorder %v229, 34
  %vm262 = vcmp.lt.s32.totalorder %v230, 34
  %vm263 = vcmp.lt.s32.totalorder %v231, 34
  %vm264 = vmand %vm254, %vm259
  %vm265 = vmand %vm255, %vm260
  %vm266 = vmand %vm256, %vm261
  %vm267 = vmand %vm257, %vm262
  %vm268 = vmand %vm258, %vm263
  %vm269 = vcmp.ge.s32.totalorder %v185, 17
  %vm270 = vcmp.lt.s32.totalorder %v185, 34
  %vm271 = vmand %vm269, %vm270
  %vm272 = vmand %vm264, %vm271
  %vm273 = vmand %vm265, %vm271
  %vm274 = vmand %vm266, %vm271
  %vm275 = vmand %vm267, %vm271
  %vm276 = vmand %vm268, %vm271
  %vm277 = vmor %vm249, %vm272
  %vm278 = vmor %vm250, %vm273
  %vm279 = vmor %vm251, %vm274
  %vm280 = vmor %vm252, %vm275
  %vm281 = vmor %vm253, %vm276
  %vm282 = vcmp.ge.s32.totalorder %v227, 34
  %vm283 = vcmp.ge.s32.totalorder %v228, 34
  %vm284 = vcmp.ge.s32.totalorder %v229, 34
  %vm285 = vcmp.ge.s32.totalorder %v230, 34
  %vm286 = vcmp.ge.s32.totalorder %v231, 34
  %vm287 = vcmp.lt.s32.totalorder %v227, 51
  %vm288 = vcmp.lt.s32.totalorder %v228, 51
  %vm289 = vcmp.lt.s32.totalorder %v229, 51
  %vm290 = vcmp.lt.s32.totalorder %v230, 51
  %vm291 = vcmp.lt.s32.totalorder %v231, 51
  %vm292 = vmand %vm282, %vm287
  %vm293 = vmand %vm283, %vm288
  %vm294 = vmand %vm284, %vm289
  %vm295 = vmand %vm285, %vm290
  %vm296 = vmand %vm286, %vm291
  %vm297 = vcmp.ge.s32.totalorder %v185, 34
  %vm298 = vcmp.lt.s32.totalorder %v185, 51
  %vm299 = vmand %vm297, %vm298
  %vm300 = vmand %vm292, %vm299
  %vm301 = vmand %vm293, %vm299
  %vm302 = vmand %vm294, %vm299
  %vm303 = vmand %vm295, %vm299
  %vm304 = vmand %vm296, %vm299
  %vm305 = vmor %vm277, %vm300
  %vm306 = vmor %vm278, %vm301
  %vm307 = vmor %vm279, %vm302
  %vm308 = vmor %vm280, %vm303
  %vm309 = vmor %vm281, %vm304
  %v310 = vsel %vm305, 0.0, -1e+30
  %v311 = vsel %vm306, 0.0, -1e+30
  %v312 = vsel %vm307, 0.0, -1e+30
  %v313 = vsel %vm308, 0.0, -1e+30
  %v314 = vsel %vm309, 0.0, -1e+30
  %v315 = vld [vmem:[%s7] sm:$0x1]
  %v316 = vld [vmem:[%s8] sm:$0x1]
  %vm317 = vcmask 261120
  %v318 = vsel %vm317, %v161, 0.0
  %319 = vadd.xlane.f32.xlu0 %v318
  %v320 = vpop.xlane.xlu0 %319
  %v321 = vsel %vm317, %v166, 0.0
  %322 = vadd.xlane.f32.xlu0 %v321
  %v323 = vpop.xlane.xlu0 %322
  %v324 = vsel %vm317, %v171, 0.0
  %325 = vadd.xlane.f32.xlu0 %v324
  %v326 = vpop.xlane.xlu0 %325
  %v327 = vsel %vm317, %v176, 0.0
  %328 = vadd.xlane.f32.xlu0 %v327
  %v329 = vpop.xlane.xlu0 %328
  %v330 = vsel %vm317, %v181, 0.0
  %331 = vadd.xlane.f32.xlu0 %v330
  %v332 = vpop.xlane.xlu0 %331
  %v333 = vrcp.pop 32.0
  %v334 = vmul.f32 %v320, %v333
  %v335 = vmul.f32 %v323, %v333
  %v336 = vmul.f32 %v326, %v333
  %v337 = vmul.f32 %v329, %v333
  %v338 = vmul.f32 %v332, %v333
  %v339 = vsub.f32 %v161, %v334
  %v340 = vsub.f32 %v166, %v335
  %v341 = vsub.f32 %v171, %v336
  %v342 = vsub.f32 %v176, %v337
  %v343 = vsub.f32 %v181, %v338
  %v344 = vmul.f32 %v339, %v339
  %v345 = vmul.f32 %v340, %v340
  %v346 = vmul.f32 %v341, %v341
  %v347 = vmul.f32 %v342, %v342
  %v348 = vmul.f32 %v343, %v343
  %v349 = vsel %vm317, %v344, 0.0
  %350 = vadd.xlane.f32.xlu0 %v349
  %v351 = vpop.xlane.xlu0 %350
  %v352 = vsel %vm317, %v345, 0.0
  %353 = vadd.xlane.f32.xlu0 %v352
  %v354 = vpop.xlane.xlu0 %353
  %v355 = vsel %vm317, %v346, 0.0
  %356 = vadd.xlane.f32.xlu0 %v355
  %v357 = vpop.xlane.xlu0 %356
  %v358 = vsel %vm317, %v347, 0.0
  %359 = vadd.xlane.f32.xlu0 %v358
  %v360 = vpop.xlane.xlu0 %359
  %v361 = vsel %vm317, %v348, 0.0
  %362 = vadd.xlane.f32.xlu0 %v361
  %v363 = vpop.xlane.xlu0 %362
  %v364 = vmul.f32 %v351, %v333
  %v365 = vmul.f32 %v354, %v333
  %v366 = vmul.f32 %v357, %v333
  %v367 = vmul.f32 %v360, %v333
  %v368 = vmul.f32 %v363, %v333
  %v369 = vadd.f32 %v364, 1e-05
  %v370 = vadd.f32 %v365, 1e-05
  %v371 = vadd.f32 %v366, 1e-05
  %v372 = vadd.f32 %v367, 1e-05
  %v373 = vadd.f32 %v368, 1e-05
  %v374 = vrsqrt.pop %v369
  %v375 = vrsqrt.pop %v370
  %v376 = vrsqrt.pop %v371
  %v377 = vrsqrt.pop %v372
  %v378 = vrsqrt.pop %v373
  %v379 = vmul.f32 %v339, %v374
  %v380 = vmul.f32 %v340, %v375
  %v381 = vmul.f32 %v341, %v376
  %v382 = vmul.f32 %v342, %v377
  %v383 = vmul.f32 %v343, %v378
  %v385 = vlaneseq
  %v386 = vshrl.u32 %v385, 7
  %v387 = vsub.s32 0, %v386
  %v388 = vrot.slane %v315, %v387
  %v390 = vmul.f32 %v379, %v388
  %v391 = vmul.f32 %v380, %v388
  %v392 = vmul.f32 %v381, %v388
  %v393 = vmul.f32 %v382, %v388
  %v394 = vmul.f32 %v383, %v388
  %v396 = vlaneseq
  %v397 = vshrl.u32 %v396, 7
  %v398 = vsub.s32 0, %v397
  %v399 = vrot.slane %v316, %v398
  %v401 = vadd.f32 %v390, %v399
  %v402 = vadd.f32 %v391, %v399
  %v403 = vadd.f32 %v392, %v399
  %v404 = vadd.f32 %v393, %v399
  %v405 = vadd.f32 %v394, %v399
  %v406 = vld [vmem:[%s3] sm:$0xff]
  %v407 = vld [vmem:[%s3 + $0x8] sm:$0xff]
  %v408 = vld [vmem:[%s3 + $0x10] sm:$0xff]
  %v409 = vld [vmem:[%s3 + $0x18] sm:$0xff]
  %v410 = vld [vmem:[%s4] sm:$0x1]
  %v412 = vlaneseq
  %v413 = vshrl.u32 %v412, 7
  %v414 = vsub.s32 0, %v413
  %v415 = vrot.slane %v410, %v414
  %v418 = vsel %vm317, %v401, 0
  %v421 = vsel %vm317, %v402, 0
  %v424 = vsel %vm317, %v403, 0
  %v427 = vsel %vm317, %v404, 0
  %v430 = vsel %vm317, %v405, 0
  %432 = vmatprep.subr.mxu0 0.0
  %433 = vmatpush1.msra.mxu0 0.0
  %434 = vmatprep.subr.mxu0 0.0
  %435 = vmatpush1.msra.mxu0 0.0
  %436 = vmatprep.subr.mxu0 0.0
  %437 = vmatpush1.msra.mxu0 0.0
  %438 = vmatprep.subr.mxu0 0.0
  %439 = vmatpush1.msra.mxu0 0.0
  %440 = vmatprep.subr.mxu0 0.0
  %441 = vmatpush1.msra.mxu0 0.0
  %442 = vmatprep.subr.mxu0 0.0
  %443 = vmatpush1.msra.mxu0 0.0
  %444 = vmatprep.subr.mxu0 0.0
  %445 = vmatpush1.msra.mxu0 0.0
  %446 = vmatprep.subr.mxu0 0.0
  %447 = vmatpush1.msra.mxu0 0.0
  %448 = vmatprep.subr.mxu0 0.0
  %449 = vmatpush1.msra.mxu0 0.0
  %450 = vmatprep.subr.mxu0 0.0
  %451 = vmatpush1.msra.mxu0 0.0
  %452 = vmatprep.subr.mxu0 0.0
  %453 = vmatpush1.msra.mxu0 0.0
  %454 = vmatprep.subr.mxu0 0.0
  %455 = vmatpush1.msra.mxu0 0.0
  %456 = vmatprep.subr.mxu0 0.0
  %457 = vmatpush1.msra.mxu0 %v409
  %458 = vmatprep.subr.mxu0 0.0
  %459 = vmatpush1.msra.mxu0 %v408
  %460 = vmatprep.subr.mxu0 0.0
  %461 = vmatpush1.msra.mxu0 %v407
  %462 = vmatprep.subr.mxu0 0.0
  %463 = vmatpush1.msra.mxu0 %v406
  %464 = vmatprep.subr.mxu0 0.0
  %465 = vmatpush2.msra.mxu0 0.0
  %466 = vmatprep.subr.mxu0 0.0
  %467 = vmatpush2.msra.mxu0 0.0
  %468 = vmatprep.subr.mxu0 0.0
  %469 = vmatpush2.msra.mxu0 0.0
  %470 = vmatprep.subr.mxu0 0.0
  %471 = vmatpush2.msra.mxu0 0.0
  %472 = vmatprep.subr.mxu0 0.0
  %473 = vmatpush2.msra.mxu0 0.0
  %474 = vmatprep.subr.mxu0 0.0
  %475 = vmatpush2.msra.mxu0 0.0
  %476 = vmatprep.subr.mxu0 0.0
  %477 = vmatpush2.msra.mxu0 0.0
  %478 = vmatprep.subr.mxu0 0.0
  %479 = vmatpush2.msra.mxu0 0.0
  %480 = vmatprep.subr.mxu0 0.0
  %481 = vmatpush2.msra.mxu0 0.0
  %482 = vmatprep.subr.mxu0 0.0
  %483 = vmatpush2.msra.mxu0 0.0
  %484 = vmatprep.subr.mxu0 0.0
  %485 = vmatpush2.msra.mxu0 0.0
  %486 = vmatprep.subr.mxu0 0.0
  %487 = vmatpush2.msra.mxu0 0.0
  %488 = vmatprep.subr.mxu0 0.0
  %489 = vmatpush2.msra.mxu0 0.0
  %490 = vmatprep.subr.mxu0 0.0
  %491 = vmatpush2.msra.mxu0 0.0
  %492 = vmatprep.subr.mxu0 0.0
  %493 = vmatpush2.msra.mxu0 0.0
  %494 = vmatprep.subr.mxu0 0.0
  %495 = vmatpush2.msra.mxu0 0.0
  %496 = vmatprep.mubr.f32.mxu0 0.0
  %497 = vmatmul.mubr.f32.gmra.mxu0 %v418
  %v498 = vpop.f32.mrf.mxu0
  %v499 = vadd.f32 %v415, %v498
  %v500 = vpop.f32.mrf.mxu0
  %501 = vmatprep.mubr.f32.mxu0 0.0
  %502 = vmatmul.mubr.f32.gmra.mxu0 %v421
  %v503 = vpop.f32.mrf.mxu0
  %v504 = vadd.f32 %v415, %v503
  %v505 = vpop.f32.mrf.mxu0
  %506 = vmatprep.mubr.f32.mxu0 0.0
  %507 = vmatmul.mubr.f32.gmra.mxu0 %v424
  %v508 = vpop.f32.mrf.mxu0
  %v509 = vadd.f32 %v415, %v508
  %v510 = vpop.f32.mrf.mxu0
  %511 = vmatprep.mubr.f32.mxu0 0.0
  %512 = vmatmul.mubr.f32.gmra.mxu0 %v427
  %v513 = vpop.f32.mrf.mxu0
  %v514 = vadd.f32 %v415, %v513
  %v515 = vpop.f32.mrf.mxu0
  %516 = vmatprep.mubr.f32.mxu0 0.0
  %517 = vmatmul.mubr.f32.gmra.mxu0 %v430
  %v518 = vpop.f32.mrf.mxu0
  %v519 = vadd.f32 %v415, %v518
  %v520 = vpop.f32.mrf.mxu0
  %521 = vdwg.mxu0
  %v522 = vmul.f32 %v499, %v190
  %v523 = vmul.f32 %v504, %v190
  %v524 = vmul.f32 %v509, %v190
  %v525 = vmul.f32 %v514, %v190
  %v526 = vmul.f32 %v519, %v190
  %v527 = vmul.f32 %v499, %v195
  %v528 = vmul.f32 %v504, %v195
  %v529 = vmul.f32 %v509, %v195
  %v530 = vmul.f32 %v514, %v195
  %v531 = vmul.f32 %v519, %v195
  %v532 = vmul.f32 %v499, %v200
  %v533 = vmul.f32 %v504, %v200
  %v534 = vmul.f32 %v509, %v200
  %v535 = vmul.f32 %v514, %v200
  %v536 = vmul.f32 %v519, %v200
  %v537 = vmul.f32 %v499, %v205
  %v538 = vmul.f32 %v504, %v205
  %v539 = vmul.f32 %v509, %v205
  %v540 = vmul.f32 %v514, %v205
  %v541 = vmul.f32 %v519, %v205
  %v542 = vmul.f32 %v499, %v210
  %v543 = vmul.f32 %v504, %v210
  %v544 = vmul.f32 %v509, %v210
  %v545 = vmul.f32 %v514, %v210
  %v546 = vmul.f32 %v519, %v210
  %v547 = vmul.f32 %v499, %v215
  %v548 = vmul.f32 %v504, %v215
  %v549 = vmul.f32 %v509, %v215
  %v550 = vmul.f32 %v514, %v215
  %v551 = vmul.f32 %v519, %v215
  %v552 = vmul.f32 %v499, %v220
  %v553 = vmul.f32 %v504, %v220
  %v554 = vmul.f32 %v509, %v220
  %v555 = vmul.f32 %v514, %v220
  %v556 = vmul.f32 %v519, %v220
  %v557 = vmul.f32 %v499, %v225
  %v558 = vmul.f32 %v504, %v225
  %v559 = vmul.f32 %v509, %v225
  %v560 = vmul.f32 %v514, %v225
  %v561 = vmul.f32 %v519, %v225
  %567 = vrot.lane.b32.xlu0 %v499, 96
  %v568 = vpop.permute.xlu0 %567
  %569 = vrot.lane.b32.xlu0 %v504, 96
  %v570 = vpop.permute.xlu0 %569
  %571 = vrot.lane.b32.xlu0 %v509, 96
  %v572 = vpop.permute.xlu0 %571
  %573 = vrot.lane.b32.xlu0 %v514, 96
  %v574 = vpop.permute.xlu0 %573
  %575 = vrot.lane.b32.xlu0 %v519, 96
  %v576 = vpop.permute.xlu0 %575
  %v578 = vsel %vm317, %v522, 0
  %v581 = vsel %vm317, %v523, 0
  %v584 = vsel %vm317, %v524, 0
  %v587 = vsel %vm317, %v525, 0
  %v590 = vsel %vm317, %v526, 0
  %v593 = vsel %vm317, %v527, 0
  %v596 = vsel %vm317, %v528, 0
  %v599 = vsel %vm317, %v529, 0
  %v602 = vsel %vm317, %v530, 0
  %v605 = vsel %vm317, %v531, 0
  %v608 = vsel %vm317, %v532, 0
  %v611 = vsel %vm317, %v533, 0
  %v614 = vsel %vm317, %v534, 0
  %v617 = vsel %vm317, %v535, 0
  %v620 = vsel %vm317, %v536, 0
  %v623 = vsel %vm317, %v537, 0
  %v626 = vsel %vm317, %v538, 0
  %v629 = vsel %vm317, %v539, 0
  %v632 = vsel %vm317, %v540, 0
  %v635 = vsel %vm317, %v541, 0
  %v638 = vsel %vm317, %v542, 0
  %v641 = vsel %vm317, %v543, 0
  %v644 = vsel %vm317, %v544, 0
  %v647 = vsel %vm317, %v545, 0
  %v650 = vsel %vm317, %v546, 0
  %v653 = vsel %vm317, %v547, 0
  %v656 = vsel %vm317, %v548, 0
  %v659 = vsel %vm317, %v549, 0
  %v662 = vsel %vm317, %v550, 0
  %v665 = vsel %vm317, %v551, 0
  %v668 = vsel %vm317, %v552, 0
  %v671 = vsel %vm317, %v553, 0
  %v674 = vsel %vm317, %v554, 0
  %v677 = vsel %vm317, %v555, 0
  %v680 = vsel %vm317, %v556, 0
  %v683 = vsel %vm317, %v557, 0
  %v686 = vsel %vm317, %v558, 0
  %v689 = vsel %vm317, %v559, 0
  %v692 = vsel %vm317, %v560, 0
  %v695 = vsel %vm317, %v561, 0
  %v697 = vsel %vm317, %v568, 0
  %v699 = vsel %vm317, %v570, 0
  %v701 = vsel %vm317, %v572, 0
  %v703 = vsel %vm317, %v574, 0
  %v705 = vsel %vm317, %v576, 0
  %707 = vmatprep.subr.mxu0 0.0
  %708 = vmatpush1.xpose.msra.mxu0 0.0
  %709 = vmatprep.subr.mxu0 0.0
  %710 = vmatpush1.xpose.msra.mxu0 0.0
  %711 = vmatprep.subr.mxu0 0.0
  %712 = vmatpush1.xpose.msra.mxu0 0.0
  %713 = vmatprep.subr.mxu0 0.0
  %714 = vmatpush1.xpose.msra.mxu0 0.0
  %715 = vmatprep.subr.mxu0 0.0
  %716 = vmatpush1.xpose.msra.mxu0 0.0
  %717 = vmatprep.subr.mxu0 0.0
  %718 = vmatpush1.xpose.msra.mxu0 0.0
  %719 = vmatprep.subr.mxu0 0.0
  %720 = vmatpush1.xpose.msra.mxu0 0.0
  %721 = vmatprep.subr.mxu0 0.0
  %722 = vmatpush1.xpose.msra.mxu0 0.0
  %723 = vmatprep.subr.mxu0 0.0
  %724 = vmatpush1.xpose.msra.mxu0 0.0
  %725 = vmatprep.subr.mxu0 0.0
  %726 = vmatpush1.xpose.msra.mxu0 0.0
  %727 = vmatprep.subr.mxu0 0.0
  %728 = vmatpush1.xpose.msra.mxu0 0.0
  %729 = vmatprep.subr.mxu0 0.0
  %730 = vmatpush1.xpose.msra.mxu0 %v705
  %731 = vmatprep.subr.mxu0 0.0
  %732 = vmatpush1.xpose.msra.mxu0 %v703
  %733 = vmatprep.subr.mxu0 0.0
  %734 = vmatpush1.xpose.msra.mxu0 %v701
  %735 = vmatprep.subr.mxu0 0.0
  %736 = vmatpush1.xpose.msra.mxu0 %v699
  %737 = vmatprep.subr.mxu0 0.0
  %738 = vmatpush1.xpose.msra.mxu0 %v697
  %739 = vmatprep.subr.mxu0 0.0
  %740 = vmatpush2.xpose.msra.mxu0 0.0
  %741 = vmatprep.subr.mxu0 0.0
  %742 = vmatpush2.xpose.msra.mxu0 0.0
  %743 = vmatprep.subr.mxu0 0.0
  %744 = vmatpush2.xpose.msra.mxu0 0.0
  %745 = vmatprep.subr.mxu0 0.0
  %746 = vmatpush2.xpose.msra.mxu0 0.0
  %747 = vmatprep.subr.mxu0 0.0
  %748 = vmatpush2.xpose.msra.mxu0 0.0
  %749 = vmatprep.subr.mxu0 0.0
  %750 = vmatpush2.xpose.msra.mxu0 0.0
  %751 = vmatprep.subr.mxu0 0.0
  %752 = vmatpush2.xpose.msra.mxu0 0.0
  %753 = vmatprep.subr.mxu0 0.0
  %754 = vmatpush2.xpose.msra.mxu0 0.0
  %755 = vmatprep.subr.mxu0 0.0
  %756 = vmatpush2.xpose.msra.mxu0 0.0
  %757 = vmatprep.subr.mxu0 0.0
  %758 = vmatpush2.xpose.msra.mxu0 0.0
  %759 = vmatprep.subr.mxu0 0.0
  %760 = vmatpush2.xpose.msra.mxu0 0.0
  %761 = vmatprep.subr.mxu0 0.0
  %762 = vmatpush2.xpose.msra.mxu0 0.0
  %763 = vmatprep.subr.mxu0 0.0
  %764 = vmatpush2.xpose.msra.mxu0 0.0
  %765 = vmatprep.subr.mxu0 0.0
  %766 = vmatpush2.xpose.msra.mxu0 0.0
  %767 = vmatprep.subr.mxu0 0.0
  %768 = vmatpush2.xpose.msra.mxu0 0.0
  %769 = vmatprep.subr.mxu0 0.0
  %770 = vmatpush2.xpose.msra.mxu0 0.0
  %771 = vmatprep.mubr.f32.mxu0 0.0
  %772 = vmatmul.mubr.f32.gmra.mxu0 %v578
  %v773 = vpop.f32.mrf.mxu0
  %v774 = vadd.f32 %v310, %v773
  %v775 = vpop.f32.mrf.mxu0
  %776 = vmatprep.mubr.f32.mxu0 0.0
  %777 = vmatmul.mubr.f32.gmra.mxu0 %v581
  %v778 = vpop.f32.mrf.mxu0
  %v779 = vadd.f32 %v311, %v778
  %v780 = vpop.f32.mrf.mxu0
  %781 = vmatprep.mubr.f32.mxu0 0.0
  %782 = vmatmul.mubr.f32.gmra.mxu0 %v584
  %v783 = vpop.f32.mrf.mxu0
  %v784 = vadd.f32 %v312, %v783
  %v785 = vpop.f32.mrf.mxu0
  %786 = vmatprep.mubr.f32.mxu0 0.0
  %787 = vmatmul.mubr.f32.gmra.mxu0 %v587
  %v788 = vpop.f32.mrf.mxu0
  %v789 = vadd.f32 %v313, %v788
  %v790 = vpop.f32.mrf.mxu0
  %791 = vmatprep.mubr.f32.mxu0 0.0
  %792 = vmatmul.mubr.f32.gmra.mxu0 %v590
  %v793 = vpop.f32.mrf.mxu0
  %v794 = vadd.f32 %v314, %v793
  %v795 = vpop.f32.mrf.mxu0
  %796 = vmatprep.mubr.f32.mxu0 0.0
  %797 = vmatmul.mubr.f32.gmra.mxu0 %v593
  %v798 = vpop.f32.mrf.mxu0
  %v799 = vadd.f32 %v310, %v798
  %v800 = vpop.f32.mrf.mxu0
  %801 = vmatprep.mubr.f32.mxu0 0.0
  %802 = vmatmul.mubr.f32.gmra.mxu0 %v596
  %v803 = vpop.f32.mrf.mxu0
  %v804 = vadd.f32 %v311, %v803
  %v805 = vpop.f32.mrf.mxu0
  %806 = vmatprep.mubr.f32.mxu0 0.0
  %807 = vmatmul.mubr.f32.gmra.mxu0 %v599
  %v808 = vpop.f32.mrf.mxu0
  %v809 = vadd.f32 %v312, %v808
  %v810 = vpop.f32.mrf.mxu0
  %811 = vmatprep.mubr.f32.mxu0 0.0
  %812 = vmatmul.mubr.f32.gmra.mxu0 %v602
  %v813 = vpop.f32.mrf.mxu0
  %v814 = vadd.f32 %v313, %v813
  %v815 = vpop.f32.mrf.mxu0
  %816 = vmatprep.mubr.f32.mxu0 0.0
  %817 = vmatmul.mubr.f32.gmra.mxu0 %v605
  %v818 = vpop.f32.mrf.mxu0
  %v819 = vadd.f32 %v314, %v818
  %v820 = vpop.f32.mrf.mxu0
  %821 = vmatprep.mubr.f32.mxu0 0.0
  %822 = vmatmul.mubr.f32.gmra.mxu0 %v608
  %v823 = vpop.f32.mrf.mxu0
  %v824 = vadd.f32 %v310, %v823
  %v825 = vpop.f32.mrf.mxu0
  %826 = vmatprep.mubr.f32.mxu0 0.0
  %827 = vmatmul.mubr.f32.gmra.mxu0 %v611
  %v828 = vpop.f32.mrf.mxu0
  %v829 = vadd.f32 %v311, %v828
  %v830 = vpop.f32.mrf.mxu0
  %831 = vmatprep.mubr.f32.mxu0 0.0
  %832 = vmatmul.mubr.f32.gmra.mxu0 %v614
  %v833 = vpop.f32.mrf.mxu0
  %v834 = vadd.f32 %v312, %v833
  %v835 = vpop.f32.mrf.mxu0
  %836 = vmatprep.mubr.f32.mxu0 0.0
  %837 = vmatmul.mubr.f32.gmra.mxu0 %v617
  %v838 = vpop.f32.mrf.mxu0
  %v839 = vadd.f32 %v313, %v838
  %v840 = vpop.f32.mrf.mxu0
  %841 = vmatprep.mubr.f32.mxu0 0.0
  %842 = vmatmul.mubr.f32.gmra.mxu0 %v620
  %v843 = vpop.f32.mrf.mxu0
  %v844 = vadd.f32 %v314, %v843
  %v845 = vpop.f32.mrf.mxu0
  %846 = vmatprep.mubr.f32.mxu0 0.0
  %847 = vmatmul.mubr.f32.gmra.mxu0 %v623
  %v848 = vpop.f32.mrf.mxu0
  %v849 = vadd.f32 %v310, %v848
  %v850 = vpop.f32.mrf.mxu0
  %851 = vmatprep.mubr.f32.mxu0 0.0
  %852 = vmatmul.mubr.f32.gmra.mxu0 %v626
  %v853 = vpop.f32.mrf.mxu0
  %v854 = vadd.f32 %v311, %v853
  %v855 = vpop.f32.mrf.mxu0
  %856 = vmatprep.mubr.f32.mxu0 0.0
  %857 = vmatmul.mubr.f32.gmra.mxu0 %v629
  %v858 = vpop.f32.mrf.mxu0
  %v859 = vadd.f32 %v312, %v858
  %v860 = vpop.f32.mrf.mxu0
  %861 = vmatprep.mubr.f32.mxu0 0.0
  %862 = vmatmul.mubr.f32.gmra.mxu0 %v632
  %v863 = vpop.f32.mrf.mxu0
  %v864 = vadd.f32 %v313, %v863
  %v865 = vpop.f32.mrf.mxu0
  %866 = vmatprep.mubr.f32.mxu0 0.0
  %867 = vmatmul.mubr.f32.gmra.mxu0 %v635
  %v868 = vpop.f32.mrf.mxu0
  %v869 = vadd.f32 %v314, %v868
  %v870 = vpop.f32.mrf.mxu0
  %871 = vmatprep.mubr.f32.mxu0 0.0
  %872 = vmatmul.mubr.f32.gmra.mxu0 %v638
  %v873 = vpop.f32.mrf.mxu0
  %v874 = vadd.f32 %v310, %v873
  %v875 = vpop.f32.mrf.mxu0
  %876 = vmatprep.mubr.f32.mxu0 0.0
  %877 = vmatmul.mubr.f32.gmra.mxu0 %v641
  %v878 = vpop.f32.mrf.mxu0
  %v879 = vadd.f32 %v311, %v878
  %v880 = vpop.f32.mrf.mxu0
  %881 = vmatprep.mubr.f32.mxu0 0.0
  %882 = vmatmul.mubr.f32.gmra.mxu0 %v644
  %v883 = vpop.f32.mrf.mxu0
  %v884 = vadd.f32 %v312, %v883
  %v885 = vpop.f32.mrf.mxu0
  %886 = vmatprep.mubr.f32.mxu0 0.0
  %887 = vmatmul.mubr.f32.gmra.mxu0 %v647
  %v888 = vpop.f32.mrf.mxu0
  %v889 = vadd.f32 %v313, %v888
  %v890 = vpop.f32.mrf.mxu0
  %891 = vmatprep.mubr.f32.mxu0 0.0
  %892 = vmatmul.mubr.f32.gmra.mxu0 %v650
  %v893 = vpop.f32.mrf.mxu0
  %v894 = vadd.f32 %v314, %v893
  %v895 = vpop.f32.mrf.mxu0
  %896 = vmatprep.mubr.f32.mxu0 0.0
  %897 = vmatmul.mubr.f32.gmra.mxu0 %v653
  %v898 = vpop.f32.mrf.mxu0
  %v899 = vadd.f32 %v310, %v898
  %v900 = vpop.f32.mrf.mxu0
  %901 = vmatprep.mubr.f32.mxu0 0.0
  %902 = vmatmul.mubr.f32.gmra.mxu0 %v656
  %v903 = vpop.f32.mrf.mxu0
  %v904 = vadd.f32 %v311, %v903
  %v905 = vpop.f32.mrf.mxu0
  %906 = vmatprep.mubr.f32.mxu0 0.0
  %907 = vmatmul.mubr.f32.gmra.mxu0 %v659
  %v908 = vpop.f32.mrf.mxu0
  %v909 = vadd.f32 %v312, %v908
  %v910 = vpop.f32.mrf.mxu0
  %911 = vmatprep.mubr.f32.mxu0 0.0
  %912 = vmatmul.mubr.f32.gmra.mxu0 %v662
  %v913 = vpop.f32.mrf.mxu0
  %v914 = vadd.f32 %v313, %v913
  %v915 = vpop.f32.mrf.mxu0
  %916 = vmatprep.mubr.f32.mxu0 0.0
  %917 = vmatmul.mubr.f32.gmra.mxu0 %v665
  %v918 = vpop.f32.mrf.mxu0
  %v919 = vadd.f32 %v314, %v918
  %v920 = vpop.f32.mrf.mxu0
  %921 = vmatprep.mubr.f32.mxu0 0.0
  %922 = vmatmul.mubr.f32.gmra.mxu0 %v668
  %v923 = vpop.f32.mrf.mxu0
  %v924 = vadd.f32 %v310, %v923
  %v925 = vpop.f32.mrf.mxu0
  %926 = vmatprep.mubr.f32.mxu0 0.0
  %927 = vmatmul.mubr.f32.gmra.mxu0 %v671
  %v928 = vpop.f32.mrf.mxu0
  %v929 = vadd.f32 %v311, %v928
  %v930 = vpop.f32.mrf.mxu0
  %931 = vmatprep.mubr.f32.mxu0 0.0
  %932 = vmatmul.mubr.f32.gmra.mxu0 %v674
  %v933 = vpop.f32.mrf.mxu0
  %v934 = vadd.f32 %v312, %v933
  %v935 = vpop.f32.mrf.mxu0
  %936 = vmatprep.mubr.f32.mxu0 0.0
  %937 = vmatmul.mubr.f32.gmra.mxu0 %v677
  %v938 = vpop.f32.mrf.mxu0
  %v939 = vadd.f32 %v313, %v938
  %v940 = vpop.f32.mrf.mxu0
  %941 = vmatprep.mubr.f32.mxu0 0.0
  %942 = vmatmul.mubr.f32.gmra.mxu0 %v680
  %v943 = vpop.f32.mrf.mxu0
  %v944 = vadd.f32 %v314, %v943
  %v945 = vpop.f32.mrf.mxu0
  %946 = vmatprep.mubr.f32.mxu0 0.0
  %947 = vmatmul.mubr.f32.gmra.mxu0 %v683
  %v948 = vpop.f32.mrf.mxu0
  %v949 = vadd.f32 %v310, %v948
  %v950 = vpop.f32.mrf.mxu0
  %951 = vmatprep.mubr.f32.mxu0 0.0
  %952 = vmatmul.mubr.f32.gmra.mxu0 %v686
  %v953 = vpop.f32.mrf.mxu0
  %v954 = vadd.f32 %v311, %v953
  %v955 = vpop.f32.mrf.mxu0
  %956 = vmatprep.mubr.f32.mxu0 0.0
  %957 = vmatmul.mubr.f32.gmra.mxu0 %v689
  %v958 = vpop.f32.mrf.mxu0
  %v959 = vadd.f32 %v312, %v958
  %v960 = vpop.f32.mrf.mxu0
  %961 = vmatprep.mubr.f32.mxu0 0.0
  %962 = vmatmul.mubr.f32.gmra.mxu0 %v692
  %v963 = vpop.f32.mrf.mxu0
  %v964 = vadd.f32 %v313, %v963
  %v965 = vpop.f32.mrf.mxu0
  %966 = vmatprep.mubr.f32.mxu0 0.0
  %967 = vmatmul.mubr.f32.gmra.mxu0 %v695
  %v968 = vpop.f32.mrf.mxu0
  %v969 = vadd.f32 %v314, %v968
  %v970 = vpop.f32.mrf.mxu0
  %971 = vdwg.mxu0
  %vm972 = vcmask 326656
  %v973 = vsel %vm972, %v774, -inf
  %974 = vmax.xlane.f32.xlu0 %v973
  %v975 = vpop.xlane.xlu0 %974
  %v976 = vsel %vm972, %v779, -inf
  %977 = vmax.xlane.f32.xlu0 %v976
  %v978 = vpop.xlane.xlu0 %977
  %v979 = vsel %vm972, %v784, -inf
  %980 = vmax.xlane.f32.xlu0 %v979
  %v981 = vpop.xlane.xlu0 %980
  %v982 = vsel %vm972, %v789, -inf
  %983 = vmax.xlane.f32.xlu0 %v982
  %v984 = vpop.xlane.xlu0 %983
  %v985 = vsel %vm972, %v794, -inf
  %986 = vmax.xlane.f32.xlu0 %v985
  %v987 = vpop.xlane.xlu0 %986
  %v988 = vsel %vm972, %v799, -inf
  %989 = vmax.xlane.f32.xlu0 %v988
  %v990 = vpop.xlane.xlu0 %989
  %v991 = vsel %vm972, %v804, -inf
  %992 = vmax.xlane.f32.xlu0 %v991
  %v993 = vpop.xlane.xlu0 %992
  %v994 = vsel %vm972, %v809, -inf
  %995 = vmax.xlane.f32.xlu0 %v994
  %v996 = vpop.xlane.xlu0 %995
  %v997 = vsel %vm972, %v814, -inf
  %998 = vmax.xlane.f32.xlu0 %v997
  %v999 = vpop.xlane.xlu0 %998
  %v1000 = vsel %vm972, %v819, -inf
  %1001 = vmax.xlane.f32.xlu0 %v1000
  %v1002 = vpop.xlane.xlu0 %1001
  %v1003 = vsel %vm972, %v824, -inf
  %1004 = vmax.xlane.f32.xlu0 %v1003
  %v1005 = vpop.xlane.xlu0 %1004
  %v1006 = vsel %vm972, %v829, -inf
  %1007 = vmax.xlane.f32.xlu0 %v1006
  %v1008 = vpop.xlane.xlu0 %1007
  %v1009 = vsel %vm972, %v834, -inf
  %1010 = vmax.xlane.f32.xlu0 %v1009
  %v1011 = vpop.xlane.xlu0 %1010
  %v1012 = vsel %vm972, %v839, -inf
  %1013 = vmax.xlane.f32.xlu0 %v1012
  %v1014 = vpop.xlane.xlu0 %1013
  %v1015 = vsel %vm972, %v844, -inf
  %1016 = vmax.xlane.f32.xlu0 %v1015
  %v1017 = vpop.xlane.xlu0 %1016
  %v1018 = vsel %vm972, %v849, -inf
  %1019 = vmax.xlane.f32.xlu0 %v1018
  %v1020 = vpop.xlane.xlu0 %1019
  %v1021 = vsel %vm972, %v854, -inf
  %1022 = vmax.xlane.f32.xlu0 %v1021
  %v1023 = vpop.xlane.xlu0 %1022
  %v1024 = vsel %vm972, %v859, -inf
  %1025 = vmax.xlane.f32.xlu0 %v1024
  %v1026 = vpop.xlane.xlu0 %1025
  %v1027 = vsel %vm972, %v864, -inf
  %1028 = vmax.xlane.f32.xlu0 %v1027
  %v1029 = vpop.xlane.xlu0 %1028
  %v1030 = vsel %vm972, %v869, -inf
  %1031 = vmax.xlane.f32.xlu0 %v1030
  %v1032 = vpop.xlane.xlu0 %1031
  %v1033 = vsel %vm972, %v874, -inf
  %1034 = vmax.xlane.f32.xlu0 %v1033
  %v1035 = vpop.xlane.xlu0 %1034
  %v1036 = vsel %vm972, %v879, -inf
  %1037 = vmax.xlane.f32.xlu0 %v1036
  %v1038 = vpop.xlane.xlu0 %1037
  %v1039 = vsel %vm972, %v884, -inf
  %1040 = vmax.xlane.f32.xlu0 %v1039
  %v1041 = vpop.xlane.xlu0 %1040
  %v1042 = vsel %vm972, %v889, -inf
  %1043 = vmax.xlane.f32.xlu0 %v1042
  %v1044 = vpop.xlane.xlu0 %1043
  %v1045 = vsel %vm972, %v894, -inf
  %1046 = vmax.xlane.f32.xlu0 %v1045
  %v1047 = vpop.xlane.xlu0 %1046
  %v1048 = vsel %vm972, %v899, -inf
  %1049 = vmax.xlane.f32.xlu0 %v1048
  %v1050 = vpop.xlane.xlu0 %1049
  %v1051 = vsel %vm972, %v904, -inf
  %1052 = vmax.xlane.f32.xlu0 %v1051
  %v1053 = vpop.xlane.xlu0 %1052
  %v1054 = vsel %vm972, %v909, -inf
  %1055 = vmax.xlane.f32.xlu0 %v1054
  %v1056 = vpop.xlane.xlu0 %1055
  %v1057 = vsel %vm972, %v914, -inf
  %1058 = vmax.xlane.f32.xlu0 %v1057
  %v1059 = vpop.xlane.xlu0 %1058
  %v1060 = vsel %vm972, %v919, -inf
  %1061 = vmax.xlane.f32.xlu0 %v1060
  %v1062 = vpop.xlane.xlu0 %1061
  %v1063 = vsel %vm972, %v924, -inf
  %1064 = vmax.xlane.f32.xlu0 %v1063
  %v1065 = vpop.xlane.xlu0 %1064
  %v1066 = vsel %vm972, %v929, -inf
  %1067 = vmax.xlane.f32.xlu0 %v1066
  %v1068 = vpop.xlane.xlu0 %1067
  %v1069 = vsel %vm972, %v934, -inf
  %1070 = vmax.xlane.f32.xlu0 %v1069
  %v1071 = vpop.xlane.xlu0 %1070
  %v1072 = vsel %vm972, %v939, -inf
  %1073 = vmax.xlane.f32.xlu0 %v1072
  %v1074 = vpop.xlane.xlu0 %1073
  %v1075 = vsel %vm972, %v944, -inf
  %1076 = vmax.xlane.f32.xlu0 %v1075
  %v1077 = vpop.xlane.xlu0 %1076
  %v1078 = vsel %vm972, %v949, -inf
  %1079 = vmax.xlane.f32.xlu0 %v1078
  %v1080 = vpop.xlane.xlu0 %1079
  %v1081 = vsel %vm972, %v954, -inf
  %1082 = vmax.xlane.f32.xlu0 %v1081
  %v1083 = vpop.xlane.xlu0 %1082
  %v1084 = vsel %vm972, %v959, -inf
  %1085 = vmax.xlane.f32.xlu0 %v1084
  %v1086 = vpop.xlane.xlu0 %1085
  %v1087 = vsel %vm972, %v964, -inf
  %1088 = vmax.xlane.f32.xlu0 %v1087
  %v1089 = vpop.xlane.xlu0 %1088
  %v1090 = vsel %vm972, %v969, -inf
  %1091 = vmax.xlane.f32.xlu0 %v1090
  %v1092 = vpop.xlane.xlu0 %1091
  %v1093 = vsub.f32 %v774, %v975
  %v1094 = vsub.f32 %v779, %v978
  %v1095 = vsub.f32 %v784, %v981
  %v1096 = vsub.f32 %v789, %v984
  %v1097 = vsub.f32 %v794, %v987
  %v1098 = vsub.f32 %v799, %v990
  %v1099 = vsub.f32 %v804, %v993
  %v1100 = vsub.f32 %v809, %v996
  %v1101 = vsub.f32 %v814, %v999
  %v1102 = vsub.f32 %v819, %v1002
  %v1103 = vsub.f32 %v824, %v1005
  %v1104 = vsub.f32 %v829, %v1008
  %v1105 = vsub.f32 %v834, %v1011
  %v1106 = vsub.f32 %v839, %v1014
  %v1107 = vsub.f32 %v844, %v1017
  %v1108 = vsub.f32 %v849, %v1020
  %v1109 = vsub.f32 %v854, %v1023
  %v1110 = vsub.f32 %v859, %v1026
  %v1111 = vsub.f32 %v864, %v1029
  %v1112 = vsub.f32 %v869, %v1032
  %v1113 = vsub.f32 %v874, %v1035
  %v1114 = vsub.f32 %v879, %v1038
  %v1115 = vsub.f32 %v884, %v1041
  %v1116 = vsub.f32 %v889, %v1044
  %v1117 = vsub.f32 %v894, %v1047
  %v1118 = vsub.f32 %v899, %v1050
  %v1119 = vsub.f32 %v904, %v1053
  %v1120 = vsub.f32 %v909, %v1056
  %v1121 = vsub.f32 %v914, %v1059
  %v1122 = vsub.f32 %v919, %v1062
  %v1123 = vsub.f32 %v924, %v1065
  %v1124 = vsub.f32 %v929, %v1068
  %v1125 = vsub.f32 %v934, %v1071
  %v1126 = vsub.f32 %v939, %v1074
  %v1127 = vsub.f32 %v944, %v1077
  %v1128 = vsub.f32 %v949, %v1080
  %v1129 = vsub.f32 %v954, %v1083
  %v1130 = vsub.f32 %v959, %v1086
  %v1131 = vsub.f32 %v964, %v1089
  %v1132 = vsub.f32 %v969, %v1092
  %v1133 = vmul.f32 %v1093, 1.442695
  %v1134 = vpow.pop %v1133
  %v1135 = vmul.f32 %v1094, 1.442695
  %v1136 = vpow.pop %v1135
  %v1137 = vmul.f32 %v1095, 1.442695
  %v1138 = vpow.pop %v1137
  %v1139 = vmul.f32 %v1096, 1.442695
  %v1140 = vpow.pop %v1139
  %v1141 = vmul.f32 %v1097, 1.442695
  %v1142 = vpow.pop %v1141
  %v1143 = vmul.f32 %v1098, 1.442695
  %v1144 = vpow.pop %v1143
  %v1145 = vmul.f32 %v1099, 1.442695
  %v1146 = vpow.pop %v1145
  %v1147 = vmul.f32 %v1100, 1.442695
  %v1148 = vpow.pop %v1147
  %v1149 = vmul.f32 %v1101, 1.442695
  %v1150 = vpow.pop %v1149
  %v1151 = vmul.f32 %v1102, 1.442695
  %v1152 = vpow.pop %v1151
  %v1153 = vmul.f32 %v1103, 1.442695
  %v1154 = vpow.pop %v1153
  %v1155 = vmul.f32 %v1104, 1.442695
  %v1156 = vpow.pop %v1155
  %v1157 = vmul.f32 %v1105, 1.442695
  %v1158 = vpow.pop %v1157
  %v1159 = vmul.f32 %v1106, 1.442695
  %v1160 = vpow.pop %v1159
  %v1161 = vmul.f32 %v1107, 1.442695
  %v1162 = vpow.pop %v1161
  %v1163 = vmul.f32 %v1108, 1.442695
  %v1164 = vpow.pop %v1163
  %v1165 = vmul.f32 %v1109, 1.442695
  %v1166 = vpow.pop %v1165
  %v1167 = vmul.f32 %v1110, 1.442695
  %v1168 = vpow.pop %v1167
  %v1169 = vmul.f32 %v1111, 1.442695
  %v1170 = vpow.pop %v1169
  %v1171 = vmul.f32 %v1112, 1.442695
  %v1172 = vpow.pop %v1171
  %v1173 = vmul.f32 %v1113, 1.442695
  %v1174 = vpow.pop %v1173
  %v1175 = vmul.f32 %v1114, 1.442695
  %v1176 = vpow.pop %v1175
  %v1177 = vmul.f32 %v1115, 1.442695
  %v1178 = vpow.pop %v1177
  %v1179 = vmul.f32 %v1116, 1.442695
  %v1180 = vpow.pop %v1179
  %v1181 = vmul.f32 %v1117, 1.442695
  %v1182 = vpow.pop %v1181
  %v1183 = vmul.f32 %v1118, 1.442695
  %v1184 = vpow.pop %v1183
  %v1185 = vmul.f32 %v1119, 1.442695
  %v1186 = vpow.pop %v1185
  %v1187 = vmul.f32 %v1120, 1.442695
  %v1188 = vpow.pop %v1187
  %v1189 = vmul.f32 %v1121, 1.442695
  %v1190 = vpow.pop %v1189
  %v1191 = vmul.f32 %v1122, 1.442695
  %v1192 = vpow.pop %v1191
  %v1193 = vmul.f32 %v1123, 1.442695
  %v1194 = vpow.pop %v1193
  %v1195 = vmul.f32 %v1124, 1.442695
  %v1196 = vpow.pop %v1195
  %v1197 = vmul.f32 %v1125, 1.442695
  %v1198 = vpow.pop %v1197
  %v1199 = vmul.f32 %v1126, 1.442695
  %v1200 = vpow.pop %v1199
  %v1201 = vmul.f32 %v1127, 1.442695
  %v1202 = vpow.pop %v1201
  %v1203 = vmul.f32 %v1128, 1.442695
  %v1204 = vpow.pop %v1203
  %v1205 = vmul.f32 %v1129, 1.442695
  %v1206 = vpow.pop %v1205
  %v1207 = vmul.f32 %v1130, 1.442695
  %v1208 = vpow.pop %v1207
  %v1209 = vmul.f32 %v1131, 1.442695
  %v1210 = vpow.pop %v1209
  %v1211 = vmul.f32 %v1132, 1.442695
  %v1212 = vpow.pop %v1211
  %v1213 = vsel %vm972, %v1134, 0.0
  %1214 = vadd.xlane.f32.xlu0 %v1213
  %v1215 = vpop.xlane.xlu0 %1214
  %v1216 = vsel %vm972, %v1136, 0.0
  %1217 = vadd.xlane.f32.xlu0 %v1216
  %v1218 = vpop.xlane.xlu0 %1217
  %v1219 = vsel %vm972, %v1138, 0.0
  %1220 = vadd.xlane.f32.xlu0 %v1219
  %v1221 = vpop.xlane.xlu0 %1220
  %v1222 = vsel %vm972, %v1140, 0.0
  %1223 = vadd.xlane.f32.xlu0 %v1222
  %v1224 = vpop.xlane.xlu0 %1223
  %v1225 = vsel %vm972, %v1142, 0.0
  %1226 = vadd.xlane.f32.xlu0 %v1225
  %v1227 = vpop.xlane.xlu0 %1226
  %v1228 = vsel %vm972, %v1144, 0.0
  %1229 = vadd.xlane.f32.xlu0 %v1228
  %v1230 = vpop.xlane.xlu0 %1229
  %v1231 = vsel %vm972, %v1146, 0.0
  %1232 = vadd.xlane.f32.xlu0 %v1231
  %v1233 = vpop.xlane.xlu0 %1232
  %v1234 = vsel %vm972, %v1148, 0.0
  %1235 = vadd.xlane.f32.xlu0 %v1234
  %v1236 = vpop.xlane.xlu0 %1235
  %v1237 = vsel %vm972, %v1150, 0.0
  %1238 = vadd.xlane.f32.xlu0 %v1237
  %v1239 = vpop.xlane.xlu0 %1238
  %v1240 = vsel %vm972, %v1152, 0.0
  %1241 = vadd.xlane.f32.xlu0 %v1240
  %v1242 = vpop.xlane.xlu0 %1241
  %v1243 = vsel %vm972, %v1154, 0.0
  %1244 = vadd.xlane.f32.xlu0 %v1243
  %v1245 = vpop.xlane.xlu0 %1244
  %v1246 = vsel %vm972, %v1156, 0.0
  %1247 = vadd.xlane.f32.xlu0 %v1246
  %v1248 = vpop.xlane.xlu0 %1247
  %v1249 = vsel %vm972, %v1158, 0.0
  %1250 = vadd.xlane.f32.xlu0 %v1249
  %v1251 = vpop.xlane.xlu0 %1250
  %v1252 = vsel %vm972, %v1160, 0.0
  %1253 = vadd.xlane.f32.xlu0 %v1252
  %v1254 = vpop.xlane.xlu0 %1253
  %v1255 = vsel %vm972, %v1162, 0.0
  %1256 = vadd.xlane.f32.xlu0 %v1255
  %v1257 = vpop.xlane.xlu0 %1256
  %v1258 = vsel %vm972, %v1164, 0.0
  %1259 = vadd.xlane.f32.xlu0 %v1258
  %v1260 = vpop.xlane.xlu0 %1259
  %v1261 = vsel %vm972, %v1166, 0.0
  %1262 = vadd.xlane.f32.xlu0 %v1261
  %v1263 = vpop.xlane.xlu0 %1262
  %v1264 = vsel %vm972, %v1168, 0.0
  %1265 = vadd.xlane.f32.xlu0 %v1264
  %v1266 = vpop.xlane.xlu0 %1265
  %v1267 = vsel %vm972, %v1170, 0.0
  %1268 = vadd.xlane.f32.xlu0 %v1267
  %v1269 = vpop.xlane.xlu0 %1268
  %v1270 = vsel %vm972, %v1172, 0.0
  %1271 = vadd.xlane.f32.xlu0 %v1270
  %v1272 = vpop.xlane.xlu0 %1271
  %v1273 = vsel %vm972, %v1174, 0.0
  %1274 = vadd.xlane.f32.xlu0 %v1273
  %v1275 = vpop.xlane.xlu0 %1274
  %v1276 = vsel %vm972, %v1176, 0.0
  %1277 = vadd.xlane.f32.xlu0 %v1276
  %v1278 = vpop.xlane.xlu0 %1277
  %v1279 = vsel %vm972, %v1178, 0.0
  %1280 = vadd.xlane.f32.xlu0 %v1279
  %v1281 = vpop.xlane.xlu0 %1280
  %v1282 = vsel %vm972, %v1180, 0.0
  %1283 = vadd.xlane.f32.xlu0 %v1282
  %v1284 = vpop.xlane.xlu0 %1283
  %v1285 = vsel %vm972, %v1182, 0.0
  %1286 = vadd.xlane.f32.xlu0 %v1285
  %v1287 = vpop.xlane.xlu0 %1286
  %v1288 = vsel %vm972, %v1184, 0.0
  %1289 = vadd.xlane.f32.xlu0 %v1288
  %v1290 = vpop.xlane.xlu0 %1289
  %v1291 = vsel %vm972, %v1186, 0.0
  %1292 = vadd.xlane.f32.xlu0 %v1291
  %v1293 = vpop.xlane.xlu0 %1292
  %v1294 = vsel %vm972, %v1188, 0.0
  %1295 = vadd.xlane.f32.xlu0 %v1294
  %v1296 = vpop.xlane.xlu0 %1295
  %v1297 = vsel %vm972, %v1190, 0.0
  %1298 = vadd.xlane.f32.xlu0 %v1297
  %v1299 = vpop.xlane.xlu0 %1298
  %v1300 = vsel %vm972, %v1192, 0.0
  %1301 = vadd.xlane.f32.xlu0 %v1300
  %v1302 = vpop.xlane.xlu0 %1301
  %v1303 = vsel %vm972, %v1194, 0.0
  %1304 = vadd.xlane.f32.xlu0 %v1303
  %v1305 = vpop.xlane.xlu0 %1304
  %v1306 = vsel %vm972, %v1196, 0.0
  %1307 = vadd.xlane.f32.xlu0 %v1306
  %v1308 = vpop.xlane.xlu0 %1307
  %v1309 = vsel %vm972, %v1198, 0.0
  %1310 = vadd.xlane.f32.xlu0 %v1309
  %v1311 = vpop.xlane.xlu0 %1310
  %v1312 = vsel %vm972, %v1200, 0.0
  %1313 = vadd.xlane.f32.xlu0 %v1312
  %v1314 = vpop.xlane.xlu0 %1313
  %v1315 = vsel %vm972, %v1202, 0.0
  %1316 = vadd.xlane.f32.xlu0 %v1315
  %v1317 = vpop.xlane.xlu0 %1316
  %v1318 = vsel %vm972, %v1204, 0.0
  %1319 = vadd.xlane.f32.xlu0 %v1318
  %v1320 = vpop.xlane.xlu0 %1319
  %v1321 = vsel %vm972, %v1206, 0.0
  %1322 = vadd.xlane.f32.xlu0 %v1321
  %v1323 = vpop.xlane.xlu0 %1322
  %v1324 = vsel %vm972, %v1208, 0.0
  %1325 = vadd.xlane.f32.xlu0 %v1324
  %v1326 = vpop.xlane.xlu0 %1325
  %v1327 = vsel %vm972, %v1210, 0.0
  %1328 = vadd.xlane.f32.xlu0 %v1327
  %v1329 = vpop.xlane.xlu0 %1328
  %v1330 = vsel %vm972, %v1212, 0.0
  %1331 = vadd.xlane.f32.xlu0 %v1330
  %v1332 = vpop.xlane.xlu0 %1331
  %v1333 = vrcp.pop %v1215
  %v1334 = vrcp.pop %v1218
  %v1335 = vrcp.pop %v1221
  %v1336 = vrcp.pop %v1224
  %v1337 = vrcp.pop %v1227
  %v1338 = vrcp.pop %v1230
  %v1339 = vrcp.pop %v1233
  %v1340 = vrcp.pop %v1236
  %v1341 = vrcp.pop %v1239
  %v1342 = vrcp.pop %v1242
  %v1343 = vrcp.pop %v1245
  %v1344 = vrcp.pop %v1248
  %v1345 = vrcp.pop %v1251
  %v1346 = vrcp.pop %v1254
  %v1347 = vrcp.pop %v1257
  %v1348 = vrcp.pop %v1260
  %v1349 = vrcp.pop %v1263
  %v1350 = vrcp.pop %v1266
  %v1351 = vrcp.pop %v1269
  %v1352 = vrcp.pop %v1272
  %v1353 = vrcp.pop %v1275
  %v1354 = vrcp.pop %v1278
  %v1355 = vrcp.pop %v1281
  %v1356 = vrcp.pop %v1284
  %v1357 = vrcp.pop %v1287
  %v1358 = vrcp.pop %v1290
  %v1359 = vrcp.pop %v1293
  %v1360 = vrcp.pop %v1296
  %v1361 = vrcp.pop %v1299
  %v1362 = vrcp.pop %v1302
  %v1363 = vrcp.pop %v1305
  %v1364 = vrcp.pop %v1308
  %v1365 = vrcp.pop %v1311
  %v1366 = vrcp.pop %v1314
  %v1367 = vrcp.pop %v1317
  %v1368 = vrcp.pop %v1320
  %v1369 = vrcp.pop %v1323
  %v1370 = vrcp.pop %v1326
  %v1371 = vrcp.pop %v1329
  %v1372 = vrcp.pop %v1332
  %v1373 = vmul.f32 %v1333, 0.17677669
  %v1374 = vmul.f32 %v1334, 0.17677669
  %v1375 = vmul.f32 %v1335, 0.17677669
  %v1376 = vmul.f32 %v1336, 0.17677669
  %v1377 = vmul.f32 %v1337, 0.17677669
  %v1378 = vmul.f32 %v1338, 0.17677669
  %v1379 = vmul.f32 %v1339, 0.17677669
  %v1380 = vmul.f32 %v1340, 0.17677669
  %v1381 = vmul.f32 %v1341, 0.17677669
  %v1382 = vmul.f32 %v1342, 0.17677669
  %v1383 = vmul.f32 %v1343, 0.17677669
  %v1384 = vmul.f32 %v1344, 0.17677669
  %v1385 = vmul.f32 %v1345, 0.17677669
  %v1386 = vmul.f32 %v1346, 0.17677669
  %v1387 = vmul.f32 %v1347, 0.17677669
  %v1388 = vmul.f32 %v1348, 0.17677669
  %v1389 = vmul.f32 %v1349, 0.17677669
  %v1390 = vmul.f32 %v1350, 0.17677669
  %v1391 = vmul.f32 %v1351, 0.17677669
  %v1392 = vmul.f32 %v1352, 0.17677669
  %v1393 = vmul.f32 %v1353, 0.17677669
  %v1394 = vmul.f32 %v1354, 0.17677669
  %v1395 = vmul.f32 %v1355, 0.17677669
  %v1396 = vmul.f32 %v1356, 0.17677669
  %v1397 = vmul.f32 %v1357, 0.17677669
  %v1398 = vmul.f32 %v1358, 0.17677669
  %v1399 = vmul.f32 %v1359, 0.17677669
  %v1400 = vmul.f32 %v1360, 0.17677669
  %v1401 = vmul.f32 %v1361, 0.17677669
  %v1402 = vmul.f32 %v1362, 0.17677669
  %v1403 = vmul.f32 %v1363, 0.17677669
  %v1404 = vmul.f32 %v1364, 0.17677669
  %v1405 = vmul.f32 %v1365, 0.17677669
  %v1406 = vmul.f32 %v1366, 0.17677669
  %v1407 = vmul.f32 %v1367, 0.17677669
  %v1408 = vmul.f32 %v1368, 0.17677669
  %v1409 = vmul.f32 %v1369, 0.17677669
  %v1410 = vmul.f32 %v1370, 0.17677669
  %v1411 = vmul.f32 %v1371, 0.17677669
  %v1412 = vmul.f32 %v1372, 0.17677669
  %v1413 = vmul.f32 %v1134, %v1373
  %v1414 = vmul.f32 %v1136, %v1374
  %v1415 = vmul.f32 %v1138, %v1375
  %v1416 = vmul.f32 %v1140, %v1376
  %v1417 = vmul.f32 %v1142, %v1377
  %v1418 = vmul.f32 %v1144, %v1378
  %v1419 = vmul.f32 %v1146, %v1379
  %v1420 = vmul.f32 %v1148, %v1380
  %v1421 = vmul.f32 %v1150, %v1381
  %v1422 = vmul.f32 %v1152, %v1382
  %v1423 = vmul.f32 %v1154, %v1383
  %v1424 = vmul.f32 %v1156, %v1384
  %v1425 = vmul.f32 %v1158, %v1385
  %v1426 = vmul.f32 %v1160, %v1386
  %v1427 = vmul.f32 %v1162, %v1387
  %v1428 = vmul.f32 %v1164, %v1388
  %v1429 = vmul.f32 %v1166, %v1389
  %v1430 = vmul.f32 %v1168, %v1390
  %v1431 = vmul.f32 %v1170, %v1391
  %v1432 = vmul.f32 %v1172, %v1392
  %v1433 = vmul.f32 %v1174, %v1393
  %v1434 = vmul.f32 %v1176, %v1394
  %v1435 = vmul.f32 %v1178, %v1395
  %v1436 = vmul.f32 %v1180, %v1396
  %v1437 = vmul.f32 %v1182, %v1397
  %v1438 = vmul.f32 %v1184, %v1398
  %v1439 = vmul.f32 %v1186, %v1399
  %v1440 = vmul.f32 %v1188, %v1400
  %v1441 = vmul.f32 %v1190, %v1401
  %v1442 = vmul.f32 %v1192, %v1402
  %v1443 = vmul.f32 %v1194, %v1403
  %v1444 = vmul.f32 %v1196, %v1404
  %v1445 = vmul.f32 %v1198, %v1405
  %v1446 = vmul.f32 %v1200, %v1406
  %v1447 = vmul.f32 %v1202, %v1407
  %v1448 = vmul.f32 %v1204, %v1408
  %v1449 = vmul.f32 %v1206, %v1409
  %v1450 = vmul.f32 %v1208, %v1410
  %v1451 = vmul.f32 %v1210, %v1411
  %v1452 = vmul.f32 %v1212, %v1412
  %1453 = vrot.lane.b32.xlu0 %v499, 64
  %v1454 = vpop.permute.xlu0 %1453
  %1455 = vrot.lane.b32.xlu0 %v504, 64
  %v1456 = vpop.permute.xlu0 %1455
  %1457 = vrot.lane.b32.xlu0 %v509, 64
  %v1458 = vpop.permute.xlu0 %1457
  %1459 = vrot.lane.b32.xlu0 %v514, 64
  %v1460 = vpop.permute.xlu0 %1459
  %1461 = vrot.lane.b32.xlu0 %v519, 64
  %v1462 = vpop.permute.xlu0 %1461
  %v1469 = vsel %vm972, %v1413, 0
  %v1472 = vsel %vm972, %v1414, 0
  %v1475 = vsel %vm972, %v1415, 0
  %v1478 = vsel %vm972, %v1416, 0
  %v1481 = vsel %vm972, %v1417, 0
  %v1484 = vsel %vm972, %v1418, 0
  %v1487 = vsel %vm972, %v1419, 0
  %v1490 = vsel %vm972, %v1420, 0
  %v1493 = vsel %vm972, %v1421, 0
  %v1496 = vsel %vm972, %v1422, 0
  %v1499 = vsel %vm972, %v1423, 0
  %v1502 = vsel %vm972, %v1424, 0
  %v1505 = vsel %vm972, %v1425, 0
  %v1508 = vsel %vm972, %v1426, 0
  %v1511 = vsel %vm972, %v1427, 0
  %v1514 = vsel %vm972, %v1428, 0
  %v1517 = vsel %vm972, %v1429, 0
  %v1520 = vsel %vm972, %v1430, 0
  %v1523 = vsel %vm972, %v1431, 0
  %v1526 = vsel %vm972, %v1432, 0
  %v1529 = vsel %vm972, %v1433, 0
  %v1532 = vsel %vm972, %v1434, 0
  %v1535 = vsel %vm972, %v1435, 0
  %v1538 = vsel %vm972, %v1436, 0
  %v1541 = vsel %vm972, %v1437, 0
  %v1544 = vsel %vm972, %v1438, 0
  %v1547 = vsel %vm972, %v1439, 0
  %v1550 = vsel %vm972, %v1440, 0
  %v1553 = vsel %vm972, %v1441, 0
  %v1556 = vsel %vm972, %v1442, 0
  %v1559 = vsel %vm972, %v1443, 0
  %v1562 = vsel %vm972, %v1444, 0
  %v1565 = vsel %vm972, %v1445, 0
  %v1568 = vsel %vm972, %v1446, 0
  %v1571 = vsel %vm972, %v1447, 0
  %v1574 = vsel %vm972, %v1448, 0
  %v1577 = vsel %vm972, %v1449, 0
  %v1580 = vsel %vm972, %v1450, 0
  %v1583 = vsel %vm972, %v1451, 0
  %v1586 = vsel %vm972, %v1452, 0
  %1588 = vmatprep.subr.mxu0 0.0
  %1589 = vmatpush1.msra.mxu0 0.0
  %1590 = vmatprep.subr.mxu0 0.0
  %1591 = vmatpush1.msra.mxu0 0.0
  %1592 = vmatprep.subr.mxu0 0.0
  %1593 = vmatpush1.msra.mxu0 0.0
  %1594 = vmatprep.subr.mxu0 0.0
  %1595 = vmatpush1.msra.mxu0 0.0
  %1596 = vmatprep.subr.mxu0 0.0
  %1597 = vmatpush1.msra.mxu0 0.0
  %1598 = vmatprep.subr.mxu0 0.0
  %1599 = vmatpush1.msra.mxu0 0.0
  %1600 = vmatprep.subr.mxu0 0.0
  %1601 = vmatpush1.msra.mxu0 0.0
  %1602 = vmatprep.subr.mxu0 0.0
  %1603 = vmatpush1.msra.mxu0 0.0
  %1604 = vmatprep.subr.mxu0 0.0
  %1605 = vmatpush1.msra.mxu0 0.0
  %1606 = vmatprep.subr.mxu0 0.0
  %1607 = vmatpush1.msra.mxu0 0.0
  %1608 = vmatprep.subr.mxu0 0.0
  %1609 = vmatpush1.msra.mxu0 0.0
  %1610 = vmatprep.subr.mxu0 0.0
  %1611 = vmatpush1.msra.mxu0 %v1462
  %1612 = vmatprep.subr.mxu0 0.0
  %1613 = vmatpush1.msra.mxu0 %v1460
  %1614 = vmatprep.subr.mxu0 0.0
  %1615 = vmatpush1.msra.mxu0 %v1458
  %1616 = vmatprep.subr.mxu0 0.0
  %1617 = vmatpush1.msra.mxu0 %v1456
  %1618 = vmatprep.subr.mxu0 0.0
  %1619 = vmatpush1.msra.mxu0 %v1454
  %1620 = vmatprep.subr.mxu0 0.0
  %1621 = vmatpush2.msra.mxu0 0.0
  %1622 = vmatprep.subr.mxu0 0.0
  %1623 = vmatpush2.msra.mxu0 0.0
  %1624 = vmatprep.subr.mxu0 0.0
  %1625 = vmatpush2.msra.mxu0 0.0
  %1626 = vmatprep.subr.mxu0 0.0
  %1627 = vmatpush2.msra.mxu0 0.0
  %1628 = vmatprep.subr.mxu0 0.0
  %1629 = vmatpush2.msra.mxu0 0.0
  %1630 = vmatprep.subr.mxu0 0.0
  %1631 = vmatpush2.msra.mxu0 0.0
  %1632 = vmatprep.subr.mxu0 0.0
  %1633 = vmatpush2.msra.mxu0 0.0
  %1634 = vmatprep.subr.mxu0 0.0
  %1635 = vmatpush2.msra.mxu0 0.0
  %1636 = vmatprep.subr.mxu0 0.0
  %1637 = vmatpush2.msra.mxu0 0.0
  %1638 = vmatprep.subr.mxu0 0.0
  %1639 = vmatpush2.msra.mxu0 0.0
  %1640 = vmatprep.subr.mxu0 0.0
  %1641 = vmatpush2.msra.mxu0 0.0
  %1642 = vmatprep.subr.mxu0 0.0
  %1643 = vmatpush2.msra.mxu0 0.0
  %1644 = vmatprep.subr.mxu0 0.0
  %1645 = vmatpush2.msra.mxu0 0.0
  %1646 = vmatprep.subr.mxu0 0.0
  %1647 = vmatpush2.msra.mxu0 0.0
  %1648 = vmatprep.subr.mxu0 0.0
  %1649 = vmatpush2.msra.mxu0 0.0
  %1650 = vmatprep.subr.mxu0 0.0
  %1651 = vmatpush2.msra.mxu0 0.0
  %1652 = vmatprep.mubr.f32.mxu0 0.0
  %1653 = vmatmul.mubr.f32.gmra.mxu0 %v1469
  %v1654 = vpop.f32.mrf.mxu0
  %v1655 = vadd.f32 0.0, %v1654
  %v1656 = vpop.f32.mrf.mxu0
  %1657 = vmatprep.mubr.f32.mxu0 0.0
  %1658 = vmatmul.mubr.f32.gmra.mxu0 %v1472
  %v1659 = vpop.f32.mrf.mxu0
  %v1660 = vadd.f32 0.0, %v1659
  %v1661 = vpop.f32.mrf.mxu0
  %1662 = vmatprep.mubr.f32.mxu0 0.0
  %1663 = vmatmul.mubr.f32.gmra.mxu0 %v1475
  %v1664 = vpop.f32.mrf.mxu0
  %v1665 = vadd.f32 0.0, %v1664
  %v1666 = vpop.f32.mrf.mxu0
  %1667 = vmatprep.mubr.f32.mxu0 0.0
  %1668 = vmatmul.mubr.f32.gmra.mxu0 %v1478
  %v1669 = vpop.f32.mrf.mxu0
  %v1670 = vadd.f32 0.0, %v1669
  %v1671 = vpop.f32.mrf.mxu0
  %1672 = vmatprep.mubr.f32.mxu0 0.0
  %1673 = vmatmul.mubr.f32.gmra.mxu0 %v1481
  %v1674 = vpop.f32.mrf.mxu0
  %v1675 = vadd.f32 0.0, %v1674
  %v1676 = vpop.f32.mrf.mxu0
  %1677 = vmatprep.mubr.f32.mxu0 0.0
  %1678 = vmatmul.mubr.f32.gmra.mxu0 %v1484
  %v1679 = vpop.f32.mrf.mxu0
  %v1680 = vadd.f32 0.0, %v1679
  %v1681 = vpop.f32.mrf.mxu0
  %1682 = vmatprep.mubr.f32.mxu0 0.0
  %1683 = vmatmul.mubr.f32.gmra.mxu0 %v1487
  %v1684 = vpop.f32.mrf.mxu0
  %v1685 = vadd.f32 0.0, %v1684
  %v1686 = vpop.f32.mrf.mxu0
  %1687 = vmatprep.mubr.f32.mxu0 0.0
  %1688 = vmatmul.mubr.f32.gmra.mxu0 %v1490
  %v1689 = vpop.f32.mrf.mxu0
  %v1690 = vadd.f32 0.0, %v1689
  %v1691 = vpop.f32.mrf.mxu0
  %1692 = vmatprep.mubr.f32.mxu0 0.0
  %1693 = vmatmul.mubr.f32.gmra.mxu0 %v1493
  %v1694 = vpop.f32.mrf.mxu0
  %v1695 = vadd.f32 0.0, %v1694
  %v1696 = vpop.f32.mrf.mxu0
  %1697 = vmatprep.mubr.f32.mxu0 0.0
  %1698 = vmatmul.mubr.f32.gmra.mxu0 %v1496
  %v1699 = vpop.f32.mrf.mxu0
  %v1700 = vadd.f32 0.0, %v1699
  %v1701 = vpop.f32.mrf.mxu0
  %1702 = vmatprep.mubr.f32.mxu0 0.0
  %1703 = vmatmul.mubr.f32.gmra.mxu0 %v1499
  %v1704 = vpop.f32.mrf.mxu0
  %v1705 = vadd.f32 0.0, %v1704
  %v1706 = vpop.f32.mrf.mxu0
  %1707 = vmatprep.mubr.f32.mxu0 0.0
  %1708 = vmatmul.mubr.f32.gmra.mxu0 %v1502
  %v1709 = vpop.f32.mrf.mxu0
  %v1710 = vadd.f32 0.0, %v1709
  %v1711 = vpop.f32.mrf.mxu0
  %1712 = vmatprep.mubr.f32.mxu0 0.0
  %1713 = vmatmul.mubr.f32.gmra.mxu0 %v1505
  %v1714 = vpop.f32.mrf.mxu0
  %v1715 = vadd.f32 0.0, %v1714
  %v1716 = vpop.f32.mrf.mxu0
  %1717 = vmatprep.mubr.f32.mxu0 0.0
  %1718 = vmatmul.mubr.f32.gmra.mxu0 %v1508
  %v1719 = vpop.f32.mrf.mxu0
  %v1720 = vadd.f32 0.0, %v1719
  %v1721 = vpop.f32.mrf.mxu0
  %1722 = vmatprep.mubr.f32.mxu0 0.0
  %1723 = vmatmul.mubr.f32.gmra.mxu0 %v1511
  %v1724 = vpop.f32.mrf.mxu0
  %v1725 = vadd.f32 0.0, %v1724
  %v1726 = vpop.f32.mrf.mxu0
  %1727 = vmatprep.mubr.f32.mxu0 0.0
  %1728 = vmatmul.mubr.f32.gmra.mxu0 %v1514
  %v1729 = vpop.f32.mrf.mxu0
  %v1730 = vadd.f32 0.0, %v1729
  %v1731 = vpop.f32.mrf.mxu0
  %1732 = vmatprep.mubr.f32.mxu0 0.0
  %1733 = vmatmul.mubr.f32.gmra.mxu0 %v1517
  %v1734 = vpop.f32.mrf.mxu0
  %v1735 = vadd.f32 0.0, %v1734
  %v1736 = vpop.f32.mrf.mxu0
  %1737 = vmatprep.mubr.f32.mxu0 0.0
  %1738 = vmatmul.mubr.f32.gmra.mxu0 %v1520
  %v1739 = vpop.f32.mrf.mxu0
  %v1740 = vadd.f32 0.0, %v1739
  %v1741 = vpop.f32.mrf.mxu0
  %1742 = vmatprep.mubr.f32.mxu0 0.0
  %1743 = vmatmul.mubr.f32.gmra.mxu0 %v1523
  %v1744 = vpop.f32.mrf.mxu0
  %v1745 = vadd.f32 0.0, %v1744
  %v1746 = vpop.f32.mrf.mxu0
  %1747 = vmatprep.mubr.f32.mxu0 0.0
  %1748 = vmatmul.mubr.f32.gmra.mxu0 %v1526
  %v1749 = vpop.f32.mrf.mxu0
  %v1750 = vadd.f32 0.0, %v1749
  %v1751 = vpop.f32.mrf.mxu0
  %1752 = vmatprep.mubr.f32.mxu0 0.0
  %1753 = vmatmul.mubr.f32.gmra.mxu0 %v1529
  %v1754 = vpop.f32.mrf.mxu0
  %v1755 = vadd.f32 0.0, %v1754
  %v1756 = vpop.f32.mrf.mxu0
  %1757 = vmatprep.mubr.f32.mxu0 0.0
  %1758 = vmatmul.mubr.f32.gmra.mxu0 %v1532
  %v1759 = vpop.f32.mrf.mxu0
  %v1760 = vadd.f32 0.0, %v1759
  %v1761 = vpop.f32.mrf.mxu0
  %1762 = vmatprep.mubr.f32.mxu0 0.0
  %1763 = vmatmul.mubr.f32.gmra.mxu0 %v1535
  %v1764 = vpop.f32.mrf.mxu0
  %v1765 = vadd.f32 0.0, %v1764
  %v1766 = vpop.f32.mrf.mxu0
  %1767 = vmatprep.mubr.f32.mxu0 0.0
  %1768 = vmatmul.mubr.f32.gmra.mxu0 %v1538
  %v1769 = vpop.f32.mrf.mxu0
  %v1770 = vadd.f32 0.0, %v1769
  %v1771 = vpop.f32.mrf.mxu0
  %1772 = vmatprep.mubr.f32.mxu0 0.0
  %1773 = vmatmul.mubr.f32.gmra.mxu0 %v1541
  %v1774 = vpop.f32.mrf.mxu0
  %v1775 = vadd.f32 0.0, %v1774
  %v1776 = vpop.f32.mrf.mxu0
  %1777 = vmatprep.mubr.f32.mxu0 0.0
  %1778 = vmatmul.mubr.f32.gmra.mxu0 %v1544
  %v1779 = vpop.f32.mrf.mxu0
  %v1780 = vadd.f32 0.0, %v1779
  %v1781 = vpop.f32.mrf.mxu0
  %1782 = vmatprep.mubr.f32.mxu0 0.0
  %1783 = vmatmul.mubr.f32.gmra.mxu0 %v1547
  %v1784 = vpop.f32.mrf.mxu0
  %v1785 = vadd.f32 0.0, %v1784
  %v1786 = vpop.f32.mrf.mxu0
  %1787 = vmatprep.mubr.f32.mxu0 0.0
  %1788 = vmatmul.mubr.f32.gmra.mxu0 %v1550
  %v1789 = vpop.f32.mrf.mxu0
  %v1790 = vadd.f32 0.0, %v1789
  %v1791 = vpop.f32.mrf.mxu0
  %1792 = vmatprep.mubr.f32.mxu0 0.0
  %1793 = vmatmul.mubr.f32.gmra.mxu0 %v1553
  %v1794 = vpop.f32.mrf.mxu0
  %v1795 = vadd.f32 0.0, %v1794
  %v1796 = vpop.f32.mrf.mxu0
  %1797 = vmatprep.mubr.f32.mxu0 0.0
  %1798 = vmatmul.mubr.f32.gmra.mxu0 %v1556
  %v1799 = vpop.f32.mrf.mxu0
  %v1800 = vadd.f32 0.0, %v1799
  %v1801 = vpop.f32.mrf.mxu0
  %1802 = vmatprep.mubr.f32.mxu0 0.0
  %1803 = vmatmul.mubr.f32.gmra.mxu0 %v1559
  %v1804 = vpop.f32.mrf.mxu0
  %v1805 = vadd.f32 0.0, %v1804
  %v1806 = vpop.f32.mrf.mxu0
  %1807 = vmatprep.mubr.f32.mxu0 0.0
  %1808 = vmatmul.mubr.f32.gmra.mxu0 %v1562
  %v1809 = vpop.f32.mrf.mxu0
  %v1810 = vadd.f32 0.0, %v1809
  %v1811 = vpop.f32.mrf.mxu0
  %1812 = vmatprep.mubr.f32.mxu0 0.0
  %1813 = vmatmul.mubr.f32.gmra.mxu0 %v1565
  %v1814 = vpop.f32.mrf.mxu0
  %v1815 = vadd.f32 0.0, %v1814
  %v1816 = vpop.f32.mrf.mxu0
  %1817 = vmatprep.mubr.f32.mxu0 0.0
  %1818 = vmatmul.mubr.f32.gmra.mxu0 %v1568
  %v1819 = vpop.f32.mrf.mxu0
  %v1820 = vadd.f32 0.0, %v1819
  %v1821 = vpop.f32.mrf.mxu0
  %1822 = vmatprep.mubr.f32.mxu0 0.0
  %1823 = vmatmul.mubr.f32.gmra.mxu0 %v1571
  %v1824 = vpop.f32.mrf.mxu0
  %v1825 = vadd.f32 0.0, %v1824
  %v1826 = vpop.f32.mrf.mxu0
  %1827 = vmatprep.mubr.f32.mxu0 0.0
  %1828 = vmatmul.mubr.f32.gmra.mxu0 %v1574
  %v1829 = vpop.f32.mrf.mxu0
  %v1830 = vadd.f32 0.0, %v1829
  %v1831 = vpop.f32.mrf.mxu0
  %1832 = vmatprep.mubr.f32.mxu0 0.0
  %1833 = vmatmul.mubr.f32.gmra.mxu0 %v1577
  %v1834 = vpop.f32.mrf.mxu0
  %v1835 = vadd.f32 0.0, %v1834
  %v1836 = vpop.f32.mrf.mxu0
  %1837 = vmatprep.mubr.f32.mxu0 0.0
  %1838 = vmatmul.mubr.f32.gmra.mxu0 %v1580
  %v1839 = vpop.f32.mrf.mxu0
  %v1840 = vadd.f32 0.0, %v1839
  %v1841 = vpop.f32.mrf.mxu0
  %1842 = vmatprep.mubr.f32.mxu0 0.0
  %1843 = vmatmul.mubr.f32.gmra.mxu0 %v1583
  %v1844 = vpop.f32.mrf.mxu0
  %v1845 = vadd.f32 0.0, %v1844
  %v1846 = vpop.f32.mrf.mxu0
  %1847 = vmatprep.mubr.f32.mxu0 0.0
  %1848 = vmatmul.mubr.f32.gmra.mxu0 %v1586
  %v1849 = vpop.f32.mrf.mxu0
  %v1850 = vadd.f32 0.0, %v1849
  %v1851 = vpop.f32.mrf.mxu0
  %1852 = vdwg.mxu0
  %v1853 = vmul.f32 %v1655, %v190
  %v1854 = vmul.f32 %v1660, %v190
  %v1855 = vmul.f32 %v1665, %v190
  %v1856 = vmul.f32 %v1670, %v190
  %v1857 = vmul.f32 %v1675, %v190
  %v1858 = vmul.f32 %v1680, %v195
  %v1859 = vmul.f32 %v1685, %v195
  %v1860 = vmul.f32 %v1690, %v195
  %v1861 = vmul.f32 %v1695, %v195
  %v1862 = vmul.f32 %v1700, %v195
  %v1863 = vadd.f32 %v1853, %v1858
  %v1864 = vadd.f32 %v1854, %v1859
  %v1865 = vadd.f32 %v1855, %v1860
  %v1866 = vadd.f32 %v1856, %v1861
  %v1867 = vadd.f32 %v1857, %v1862
  %v1868 = vmul.f32 %v1705, %v200
  %v1869 = vmul.f32 %v1710, %v200
  %v1870 = vmul.f32 %v1715, %v200
  %v1871 = vmul.f32 %v1720, %v200
  %v1872 = vmul.f32 %v1725, %v200
  %v1873 = vadd.f32 %v1863, %v1868
  %v1874 = vadd.f32 %v1864, %v1869
  %v1875 = vadd.f32 %v1865, %v1870
  %v1876 = vadd.f32 %v1866, %v1871
  %v1877 = vadd.f32 %v1867, %v1872
  %v1878 = vmul.f32 %v1730, %v205
  %v1879 = vmul.f32 %v1735, %v205
  %v1880 = vmul.f32 %v1740, %v205
  %v1881 = vmul.f32 %v1745, %v205
  %v1882 = vmul.f32 %v1750, %v205
  %v1883 = vadd.f32 %v1873, %v1878
  %v1884 = vadd.f32 %v1874, %v1879
  %v1885 = vadd.f32 %v1875, %v1880
  %v1886 = vadd.f32 %v1876, %v1881
  %v1887 = vadd.f32 %v1877, %v1882
  %v1888 = vmul.f32 %v1755, %v210
  %v1889 = vmul.f32 %v1760, %v210
  %v1890 = vmul.f32 %v1765, %v210
  %v1891 = vmul.f32 %v1770, %v210
  %v1892 = vmul.f32 %v1775, %v210
  %v1893 = vadd.f32 %v1883, %v1888
  %v1894 = vadd.f32 %v1884, %v1889
  %v1895 = vadd.f32 %v1885, %v1890
  %v1896 = vadd.f32 %v1886, %v1891
  %v1897 = vadd.f32 %v1887, %v1892
  %v1898 = vmul.f32 %v1780, %v215
  %v1899 = vmul.f32 %v1785, %v215
  %v1900 = vmul.f32 %v1790, %v215
  %v1901 = vmul.f32 %v1795, %v215
  %v1902 = vmul.f32 %v1800, %v215
  %v1903 = vadd.f32 %v1893, %v1898
  %v1904 = vadd.f32 %v1894, %v1899
  %v1905 = vadd.f32 %v1895, %v1900
  %v1906 = vadd.f32 %v1896, %v1901
  %v1907 = vadd.f32 %v1897, %v1902
  %v1908 = vmul.f32 %v1805, %v220
  %v1909 = vmul.f32 %v1810, %v220
  %v1910 = vmul.f32 %v1815, %v220
  %v1911 = vmul.f32 %v1820, %v220
  %v1912 = vmul.f32 %v1825, %v220
  %v1913 = vadd.f32 %v1903, %v1908
  %v1914 = vadd.f32 %v1904, %v1909
  %v1915 = vadd.f32 %v1905, %v1910
  %v1916 = vadd.f32 %v1906, %v1911
  %v1917 = vadd.f32 %v1907, %v1912
  %v1918 = vmul.f32 %v1830, %v225
  %v1919 = vmul.f32 %v1835, %v225
  %v1920 = vmul.f32 %v1840, %v225
  %v1921 = vmul.f32 %v1845, %v225
  %v1922 = vmul.f32 %v1850, %v225
  %v1923 = vadd.f32 %v1913, %v1918
  %v1924 = vadd.f32 %v1914, %v1919
  %v1925 = vadd.f32 %v1915, %v1920
  %v1926 = vadd.f32 %v1916, %v1921
  %v1927 = vadd.f32 %v1917, %v1922
  %v1928 = vadd.f32 %v1923, %v401
  %v1929 = vadd.f32 %v1924, %v402
  %v1930 = vadd.f32 %v1925, %v403
  %v1931 = vadd.f32 %v1926, %v404
  %v1932 = vadd.f32 %v1927, %v405
  %v1933 = vld [vmem:[%s5] sm:$0xff]
  %v1934 = vld [vmem:[%s5 + $0x8] sm:$0xff]
  %v1935 = vld [vmem:[%s5 + $0x10] sm:$0xff]
  %v1936 = vld [vmem:[%s5 + $0x18] sm:$0xff]
  %v1937 = vld [vmem:[%s6] sm:$0x1]
  %v1939 = vlaneseq
  %v1940 = vshrl.u32 %v1939, 7
  %v1941 = vsub.s32 0, %v1940
  %v1942 = vrot.slane %v1937, %v1941
  %v1945 = vsel %vm317, %v1928, 0
  %v1948 = vsel %vm317, %v1929, 0
  %v1951 = vsel %vm317, %v1930, 0
  %v1954 = vsel %vm317, %v1931, 0
  %v1957 = vsel %vm317, %v1932, 0
  %1959 = vmatprep.subr.mxu0 0.0
  %1960 = vmatpush1.msra.mxu0 0.0
  %1961 = vmatprep.subr.mxu0 0.0
  %1962 = vmatpush1.msra.mxu0 0.0
  %1963 = vmatprep.subr.mxu0 0.0
  %1964 = vmatpush1.msra.mxu0 0.0
  %1965 = vmatprep.subr.mxu0 0.0
  %1966 = vmatpush1.msra.mxu0 0.0
  %1967 = vmatprep.subr.mxu0 0.0
  %1968 = vmatpush1.msra.mxu0 0.0
  %1969 = vmatprep.subr.mxu0 0.0
  %1970 = vmatpush1.msra.mxu0 0.0
  %1971 = vmatprep.subr.mxu0 0.0
  %1972 = vmatpush1.msra.mxu0 0.0
  %1973 = vmatprep.subr.mxu0 0.0
  %1974 = vmatpush1.msra.mxu0 0.0
  %1975 = vmatprep.subr.mxu0 0.0
  %1976 = vmatpush1.msra.mxu0 0.0
  %1977 = vmatprep.subr.mxu0 0.0
  %1978 = vmatpush1.msra.mxu0 0.0
  %1979 = vmatprep.subr.mxu0 0.0
  %1980 = vmatpush1.msra.mxu0 0.0
  %1981 = vmatprep.subr.mxu0 0.0
  %1982 = vmatpush1.msra.mxu0 0.0
  %1983 = vmatprep.subr.mxu0 0.0
  %1984 = vmatpush1.msra.mxu0 %v1936
  %1985 = vmatprep.subr.mxu0 0.0
  %1986 = vmatpush1.msra.mxu0 %v1935
  %1987 = vmatprep.subr.mxu0 0.0
  %1988 = vmatpush1.msra.mxu0 %v1934
  %1989 = vmatprep.subr.mxu0 0.0
  %1990 = vmatpush1.msra.mxu0 %v1933
  %1991 = vmatprep.subr.mxu0 0.0
  %1992 = vmatpush2.msra.mxu0 0.0
  %1993 = vmatprep.subr.mxu0 0.0
  %1994 = vmatpush2.msra.mxu0 0.0
  %1995 = vmatprep.subr.mxu0 0.0
  %1996 = vmatpush2.msra.mxu0 0.0
  %1997 = vmatprep.subr.mxu0 0.0
  %1998 = vmatpush2.msra.mxu0 0.0
  %1999 = vmatprep.subr.mxu0 0.0
  %2000 = vmatpush2.msra.mxu0 0.0
  %2001 = vmatprep.subr.mxu0 0.0
  %2002 = vmatpush2.msra.mxu0 0.0
  %2003 = vmatprep.subr.mxu0 0.0
  %2004 = vmatpush2.msra.mxu0 0.0
  %2005 = vmatprep.subr.mxu0 0.0
  %2006 = vmatpush2.msra.mxu0 0.0
  %2007 = vmatprep.subr.mxu0 0.0
  %2008 = vmatpush2.msra.mxu0 0.0
  %2009 = vmatprep.subr.mxu0 0.0
  %2010 = vmatpush2.msra.mxu0 0.0
  %2011 = vmatprep.subr.mxu0 0.0
  %2012 = vmatpush2.msra.mxu0 0.0
  %2013 = vmatprep.subr.mxu0 0.0
  %2014 = vmatpush2.msra.mxu0 0.0
  %2015 = vmatprep.subr.mxu0 0.0
  %2016 = vmatpush2.msra.mxu0 0.0
  %2017 = vmatprep.subr.mxu0 0.0
  %2018 = vmatpush2.msra.mxu0 0.0
  %2019 = vmatprep.subr.mxu0 0.0
  %2020 = vmatpush2.msra.mxu0 0.0
  %2021 = vmatprep.subr.mxu0 0.0
  %2022 = vmatpush2.msra.mxu0 0.0
  %2023 = vmatprep.mubr.f32.mxu0 0.0
  %2024 = vmatmul.mubr.f32.gmra.mxu0 %v1945
  %v2025 = vpop.f32.mrf.mxu0
  %v2026 = vadd.f32 %v1942, %v2025
  %v2027 = vpop.f32.mrf.mxu0
  %2028 = vmatprep.mubr.f32.mxu0 0.0
  %2029 = vmatmul.mubr.f32.gmra.mxu0 %v1948
  %v2030 = vpop.f32.mrf.mxu0
  %v2031 = vadd.f32 %v1942, %v2030
  %v2032 = vpop.f32.mrf.mxu0
  %2033 = vmatprep.mubr.f32.mxu0 0.0
  %2034 = vmatmul.mubr.f32.gmra.mxu0 %v1951
  %v2035 = vpop.f32.mrf.mxu0
  %v2036 = vadd.f32 %v1942, %v2035
  %v2037 = vpop.f32.mrf.mxu0
  %2038 = vmatprep.mubr.f32.mxu0 0.0
  %2039 = vmatmul.mubr.f32.gmra.mxu0 %v1954
  %v2040 = vpop.f32.mrf.mxu0
  %v2041 = vadd.f32 %v1942, %v2040
  %v2042 = vpop.f32.mrf.mxu0
  %2043 = vmatprep.mubr.f32.mxu0 0.0
  %2044 = vmatmul.mubr.f32.gmra.mxu0 %v1957
  %v2045 = vpop.f32.mrf.mxu0
  %v2046 = vadd.f32 %v1942, %v2045
  %v2047 = vpop.f32.mrf.mxu0
  %2048 = vdwg.mxu0
  %v2049 = vld [vmem:[%s9] sm:$0x1]
  %v2050 = vld [vmem:[%s10] sm:$0x1]
  %v2051 = vsel %vm317, %v2026, 0.0
  %2052 = vadd.xlane.f32.xlu0 %v2051
  %v2053 = vpop.xlane.xlu0 %2052
  %v2054 = vsel %vm317, %v2031, 0.0
  %2055 = vadd.xlane.f32.xlu0 %v2054
  %v2056 = vpop.xlane.xlu0 %2055
  %v2057 = vsel %vm317, %v2036, 0.0
  %2058 = vadd.xlane.f32.xlu0 %v2057
  %v2059 = vpop.xlane.xlu0 %2058
  %v2060 = vsel %vm317, %v2041, 0.0
  %2061 = vadd.xlane.f32.xlu0 %v2060
  %v2062 = vpop.xlane.xlu0 %2061
  %v2063 = vsel %vm317, %v2046, 0.0
  %2064 = vadd.xlane.f32.xlu0 %v2063
  %v2065 = vpop.xlane.xlu0 %2064
  %v2066 = vmul.f32 %v2053, %v333
  %v2067 = vmul.f32 %v2056, %v333
  %v2068 = vmul.f32 %v2059, %v333
  %v2069 = vmul.f32 %v2062, %v333
  %v2070 = vmul.f32 %v2065, %v333
  %v2071 = vsub.f32 %v2026, %v2066
  %v2072 = vsub.f32 %v2031, %v2067
  %v2073 = vsub.f32 %v2036, %v2068
  %v2074 = vsub.f32 %v2041, %v2069
  %v2075 = vsub.f32 %v2046, %v2070
  %v2076 = vmul.f32 %v2071, %v2071
  %v2077 = vmul.f32 %v2072, %v2072
  %v2078 = vmul.f32 %v2073, %v2073
  %v2079 = vmul.f32 %v2074, %v2074
  %v2080 = vmul.f32 %v2075, %v2075
  %v2081 = vsel %vm317, %v2076, 0.0
  %2082 = vadd.xlane.f32.xlu0 %v2081
  %v2083 = vpop.xlane.xlu0 %2082
  %v2084 = vsel %vm317, %v2077, 0.0
  %2085 = vadd.xlane.f32.xlu0 %v2084
  %v2086 = vpop.xlane.xlu0 %2085
  %v2087 = vsel %vm317, %v2078, 0.0
  %2088 = vadd.xlane.f32.xlu0 %v2087
  %v2089 = vpop.xlane.xlu0 %2088
  %v2090 = vsel %vm317, %v2079, 0.0
  %2091 = vadd.xlane.f32.xlu0 %v2090
  %v2092 = vpop.xlane.xlu0 %2091
  %v2093 = vsel %vm317, %v2080, 0.0
  %2094 = vadd.xlane.f32.xlu0 %v2093
  %v2095 = vpop.xlane.xlu0 %2094
  %v2096 = vmul.f32 %v2083, %v333
  %v2097 = vmul.f32 %v2086, %v333
  %v2098 = vmul.f32 %v2089, %v333
  %v2099 = vmul.f32 %v2092, %v333
  %v2100 = vmul.f32 %v2095, %v333
  %v2101 = vadd.f32 %v2096, 1e-05
  %v2102 = vadd.f32 %v2097, 1e-05
  %v2103 = vadd.f32 %v2098, 1e-05
  %v2104 = vadd.f32 %v2099, 1e-05
  %v2105 = vadd.f32 %v2100, 1e-05
  %v2106 = vrsqrt.pop %v2101
  %v2107 = vrsqrt.pop %v2102
  %v2108 = vrsqrt.pop %v2103
  %v2109 = vrsqrt.pop %v2104
  %v2110 = vrsqrt.pop %v2105
  %v2111 = vmul.f32 %v2071, %v2106
  %v2112 = vmul.f32 %v2072, %v2107
  %v2113 = vmul.f32 %v2073, %v2108
  %v2114 = vmul.f32 %v2074, %v2109
  %v2115 = vmul.f32 %v2075, %v2110
  %v2117 = vlaneseq
  %v2118 = vshrl.u32 %v2117, 7
  %v2119 = vsub.s32 0, %v2118
  %v2120 = vrot.slane %v2049, %v2119
  %v2122 = vmul.f32 %v2111, %v2120
  %v2123 = vmul.f32 %v2112, %v2120
  %v2124 = vmul.f32 %v2113, %v2120
  %v2125 = vmul.f32 %v2114, %v2120
  %v2126 = vmul.f32 %v2115, %v2120
  %v2128 = vlaneseq
  %v2129 = vshrl.u32 %v2128, 7
  %v2130 = vsub.s32 0, %v2129
  %v2131 = vrot.slane %v2050, %v2130
  %v2133 = vadd.f32 %v2122, %v2131
  %v2134 = vadd.f32 %v2123, %v2131
  %v2135 = vadd.f32 %v2124, %v2131
  %v2136 = vadd.f32 %v2125, %v2131
  %v2137 = vadd.f32 %v2126, %v2131
  %v2138 = vld [vmem:[%s11] sm:$0xff]
  %v2139 = vld [vmem:[%s11 + $0x8] sm:$0xff]
  %v2140 = vld [vmem:[%s11 + $0x10] sm:$0xff]
  %v2141 = vld [vmem:[%s11 + $0x18] sm:$0xff]
  %v2142 = vld [vmem:[%s12] sm:$0x1]
  %v2144 = vlaneseq
  %v2145 = vshrl.u32 %v2144, 7
  %v2146 = vsub.s32 0, %v2145
  %v2147 = vrot.slane %v2142, %v2146
  %v2150 = vsel %vm317, %v2133, 0
  %v2153 = vsel %vm317, %v2134, 0
  %v2156 = vsel %vm317, %v2135, 0
  %v2159 = vsel %vm317, %v2136, 0
  %v2162 = vsel %vm317, %v2137, 0
  %2164 = vmatprep.subr.mxu0 0.0
  %2165 = vmatpush1.msra.mxu0 0.0
  %2166 = vmatprep.subr.mxu0 0.0
  %2167 = vmatpush1.msra.mxu0 0.0
  %2168 = vmatprep.subr.mxu0 0.0
  %2169 = vmatpush1.msra.mxu0 0.0
  %2170 = vmatprep.subr.mxu0 0.0
  %2171 = vmatpush1.msra.mxu0 0.0
  %2172 = vmatprep.subr.mxu0 0.0
  %2173 = vmatpush1.msra.mxu0 0.0
  %2174 = vmatprep.subr.mxu0 0.0
  %2175 = vmatpush1.msra.mxu0 0.0
  %2176 = vmatprep.subr.mxu0 0.0
  %2177 = vmatpush1.msra.mxu0 0.0
  %2178 = vmatprep.subr.mxu0 0.0
  %2179 = vmatpush1.msra.mxu0 0.0
  %2180 = vmatprep.subr.mxu0 0.0
  %2181 = vmatpush1.msra.mxu0 0.0
  %2182 = vmatprep.subr.mxu0 0.0
  %2183 = vmatpush1.msra.mxu0 0.0
  %2184 = vmatprep.subr.mxu0 0.0
  %2185 = vmatpush1.msra.mxu0 0.0
  %2186 = vmatprep.subr.mxu0 0.0
  %2187 = vmatpush1.msra.mxu0 0.0
  %2188 = vmatprep.subr.mxu0 0.0
  %2189 = vmatpush1.msra.mxu0 %v2141
  %2190 = vmatprep.subr.mxu0 0.0
  %2191 = vmatpush1.msra.mxu0 %v2140
  %2192 = vmatprep.subr.mxu0 0.0
  %2193 = vmatpush1.msra.mxu0 %v2139
  %2194 = vmatprep.subr.mxu0 0.0
  %2195 = vmatpush1.msra.mxu0 %v2138
  %2196 = vmatprep.subr.mxu0 0.0
  %2197 = vmatpush2.msra.mxu0 0.0
  %2198 = vmatprep.subr.mxu0 0.0
  %2199 = vmatpush2.msra.mxu0 0.0
  %2200 = vmatprep.subr.mxu0 0.0
  %2201 = vmatpush2.msra.mxu0 0.0
  %2202 = vmatprep.subr.mxu0 0.0
  %2203 = vmatpush2.msra.mxu0 0.0
  %2204 = vmatprep.subr.mxu0 0.0
  %2205 = vmatpush2.msra.mxu0 0.0
  %2206 = vmatprep.subr.mxu0 0.0
  %2207 = vmatpush2.msra.mxu0 0.0
  %2208 = vmatprep.subr.mxu0 0.0
  %2209 = vmatpush2.msra.mxu0 0.0
  %2210 = vmatprep.subr.mxu0 0.0
  %2211 = vmatpush2.msra.mxu0 0.0
  %2212 = vmatprep.subr.mxu0 0.0
  %2213 = vmatpush2.msra.mxu0 0.0
  %2214 = vmatprep.subr.mxu0 0.0
  %2215 = vmatpush2.msra.mxu0 0.0
  %2216 = vmatprep.subr.mxu0 0.0
  %2217 = vmatpush2.msra.mxu0 0.0
  %2218 = vmatprep.subr.mxu0 0.0
  %2219 = vmatpush2.msra.mxu0 0.0
  %2220 = vmatprep.subr.mxu0 0.0
  %2221 = vmatpush2.msra.mxu0 0.0
  %2222 = vmatprep.subr.mxu0 0.0
  %2223 = vmatpush2.msra.mxu0 0.0
  %2224 = vmatprep.subr.mxu0 0.0
  %2225 = vmatpush2.msra.mxu0 0.0
  %2226 = vmatprep.subr.mxu0 0.0
  %2227 = vmatpush2.msra.mxu0 0.0
  %2228 = vmatprep.mubr.f32.mxu0 0.0
  %2229 = vmatmul.mubr.f32.gmra.mxu0 %v2150
  %v2230 = vpop.f32.mrf.mxu0
  %v2231 = vadd.f32 %v2147, %v2230
  %v2232 = vpop.f32.mrf.mxu0
  %2233 = vmatprep.mubr.f32.mxu0 0.0
  %2234 = vmatmul.mubr.f32.gmra.mxu0 %v2153
  %v2235 = vpop.f32.mrf.mxu0
  %v2236 = vadd.f32 %v2147, %v2235
  %v2237 = vpop.f32.mrf.mxu0
  %2238 = vmatprep.mubr.f32.mxu0 0.0
  %2239 = vmatmul.mubr.f32.gmra.mxu0 %v2156
  %v2240 = vpop.f32.mrf.mxu0
  %v2241 = vadd.f32 %v2147, %v2240
  %v2242 = vpop.f32.mrf.mxu0
  %2243 = vmatprep.mubr.f32.mxu0 0.0
  %2244 = vmatmul.mubr.f32.gmra.mxu0 %v2159
  %v2245 = vpop.f32.mrf.mxu0
  %v2246 = vadd.f32 %v2147, %v2245
  %v2247 = vpop.f32.mrf.mxu0
  %2248 = vmatprep.mubr.f32.mxu0 0.0
  %2249 = vmatmul.mubr.f32.gmra.mxu0 %v2162
  %v2250 = vpop.f32.mrf.mxu0
  %v2251 = vadd.f32 %v2147, %v2250
  %v2252 = vpop.f32.mrf.mxu0
  %2253 = vdwg.mxu0
  %v2254 = vmul.f32 %v2231, 0.5
  %v2255 = vmul.f32 %v2236, 0.5
  %v2256 = vmul.f32 %v2241, 0.5
  %v2257 = vmul.f32 %v2246, 0.5
  %v2258 = vmul.f32 %v2251, 0.5
  %v2259 = vmul.f32 %v2231, 0.70710677
  %v2260 = vmul.f32 %v2236, 0.70710677
  %v2261 = vmul.f32 %v2241, 0.70710677
  %v2262 = vmul.f32 %v2246, 0.70710677
  %v2263 = vmul.f32 %v2251, 0.70710677
  %v2264 = verf.f32.pop %v2259
  %v2265 = verf.f32.pop %v2260
  %v2266 = verf.f32.pop %v2261
  %v2267 = verf.f32.pop %v2262
  %v2268 = verf.f32.pop %v2263
  %v2269 = vadd.f32 %v2264, 1.0
  %v2270 = vadd.f32 %v2265, 1.0
  %v2271 = vadd.f32 %v2266, 1.0
  %v2272 = vadd.f32 %v2267, 1.0
  %v2273 = vadd.f32 %v2268, 1.0
  %v2274 = vmul.f32 %v2254, %v2269
  %v2275 = vmul.f32 %v2255, %v2270
  %v2276 = vmul.f32 %v2256, %v2271
  %v2277 = vmul.f32 %v2257, %v2272
  %v2278 = vmul.f32 %v2258, %v2273
  %v2279 = vld [vmem:[%s13] sm:$0xff]
  %v2280 = vld [vmem:[%s13 + $0x8] sm:$0xff]
  %v2281 = vld [vmem:[%s13 + $0x10] sm:$0xff]
  %v2282 = vld [vmem:[%s13 + $0x18] sm:$0xff]
  %v2283 = vld [vmem:[%s13 + $0x20] sm:$0xff]
  %v2284 = vld [vmem:[%s13 + $0x28] sm:$0xff]
  %v2285 = vld [vmem:[%s13 + $0x30] sm:$0xff]
  %v2286 = vld [vmem:[%s13 + $0x38] sm:$0xff]
  %v2287 = vld [vmem:[%s13 + $0x40] sm:$0xff]
  %v2288 = vld [vmem:[%s13 + $0x48] sm:$0xff]
  %v2289 = vld [vmem:[%s13 + $0x50] sm:$0xff]
  %v2290 = vld [vmem:[%s13 + $0x58] sm:$0xff]
  %v2291 = vld [vmem:[%s13 + $0x60] sm:$0xff]
  %v2292 = vld [vmem:[%s13 + $0x68] sm:$0xff]
  %v2293 = vld [vmem:[%s13 + $0x70] sm:$0xff]
  %v2294 = vld [vmem:[%s13 + $0x78] sm:$0xff]
  %v2295 = vld [vmem:[%s14] sm:$0x1]
  %v2297 = vlaneseq
  %v2298 = vshrl.u32 %v2297, 7
  %v2299 = vsub.s32 0, %v2298
  %v2300 = vrot.slane %v2295, %v2299
  %2302 = vmatprep.subr.mxu0 0.0
  %2303 = vmatpush1.msra.mxu0 %v2294
  %2304 = vmatprep.subr.mxu0 0.0
  %2305 = vmatpush1.msra.mxu0 %v2293
  %2306 = vmatprep.subr.mxu0 0.0
  %2307 = vmatpush1.msra.mxu0 %v2292
  %2308 = vmatprep.subr.mxu0 0.0
  %2309 = vmatpush1.msra.mxu0 %v2291
  %2310 = vmatprep.subr.mxu0 0.0
  %2311 = vmatpush1.msra.mxu0 %v2290
  %2312 = vmatprep.subr.mxu0 0.0
  %2313 = vmatpush1.msra.mxu0 %v2289
  %2314 = vmatprep.subr.mxu0 0.0
  %2315 = vmatpush1.msra.mxu0 %v2288
  %2316 = vmatprep.subr.mxu0 0.0
  %2317 = vmatpush1.msra.mxu0 %v2287
  %2318 = vmatprep.subr.mxu0 0.0
  %2319 = vmatpush1.msra.mxu0 %v2286
  %2320 = vmatprep.subr.mxu0 0.0
  %2321 = vmatpush1.msra.mxu0 %v2285
  %2322 = vmatprep.subr.mxu0 0.0
  %2323 = vmatpush1.msra.mxu0 %v2284
  %2324 = vmatprep.subr.mxu0 0.0
  %2325 = vmatpush1.msra.mxu0 %v2283
  %2326 = vmatprep.subr.mxu0 0.0
  %2327 = vmatpush1.msra.mxu0 %v2282
  %2328 = vmatprep.subr.mxu0 0.0
  %2329 = vmatpush1.msra.mxu0 %v2281
  %2330 = vmatprep.subr.mxu0 0.0
  %2331 = vmatpush1.msra.mxu0 %v2280
  %2332 = vmatprep.subr.mxu0 0.0
  %2333 = vmatpush1.msra.mxu0 %v2279
  %2334 = vmatprep.subr.mxu0 0.0
  %2335 = vmatpush2.msra.mxu0 0.0
  %2336 = vmatprep.subr.mxu0 0.0
  %2337 = vmatpush2.msra.mxu0 0.0
  %2338 = vmatprep.subr.mxu0 0.0
  %2339 = vmatpush2.msra.mxu0 0.0
  %2340 = vmatprep.subr.mxu0 0.0
  %2341 = vmatpush2.msra.mxu0 0.0
  %2342 = vmatprep.subr.mxu0 0.0
  %2343 = vmatpush2.msra.mxu0 0.0
  %2344 = vmatprep.subr.mxu0 0.0
  %2345 = vmatpush2.msra.mxu0 0.0
  %2346 = vmatprep.subr.mxu0 0.0
  %2347 = vmatpush2.msra.mxu0 0.0
  %2348 = vmatprep.subr.mxu0 0.0
  %2349 = vmatpush2.msra.mxu0 0.0
  %2350 = vmatprep.subr.mxu0 0.0
  %2351 = vmatpush2.msra.mxu0 0.0
  %2352 = vmatprep.subr.mxu0 0.0
  %2353 = vmatpush2.msra.mxu0 0.0
  %2354 = vmatprep.subr.mxu0 0.0
  %2355 = vmatpush2.msra.mxu0 0.0
  %2356 = vmatprep.subr.mxu0 0.0
  %2357 = vmatpush2.msra.mxu0 0.0
  %2358 = vmatprep.subr.mxu0 0.0
  %2359 = vmatpush2.msra.mxu0 0.0
  %2360 = vmatprep.subr.mxu0 0.0
  %2361 = vmatpush2.msra.mxu0 0.0
  %2362 = vmatprep.subr.mxu0 0.0
  %2363 = vmatpush2.msra.mxu0 0.0
  %2364 = vmatprep.subr.mxu0 0.0
  %2365 = vmatpush2.msra.mxu0 0.0
  %2366 = vmatprep.mubr.f32.mxu0 0.0
  %2367 = vmatmul.mubr.f32.gmra.mxu0 %v2274
  %v2368 = vpop.f32.mrf.mxu0
  %v2369 = vadd.f32 %v2300, %v2368
  %v2370 = vpop.f32.mrf.mxu0
  %2371 = vmatprep.mubr.f32.mxu0 0.0
  %2372 = vmatmul.mubr.f32.gmra.mxu0 %v2275
  %v2373 = vpop.f32.mrf.mxu0
  %v2374 = vadd.f32 %v2300, %v2373
  %v2375 = vpop.f32.mrf.mxu0
  %2376 = vmatprep.mubr.f32.mxu0 0.0
  %2377 = vmatmul.mubr.f32.gmra.mxu0 %v2276
  %v2378 = vpop.f32.mrf.mxu0
  %v2379 = vadd.f32 %v2300, %v2378
  %v2380 = vpop.f32.mrf.mxu0
  %2381 = vmatprep.mubr.f32.mxu0 0.0
  %2382 = vmatmul.mubr.f32.gmra.mxu0 %v2277
  %v2383 = vpop.f32.mrf.mxu0
  %v2384 = vadd.f32 %v2300, %v2383
  %v2385 = vpop.f32.mrf.mxu0
  %2386 = vmatprep.mubr.f32.mxu0 0.0
  %2387 = vmatmul.mubr.f32.gmra.mxu0 %v2278
  %v2388 = vpop.f32.mrf.mxu0
  %v2389 = vadd.f32 %v2300, %v2388
  %v2390 = vpop.f32.mrf.mxu0
  %2391 = vdwg.mxu0
  %v2392 = vadd.f32 %v2369, %v2133
  %v2393 = vadd.f32 %v2374, %v2134
  %v2394 = vadd.f32 %v2379, %v2135
  %v2395 = vadd.f32 %v2384, %v2136
  %v2396 = vadd.f32 %v2389, %v2137
  %s2397 = scalar_lea.vmem %s7, 1
  %v2398 = vld [vmem:[%s2397] sm:$0x1]
  %s2399 = scalar_lea.vmem %s8, 1
  %v2400 = vld [vmem:[%s2399] sm:$0x1]
  %v2401 = vsel %vm317, %v2392, 0.0
  %2402 = vadd.xlane.f32.xlu0 %v2401
  %v2403 = vpop.xlane.xlu0 %2402
  %v2404 = vsel %vm317, %v2393, 0.0
  %2405 = vadd.xlane.f32.xlu0 %v2404
  %v2406 = vpop.xlane.xlu0 %2405
  %v2407 = vsel %vm317, %v2394, 0.0
  %2408 = vadd.xlane.f32.xlu0 %v2407
  %v2409 = vpop.xlane.xlu0 %2408
  %v2410 = vsel %vm317, %v2395, 0.0
  %2411 = vadd.xlane.f32.xlu0 %v2410
  %v2412 = vpop.xlane.xlu0 %2411
  %v2413 = vsel %vm317, %v2396, 0.0
  %2414 = vadd.xlane.f32.xlu0 %v2413
  %v2415 = vpop.xlane.xlu0 %2414
  %v2416 = vmul.f32 %v2403, %v333
  %v2417 = vmul.f32 %v2406, %v333
  %v2418 = vmul.f32 %v2409, %v333
  %v2419 = vmul.f32 %v2412, %v333
  %v2420 = vmul.f32 %v2415, %v333
  %v2421 = vsub.f32 %v2392, %v2416
  %v2422 = vsub.f32 %v2393, %v2417
  %v2423 = vsub.f32 %v2394, %v2418
  %v2424 = vsub.f32 %v2395, %v2419
  %v2425 = vsub.f32 %v2396, %v2420
  %v2426 = vmul.f32 %v2421, %v2421
  %v2427 = vmul.f32 %v2422, %v2422
  %v2428 = vmul.f32 %v2423, %v2423
  %v2429 = vmul.f32 %v2424, %v2424
  %v2430 = vmul.f32 %v2425, %v2425
  %v2431 = vsel %vm317, %v2426, 0.0
  %2432 = vadd.xlane.f32.xlu0 %v2431
  %v2433 = vpop.xlane.xlu0 %2432
  %v2434 = vsel %vm317, %v2427, 0.0
  %2435 = vadd.xlane.f32.xlu0 %v2434
  %v2436 = vpop.xlane.xlu0 %2435
  %v2437 = vsel %vm317, %v2428, 0.0
  %2438 = vadd.xlane.f32.xlu0 %v2437
  %v2439 = vpop.xlane.xlu0 %2438
  %v2440 = vsel %vm317, %v2429, 0.0
  %2441 = vadd.xlane.f32.xlu0 %v2440
  %v2442 = vpop.xlane.xlu0 %2441
  %v2443 = vsel %vm317, %v2430, 0.0
  %2444 = vadd.xlane.f32.xlu0 %v2443
  %v2445 = vpop.xlane.xlu0 %2444
  %v2446 = vmul.f32 %v2433, %v333
  %v2447 = vmul.f32 %v2436, %v333
  %v2448 = vmul.f32 %v2439, %v333
  %v2449 = vmul.f32 %v2442, %v333
  %v2450 = vmul.f32 %v2445, %v333
  %v2451 = vadd.f32 %v2446, 1e-05
  %v2452 = vadd.f32 %v2447, 1e-05
  %v2453 = vadd.f32 %v2448, 1e-05
  %v2454 = vadd.f32 %v2449, 1e-05
  %v2455 = vadd.f32 %v2450, 1e-05
  %v2456 = vrsqrt.pop %v2451
  %v2457 = vrsqrt.pop %v2452
  %v2458 = vrsqrt.pop %v2453
  %v2459 = vrsqrt.pop %v2454
  %v2460 = vrsqrt.pop %v2455
  %v2461 = vmul.f32 %v2421, %v2456
  %v2462 = vmul.f32 %v2422, %v2457
  %v2463 = vmul.f32 %v2423, %v2458
  %v2464 = vmul.f32 %v2424, %v2459
  %v2465 = vmul.f32 %v2425, %v2460
  %v2467 = vlaneseq
  %v2468 = vshrl.u32 %v2467, 7
  %v2469 = vsub.s32 0, %v2468
  %v2470 = vrot.slane %v2398, %v2469
  %v2472 = vmul.f32 %v2461, %v2470
  %v2473 = vmul.f32 %v2462, %v2470
  %v2474 = vmul.f32 %v2463, %v2470
  %v2475 = vmul.f32 %v2464, %v2470
  %v2476 = vmul.f32 %v2465, %v2470
  %v2478 = vlaneseq
  %v2479 = vshrl.u32 %v2478, 7
  %v2480 = vsub.s32 0, %v2479
  %v2481 = vrot.slane %v2400, %v2480
  %v2483 = vadd.f32 %v2472, %v2481
  %v2484 = vadd.f32 %v2473, %v2481
  %v2485 = vadd.f32 %v2474, %v2481
  %v2486 = vadd.f32 %v2475, %v2481
  %v2487 = vadd.f32 %v2476, %v2481
  %s2488 = scalar_lea.vmem %s3, 32
  %v2489 = vld [vmem:[%s2488] sm:$0xff]
  %v2490 = vld [vmem:[%s2488 + $0x8] sm:$0xff]
  %v2491 = vld [vmem:[%s2488 + $0x10] sm:$0xff]
  %v2492 = vld [vmem:[%s2488 + $0x18] sm:$0xff]
  %s2493 = scalar_lea.vmem %s4, 1
  %v2494 = vld [vmem:[%s2493] sm:$0x1]
  %v2496 = vlaneseq
  %v2497 = vshrl.u32 %v2496, 7
  %v2498 = vsub.s32 0, %v2497
  %v2499 = vrot.slane %v2494, %v2498
  %v2502 = vsel %vm317, %v2483, 0
  %v2505 = vsel %vm317, %v2484, 0
  %v2508 = vsel %vm317, %v2485, 0
  %v2511 = vsel %vm317, %v2486, 0
  %v2514 = vsel %vm317, %v2487, 0
  %2516 = vmatprep.subr.mxu0 0.0
  %2517 = vmatpush1.msra.mxu0 0.0
  %2518 = vmatprep.subr.mxu0 0.0
  %2519 = vmatpush1.msra.mxu0 0.0
  %2520 = vmatprep.subr.mxu0 0.0
  %2521 = vmatpush1.msra.mxu0 0.0
  %2522 = vmatprep.subr.mxu0 0.0
  %2523 = vmatpush1.msra.mxu0 0.0
  %2524 = vmatprep.subr.mxu0 0.0
  %2525 = vmatpush1.msra.mxu0 0.0
  %2526 = vmatprep.subr.mxu0 0.0
  %2527 = vmatpush1.msra.mxu0 0.0
  %2528 = vmatprep.subr.mxu0 0.0
  %2529 = vmatpush1.msra.mxu0 0.0
  %2530 = vmatprep.subr.mxu0 0.0
  %2531 = vmatpush1.msra.mxu0 0.0
  %2532 = vmatprep.subr.mxu0 0.0
  %2533 = vmatpush1.msra.mxu0 0.0
  %2534 = vmatprep.subr.mxu0 0.0
  %2535 = vmatpush1.msra.mxu0 0.0
  %2536 = vmatprep.subr.mxu0 0.0
  %2537 = vmatpush1.msra.mxu0 0.0
  %2538 = vmatprep.subr.mxu0 0.0
  %2539 = vmatpush1.msra.mxu0 0.0
  %2540 = vmatprep.subr.mxu0 0.0
  %2541 = vmatpush1.msra.mxu0 %v2492
  %2542 = vmatprep.subr.mxu0 0.0
  %2543 = vmatpush1.msra.mxu0 %v2491
  %2544 = vmatprep.subr.mxu0 0.0
  %2545 = vmatpush1.msra.mxu0 %v2490
  %2546 = vmatprep.subr.mxu0 0.0
  %2547 = vmatpush1.msra.mxu0 %v2489
  %2548 = vmatprep.subr.mxu0 0.0
  %2549 = vmatpush2.msra.mxu0 0.0
  %2550 = vmatprep.subr.mxu0 0.0
  %2551 = vmatpush2.msra.mxu0 0.0
  %2552 = vmatprep.subr.mxu0 0.0
  %2553 = vmatpush2.msra.mxu0 0.0
  %2554 = vmatprep.subr.mxu0 0.0
  %2555 = vmatpush2.msra.mxu0 0.0
  %2556 = vmatprep.subr.mxu0 0.0
  %2557 = vmatpush2.msra.mxu0 0.0
  %2558 = vmatprep.subr.mxu0 0.0
  %2559 = vmatpush2.msra.mxu0 0.0
  %2560 = vmatprep.subr.mxu0 0.0
  %2561 = vmatpush2.msra.mxu0 0.0
  %2562 = vmatprep.subr.mxu0 0.0
  %2563 = vmatpush2.msra.mxu0 0.0
  %2564 = vmatprep.subr.mxu0 0.0
  %2565 = vmatpush2.msra.mxu0 0.0
  %2566 = vmatprep.subr.mxu0 0.0
  %2567 = vmatpush2.msra.mxu0 0.0
  %2568 = vmatprep.subr.mxu0 0.0
  %2569 = vmatpush2.msra.mxu0 0.0
  %2570 = vmatprep.subr.mxu0 0.0
  %2571 = vmatpush2.msra.mxu0 0.0
  %2572 = vmatprep.subr.mxu0 0.0
  %2573 = vmatpush2.msra.mxu0 0.0
  %2574 = vmatprep.subr.mxu0 0.0
  %2575 = vmatpush2.msra.mxu0 0.0
  %2576 = vmatprep.subr.mxu0 0.0
  %2577 = vmatpush2.msra.mxu0 0.0
  %2578 = vmatprep.subr.mxu0 0.0
  %2579 = vmatpush2.msra.mxu0 0.0
  %2580 = vmatprep.mubr.f32.mxu0 0.0
  %2581 = vmatmul.mubr.f32.gmra.mxu0 %v2502
  %v2582 = vpop.f32.mrf.mxu0
  %v2583 = vadd.f32 %v2499, %v2582
  %v2584 = vpop.f32.mrf.mxu0
  %2585 = vmatprep.mubr.f32.mxu0 0.0
  %2586 = vmatmul.mubr.f32.gmra.mxu0 %v2505
  %v2587 = vpop.f32.mrf.mxu0
  %v2588 = vadd.f32 %v2499, %v2587
  %v2589 = vpop.f32.mrf.mxu0
  %2590 = vmatprep.mubr.f32.mxu0 0.0
  %2591 = vmatmul.mubr.f32.gmra.mxu0 %v2508
  %v2592 = vpop.f32.mrf.mxu0
  %v2593 = vadd.f32 %v2499, %v2592
  %v2594 = vpop.f32.mrf.mxu0
  %2595 = vmatprep.mubr.f32.mxu0 0.0
  %2596 = vmatmul.mubr.f32.gmra.mxu0 %v2511
  %v2597 = vpop.f32.mrf.mxu0
  %v2598 = vadd.f32 %v2499, %v2597
  %v2599 = vpop.f32.mrf.mxu0
  %2600 = vmatprep.mubr.f32.mxu0 0.0
  %2601 = vmatmul.mubr.f32.gmra.mxu0 %v2514
  %v2602 = vpop.f32.mrf.mxu0
  %v2603 = vadd.f32 %v2499, %v2602
  %v2604 = vpop.f32.mrf.mxu0
  %2605 = vdwg.mxu0
  %v2606 = vmul.f32 %v2583, %v190
  %v2607 = vmul.f32 %v2588, %v190
  %v2608 = vmul.f32 %v2593, %v190
  %v2609 = vmul.f32 %v2598, %v190
  %v2610 = vmul.f32 %v2603, %v190
  %v2611 = vmul.f32 %v2583, %v195
  %v2612 = vmul.f32 %v2588, %v195
  %v2613 = vmul.f32 %v2593, %v195
  %v2614 = vmul.f32 %v2598, %v195
  %v2615 = vmul.f32 %v2603, %v195
  %v2616 = vmul.f32 %v2583, %v200
  %v2617 = vmul.f32 %v2588, %v200
  %v2618 = vmul.f32 %v2593, %v200
  %v2619 = vmul.f32 %v2598, %v200
  %v2620 = vmul.f32 %v2603, %v200
  %v2621 = vmul.f32 %v2583, %v205
  %v2622 = vmul.f32 %v2588, %v205
  %v2623 = vmul.f32 %v2593, %v205
  %v2624 = vmul.f32 %v2598, %v205
  %v2625 = vmul.f32 %v2603, %v205
  %v2626 = vmul.f32 %v2583, %v210
  %v2627 = vmul.f32 %v2588, %v210
  %v2628 = vmul.f32 %v2593, %v210
  %v2629 = vmul.f32 %v2598, %v210
  %v2630 = vmul.f32 %v2603, %v210
  %v2631 = vmul.f32 %v2583, %v215
  %v2632 = vmul.f32 %v2588, %v215
  %v2633 = vmul.f32 %v2593, %v215
  %v2634 = vmul.f32 %v2598, %v215
  %v2635 = vmul.f32 %v2603, %v215
  %v2636 = vmul.f32 %v2583, %v220
  %v2637 = vmul.f32 %v2588, %v220
  %v2638 = vmul.f32 %v2593, %v220
  %v2639 = vmul.f32 %v2598, %v220
  %v2640 = vmul.f32 %v2603, %v220
  %v2641 = vmul.f32 %v2583, %v225
  %v2642 = vmul.f32 %v2588, %v225
  %v2643 = vmul.f32 %v2593, %v225
  %v2644 = vmul.f32 %v2598, %v225
  %v2645 = vmul.f32 %v2603, %v225
  %2651 = vrot.lane.b32.xlu0 %v2583, 96
  %v2652 = vpop.permute.xlu0 %2651
  %2653 = vrot.lane.b32.xlu0 %v2588, 96
  %v2654 = vpop.permute.xlu0 %2653
  %2655 = vrot.lane.b32.xlu0 %v2593, 96
  %v2656 = vpop.permute.xlu0 %2655
  %2657 = vrot.lane.b32.xlu0 %v2598, 96
  %v2658 = vpop.permute.xlu0 %2657
  %2659 = vrot.lane.b32.xlu0 %v2603, 96
  %v2660 = vpop.permute.xlu0 %2659
  %v2662 = vsel %vm317, %v2606, 0
  %v2665 = vsel %vm317, %v2607, 0
  %v2668 = vsel %vm317, %v2608, 0
  %v2671 = vsel %vm317, %v2609, 0
  %v2674 = vsel %vm317, %v2610, 0
  %v2677 = vsel %vm317, %v2611, 0
  %v2680 = vsel %vm317, %v2612, 0
  %v2683 = vsel %vm317, %v2613, 0
  %v2686 = vsel %vm317, %v2614, 0
  %v2689 = vsel %vm317, %v2615, 0
  %v2692 = vsel %vm317, %v2616, 0
  %v2695 = vsel %vm317, %v2617, 0
  %v2698 = vsel %vm317, %v2618, 0
  %v2701 = vsel %vm317, %v2619, 0
  %v2704 = vsel %vm317, %v2620, 0
  %v2707 = vsel %vm317, %v2621, 0
  %v2710 = vsel %vm317, %v2622, 0
  %v2713 = vsel %vm317, %v2623, 0
  %v2716 = vsel %vm317, %v2624, 0
  %v2719 = vsel %vm317, %v2625, 0
  %v2722 = vsel %vm317, %v2626, 0
  %v2725 = vsel %vm317, %v2627, 0
  %v2728 = vsel %vm317, %v2628, 0
  %v2731 = vsel %vm317, %v2629, 0
  %v2734 = vsel %vm317, %v2630, 0
  %v2737 = vsel %vm317, %v2631, 0
  %v2740 = vsel %vm317, %v2632, 0
  %v2743 = vsel %vm317, %v2633, 0
  %v2746 = vsel %vm317, %v2634, 0
  %v2749 = vsel %vm317, %v2635, 0
  %v2752 = vsel %vm317, %v2636, 0
  %v2755 = vsel %vm317, %v2637, 0
  %v2758 = vsel %vm317, %v2638, 0
  %v2761 = vsel %vm317, %v2639, 0
  %v2764 = vsel %vm317, %v2640, 0
  %v2767 = vsel %vm317, %v2641, 0
  %v2770 = vsel %vm317, %v2642, 0
  %v2773 = vsel %vm317, %v2643, 0
  %v2776 = vsel %vm317, %v2644, 0
  %v2779 = vsel %vm317, %v2645, 0
  %v2781 = vsel %vm317, %v2652, 0
  %v2783 = vsel %vm317, %v2654, 0
  %v2785 = vsel %vm317, %v2656, 0
  %v2787 = vsel %vm317, %v2658, 0
  %v2789 = vsel %vm317, %v2660, 0
  %2791 = vmatprep.subr.mxu0 0.0
  %2792 = vmatpush1.xpose.msra.mxu0 0.0
  %2793 = vmatprep.subr.mxu0 0.0
  %2794 = vmatpush1.xpose.msra.mxu0 0.0
  %2795 = vmatprep.subr.mxu0 0.0
  %2796 = vmatpush1.xpose.msra.mxu0 0.0
  %2797 = vmatprep.subr.mxu0 0.0
  %2798 = vmatpush1.xpose.msra.mxu0 0.0
  %2799 = vmatprep.subr.mxu0 0.0
  %2800 = vmatpush1.xpose.msra.mxu0 0.0
  %2801 = vmatprep.subr.mxu0 0.0
  %2802 = vmatpush1.xpose.msra.mxu0 0.0
  %2803 = vmatprep.subr.mxu0 0.0
  %2804 = vmatpush1.xpose.msra.mxu0 0.0
  %2805 = vmatprep.subr.mxu0 0.0
  %2806 = vmatpush1.xpose.msra.mxu0 0.0
  %2807 = vmatprep.subr.mxu0 0.0
  %2808 = vmatpush1.xpose.msra.mxu0 0.0
  %2809 = vmatprep.subr.mxu0 0.0
  %2810 = vmatpush1.xpose.msra.mxu0 0.0
  %2811 = vmatprep.subr.mxu0 0.0
  %2812 = vmatpush1.xpose.msra.mxu0 0.0
  %2813 = vmatprep.subr.mxu0 0.0
  %2814 = vmatpush1.xpose.msra.mxu0 %v2789
  %2815 = vmatprep.subr.mxu0 0.0
  %2816 = vmatpush1.xpose.msra.mxu0 %v2787
  %2817 = vmatprep.subr.mxu0 0.0
  %2818 = vmatpush1.xpose.msra.mxu0 %v2785
  %2819 = vmatprep.subr.mxu0 0.0
  %2820 = vmatpush1.xpose.msra.mxu0 %v2783
  %2821 = vmatprep.subr.mxu0 0.0
  %2822 = vmatpush1.xpose.msra.mxu0 %v2781
  %2823 = vmatprep.subr.mxu0 0.0
  %2824 = vmatpush2.xpose.msra.mxu0 0.0
  %2825 = vmatprep.subr.mxu0 0.0
  %2826 = vmatpush2.xpose.msra.mxu0 0.0
  %2827 = vmatprep.subr.mxu0 0.0
  %2828 = vmatpush2.xpose.msra.mxu0 0.0
  %2829 = vmatprep.subr.mxu0 0.0
  %2830 = vmatpush2.xpose.msra.mxu0 0.0
  %2831 = vmatprep.subr.mxu0 0.0
  %2832 = vmatpush2.xpose.msra.mxu0 0.0
  %2833 = vmatprep.subr.mxu0 0.0
  %2834 = vmatpush2.xpose.msra.mxu0 0.0
  %2835 = vmatprep.subr.mxu0 0.0
  %2836 = vmatpush2.xpose.msra.mxu0 0.0
  %2837 = vmatprep.subr.mxu0 0.0
  %2838 = vmatpush2.xpose.msra.mxu0 0.0
  %2839 = vmatprep.subr.mxu0 0.0
  %2840 = vmatpush2.xpose.msra.mxu0 0.0
  %2841 = vmatprep.subr.mxu0 0.0
  %2842 = vmatpush2.xpose.msra.mxu0 0.0
  %2843 = vmatprep.subr.mxu0 0.0
  %2844 = vmatpush2.xpose.msra.mxu0 0.0
  %2845 = vmatprep.subr.mxu0 0.0
  %2846 = vmatpush2.xpose.msra.mxu0 0.0
  %2847 = vmatprep.subr.mxu0 0.0
  %2848 = vmatpush2.xpose.msra.mxu0 0.0
  %2849 = vmatprep.subr.mxu0 0.0
  %2850 = vmatpush2.xpose.msra.mxu0 0.0
  %2851 = vmatprep.subr.mxu0 0.0
  %2852 = vmatpush2.xpose.msra.mxu0 0.0
  %2853 = vmatprep.subr.mxu0 0.0
  %2854 = vmatpush2.xpose.msra.mxu0 0.0
  %2855 = vmatprep.mubr.f32.mxu0 0.0
  %2856 = vmatmul.mubr.f32.gmra.mxu0 %v2662
  %v2857 = vpop.f32.mrf.mxu0
  %v2858 = vadd.f32 %v310, %v2857
  %v2859 = vpop.f32.mrf.mxu0
  %2860 = vmatprep.mubr.f32.mxu0 0.0
  %2861 = vmatmul.mubr.f32.gmra.mxu0 %v2665
  %v2862 = vpop.f32.mrf.mxu0
  %v2863 = vadd.f32 %v311, %v2862
  %v2864 = vpop.f32.mrf.mxu0
  %2865 = vmatprep.mubr.f32.mxu0 0.0
  %2866 = vmatmul.mubr.f32.gmra.mxu0 %v2668
  %v2867 = vpop.f32.mrf.mxu0
  %v2868 = vadd.f32 %v312, %v2867
  %v2869 = vpop.f32.mrf.mxu0
  %2870 = vmatprep.mubr.f32.mxu0 0.0
  %2871 = vmatmul.mubr.f32.gmra.mxu0 %v2671
  %v2872 = vpop.f32.mrf.mxu0
  %v2873 = vadd.f32 %v313, %v2872
  %v2874 = vpop.f32.mrf.mxu0
  %2875 = vmatprep.mubr.f32.mxu0 0.0
  %2876 = vmatmul.mubr.f32.gmra.mxu0 %v2674
  %v2877 = vpop.f32.mrf.mxu0
  %v2878 = vadd.f32 %v314, %v2877
  %v2879 = vpop.f32.mrf.mxu0
  %2880 = vmatprep.mubr.f32.mxu0 0.0
  %2881 = vmatmul.mubr.f32.gmra.mxu0 %v2677
  %v2882 = vpop.f32.mrf.mxu0
  %v2883 = vadd.f32 %v310, %v2882
  %v2884 = vpop.f32.mrf.mxu0
  %2885 = vmatprep.mubr.f32.mxu0 0.0
  %2886 = vmatmul.mubr.f32.gmra.mxu0 %v2680
  %v2887 = vpop.f32.mrf.mxu0
  %v2888 = vadd.f32 %v311, %v2887
  %v2889 = vpop.f32.mrf.mxu0
  %2890 = vmatprep.mubr.f32.mxu0 0.0
  %2891 = vmatmul.mubr.f32.gmra.mxu0 %v2683
  %v2892 = vpop.f32.mrf.mxu0
  %v2893 = vadd.f32 %v312, %v2892
  %v2894 = vpop.f32.mrf.mxu0
  %2895 = vmatprep.mubr.f32.mxu0 0.0
  %2896 = vmatmul.mubr.f32.gmra.mxu0 %v2686
  %v2897 = vpop.f32.mrf.mxu0
  %v2898 = vadd.f32 %v313, %v2897
  %v2899 = vpop.f32.mrf.mxu0
  %2900 = vmatprep.mubr.f32.mxu0 0.0
  %2901 = vmatmul.mubr.f32.gmra.mxu0 %v2689
  %v2902 = vpop.f32.mrf.mxu0
  %v2903 = vadd.f32 %v314, %v2902
  %v2904 = vpop.f32.mrf.mxu0
  %2905 = vmatprep.mubr.f32.mxu0 0.0
  %2906 = vmatmul.mubr.f32.gmra.mxu0 %v2692
  %v2907 = vpop.f32.mrf.mxu0
  %v2908 = vadd.f32 %v310, %v2907
  %v2909 = vpop.f32.mrf.mxu0
  %2910 = vmatprep.mubr.f32.mxu0 0.0
  %2911 = vmatmul.mubr.f32.gmra.mxu0 %v2695
  %v2912 = vpop.f32.mrf.mxu0
  %v2913 = vadd.f32 %v311, %v2912
  %v2914 = vpop.f32.mrf.mxu0
  %2915 = vmatprep.mubr.f32.mxu0 0.0
  %2916 = vmatmul.mubr.f32.gmra.mxu0 %v2698
  %v2917 = vpop.f32.mrf.mxu0
  %v2918 = vadd.f32 %v312, %v2917
  %v2919 = vpop.f32.mrf.mxu0
  %2920 = vmatprep.mubr.f32.mxu0 0.0
  %2921 = vmatmul.mubr.f32.gmra.mxu0 %v2701
  %v2922 = vpop.f32.mrf.mxu0
  %v2923 = vadd.f32 %v313, %v2922
  %v2924 = vpop.f32.mrf.mxu0
  %2925 = vmatprep.mubr.f32.mxu0 0.0
  %2926 = vmatmul.mubr.f32.gmra.mxu0 %v2704
  %v2927 = vpop.f32.mrf.mxu0
  %v2928 = vadd.f32 %v314, %v2927
  %v2929 = vpop.f32.mrf.mxu0
  %2930 = vmatprep.mubr.f32.mxu0 0.0
  %2931 = vmatmul.mubr.f32.gmra.mxu0 %v2707
  %v2932 = vpop.f32.mrf.mxu0
  %v2933 = vadd.f32 %v310, %v2932
  %v2934 = vpop.f32.mrf.mxu0
  %2935 = vmatprep.mubr.f32.mxu0 0.0
  %2936 = vmatmul.mubr.f32.gmra.mxu0 %v2710
  %v2937 = vpop.f32.mrf.mxu0
  %v2938 = vadd.f32 %v311, %v2937
  %v2939 = vpop.f32.mrf.mxu0
  %2940 = vmatprep.mubr.f32.mxu0 0.0
  %2941 = vmatmul.mubr.f32.gmra.mxu0 %v2713
  %v2942 = vpop.f32.mrf.mxu0
  %v2943 = vadd.f32 %v312, %v2942
  %v2944 = vpop.f32.mrf.mxu0
  %2945 = vmatprep.mubr.f32.mxu0 0.0
  %2946 = vmatmul.mubr.f32.gmra.mxu0 %v2716
  %v2947 = vpop.f32.mrf.mxu0
  %v2948 = vadd.f32 %v313, %v2947
  %v2949 = vpop.f32.mrf.mxu0
  %2950 = vmatprep.mubr.f32.mxu0 0.0
  %2951 = vmatmul.mubr.f32.gmra.mxu0 %v2719
  %v2952 = vpop.f32.mrf.mxu0
  %v2953 = vadd.f32 %v314, %v2952
  %v2954 = vpop.f32.mrf.mxu0
  %2955 = vmatprep.mubr.f32.mxu0 0.0
  %2956 = vmatmul.mubr.f32.gmra.mxu0 %v2722
  %v2957 = vpop.f32.mrf.mxu0
  %v2958 = vadd.f32 %v310, %v2957
  %v2959 = vpop.f32.mrf.mxu0
  %2960 = vmatprep.mubr.f32.mxu0 0.0
  %2961 = vmatmul.mubr.f32.gmra.mxu0 %v2725
  %v2962 = vpop.f32.mrf.mxu0
  %v2963 = vadd.f32 %v311, %v2962
  %v2964 = vpop.f32.mrf.mxu0
  %2965 = vmatprep.mubr.f32.mxu0 0.0
  %2966 = vmatmul.mubr.f32.gmra.mxu0 %v2728
  %v2967 = vpop.f32.mrf.mxu0
  %v2968 = vadd.f32 %v312, %v2967
  %v2969 = vpop.f32.mrf.mxu0
  %2970 = vmatprep.mubr.f32.mxu0 0.0
  %2971 = vmatmul.mubr.f32.gmra.mxu0 %v2731
  %v2972 = vpop.f32.mrf.mxu0
  %v2973 = vadd.f32 %v313, %v2972
  %v2974 = vpop.f32.mrf.mxu0
  %2975 = vmatprep.mubr.f32.mxu0 0.0
  %2976 = vmatmul.mubr.f32.gmra.mxu0 %v2734
  %v2977 = vpop.f32.mrf.mxu0
  %v2978 = vadd.f32 %v314, %v2977
  %v2979 = vpop.f32.mrf.mxu0
  %2980 = vmatprep.mubr.f32.mxu0 0.0
  %2981 = vmatmul.mubr.f32.gmra.mxu0 %v2737
  %v2982 = vpop.f32.mrf.mxu0
  %v2983 = vadd.f32 %v310, %v2982
  %v2984 = vpop.f32.mrf.mxu0
  %2985 = vmatprep.mubr.f32.mxu0 0.0
  %2986 = vmatmul.mubr.f32.gmra.mxu0 %v2740
  %v2987 = vpop.f32.mrf.mxu0
  %v2988 = vadd.f32 %v311, %v2987
  %v2989 = vpop.f32.mrf.mxu0
  %2990 = vmatprep.mubr.f32.mxu0 0.0
  %2991 = vmatmul.mubr.f32.gmra.mxu0 %v2743
  %v2992 = vpop.f32.mrf.mxu0
  %v2993 = vadd.f32 %v312, %v2992
  %v2994 = vpop.f32.mrf.mxu0
  %2995 = vmatprep.mubr.f32.mxu0 0.0
  %2996 = vmatmul.mubr.f32.gmra.mxu0 %v2746
  %v2997 = vpop.f32.mrf.mxu0
  %v2998 = vadd.f32 %v313, %v2997
  %v2999 = vpop.f32.mrf.mxu0
  %3000 = vmatprep.mubr.f32.mxu0 0.0
  %3001 = vmatmul.mubr.f32.gmra.mxu0 %v2749
  %v3002 = vpop.f32.mrf.mxu0
  %v3003 = vadd.f32 %v314, %v3002
  %v3004 = vpop.f32.mrf.mxu0
  %3005 = vmatprep.mubr.f32.mxu0 0.0
  %3006 = vmatmul.mubr.f32.gmra.mxu0 %v2752
  %v3007 = vpop.f32.mrf.mxu0
  %v3008 = vadd.f32 %v310, %v3007
  %v3009 = vpop.f32.mrf.mxu0
  %3010 = vmatprep.mubr.f32.mxu0 0.0
  %3011 = vmatmul.mubr.f32.gmra.mxu0 %v2755
  %v3012 = vpop.f32.mrf.mxu0
  %v3013 = vadd.f32 %v311, %v3012
  %v3014 = vpop.f32.mrf.mxu0
  %3015 = vmatprep.mubr.f32.mxu0 0.0
  %3016 = vmatmul.mubr.f32.gmra.mxu0 %v2758
  %v3017 = vpop.f32.mrf.mxu0
  %v3018 = vadd.f32 %v312, %v3017
  %v3019 = vpop.f32.mrf.mxu0
  %3020 = vmatprep.mubr.f32.mxu0 0.0
  %3021 = vmatmul.mubr.f32.gmra.mxu0 %v2761
  %v3022 = vpop.f32.mrf.mxu0
  %v3023 = vadd.f32 %v313, %v3022
  %v3024 = vpop.f32.mrf.mxu0
  %3025 = vmatprep.mubr.f32.mxu0 0.0
  %3026 = vmatmul.mubr.f32.gmra.mxu0 %v2764
  %v3027 = vpop.f32.mrf.mxu0
  %v3028 = vadd.f32 %v314, %v3027
  %v3029 = vpop.f32.mrf.mxu0
  %3030 = vmatprep.mubr.f32.mxu0 0.0
  %3031 = vmatmul.mubr.f32.gmra.mxu0 %v2767
  %v3032 = vpop.f32.mrf.mxu0
  %v3033 = vadd.f32 %v310, %v3032
  %v3034 = vpop.f32.mrf.mxu0
  %3035 = vmatprep.mubr.f32.mxu0 0.0
  %3036 = vmatmul.mubr.f32.gmra.mxu0 %v2770
  %v3037 = vpop.f32.mrf.mxu0
  %v3038 = vadd.f32 %v311, %v3037
  %v3039 = vpop.f32.mrf.mxu0
  %3040 = vmatprep.mubr.f32.mxu0 0.0
  %3041 = vmatmul.mubr.f32.gmra.mxu0 %v2773
  %v3042 = vpop.f32.mrf.mxu0
  %v3043 = vadd.f32 %v312, %v3042
  %v3044 = vpop.f32.mrf.mxu0
  %3045 = vmatprep.mubr.f32.mxu0 0.0
  %3046 = vmatmul.mubr.f32.gmra.mxu0 %v2776
  %v3047 = vpop.f32.mrf.mxu0
  %v3048 = vadd.f32 %v313, %v3047
  %v3049 = vpop.f32.mrf.mxu0
  %3050 = vmatprep.mubr.f32.mxu0 0.0
  %3051 = vmatmul.mubr.f32.gmra.mxu0 %v2779
  %v3052 = vpop.f32.mrf.mxu0
  %v3053 = vadd.f32 %v314, %v3052
  %v3054 = vpop.f32.mrf.mxu0
  %3055 = vdwg.mxu0
  %v3056 = vsel %vm972, %v2858, -inf
  %3057 = vmax.xlane.f32.xlu0 %v3056
  %v3058 = vpop.xlane.xlu0 %3057
  %v3059 = vsel %vm972, %v2863, -inf
  %3060 = vmax.xlane.f32.xlu0 %v3059
  %v3061 = vpop.xlane.xlu0 %3060
  %v3062 = vsel %vm972, %v2868, -inf
  %3063 = vmax.xlane.f32.xlu0 %v3062
  %v3064 = vpop.xlane.xlu0 %3063
  %v3065 = vsel %vm972, %v2873, -inf
  %3066 = vmax.xlane.f32.xlu0 %v3065
  %v3067 = vpop.xlane.xlu0 %3066
  %v3068 = vsel %vm972, %v2878, -inf
  %3069 = vmax.xlane.f32.xlu0 %v3068
  %v3070 = vpop.xlane.xlu0 %3069
  %v3071 = vsel %vm972, %v2883, -inf
  %3072 = vmax.xlane.f32.xlu0 %v3071
  %v3073 = vpop.xlane.xlu0 %3072
  %v3074 = vsel %vm972, %v2888, -inf
  %3075 = vmax.xlane.f32.xlu0 %v3074
  %v3076 = vpop.xlane.xlu0 %3075
  %v3077 = vsel %vm972, %v2893, -inf
  %3078 = vmax.xlane.f32.xlu0 %v3077
  %v3079 = vpop.xlane.xlu0 %3078
  %v3080 = vsel %vm972, %v2898, -inf
  %3081 = vmax.xlane.f32.xlu0 %v3080
  %v3082 = vpop.xlane.xlu0 %3081
  %v3083 = vsel %vm972, %v2903, -inf
  %3084 = vmax.xlane.f32.xlu0 %v3083
  %v3085 = vpop.xlane.xlu0 %3084
  %v3086 = vsel %vm972, %v2908, -inf
  %3087 = vmax.xlane.f32.xlu0 %v3086
  %v3088 = vpop.xlane.xlu0 %3087
  %v3089 = vsel %vm972, %v2913, -inf
  %3090 = vmax.xlane.f32.xlu0 %v3089
  %v3091 = vpop.xlane.xlu0 %3090
  %v3092 = vsel %vm972, %v2918, -inf
  %3093 = vmax.xlane.f32.xlu0 %v3092
  %v3094 = vpop.xlane.xlu0 %3093
  %v3095 = vsel %vm972, %v2923, -inf
  %3096 = vmax.xlane.f32.xlu0 %v3095
  %v3097 = vpop.xlane.xlu0 %3096
  %v3098 = vsel %vm972, %v2928, -inf
  %3099 = vmax.xlane.f32.xlu0 %v3098
  %v3100 = vpop.xlane.xlu0 %3099
  %v3101 = vsel %vm972, %v2933, -inf
  %3102 = vmax.xlane.f32.xlu0 %v3101
  %v3103 = vpop.xlane.xlu0 %3102
  %v3104 = vsel %vm972, %v2938, -inf
  %3105 = vmax.xlane.f32.xlu0 %v3104
  %v3106 = vpop.xlane.xlu0 %3105
  %v3107 = vsel %vm972, %v2943, -inf
  %3108 = vmax.xlane.f32.xlu0 %v3107
  %v3109 = vpop.xlane.xlu0 %3108
  %v3110 = vsel %vm972, %v2948, -inf
  %3111 = vmax.xlane.f32.xlu0 %v3110
  %v3112 = vpop.xlane.xlu0 %3111
  %v3113 = vsel %vm972, %v2953, -inf
  %3114 = vmax.xlane.f32.xlu0 %v3113
  %v3115 = vpop.xlane.xlu0 %3114
  %v3116 = vsel %vm972, %v2958, -inf
  %3117 = vmax.xlane.f32.xlu0 %v3116
  %v3118 = vpop.xlane.xlu0 %3117
  %v3119 = vsel %vm972, %v2963, -inf
  %3120 = vmax.xlane.f32.xlu0 %v3119
  %v3121 = vpop.xlane.xlu0 %3120
  %v3122 = vsel %vm972, %v2968, -inf
  %3123 = vmax.xlane.f32.xlu0 %v3122
  %v3124 = vpop.xlane.xlu0 %3123
  %v3125 = vsel %vm972, %v2973, -inf
  %3126 = vmax.xlane.f32.xlu0 %v3125
  %v3127 = vpop.xlane.xlu0 %3126
  %v3128 = vsel %vm972, %v2978, -inf
  %3129 = vmax.xlane.f32.xlu0 %v3128
  %v3130 = vpop.xlane.xlu0 %3129
  %v3131 = vsel %vm972, %v2983, -inf
  %3132 = vmax.xlane.f32.xlu0 %v3131
  %v3133 = vpop.xlane.xlu0 %3132
  %v3134 = vsel %vm972, %v2988, -inf
  %3135 = vmax.xlane.f32.xlu0 %v3134
  %v3136 = vpop.xlane.xlu0 %3135
  %v3137 = vsel %vm972, %v2993, -inf
  %3138 = vmax.xlane.f32.xlu0 %v3137
  %v3139 = vpop.xlane.xlu0 %3138
  %v3140 = vsel %vm972, %v2998, -inf
  %3141 = vmax.xlane.f32.xlu0 %v3140
  %v3142 = vpop.xlane.xlu0 %3141
  %v3143 = vsel %vm972, %v3003, -inf
  %3144 = vmax.xlane.f32.xlu0 %v3143
  %v3145 = vpop.xlane.xlu0 %3144
  %v3146 = vsel %vm972, %v3008, -inf
  %3147 = vmax.xlane.f32.xlu0 %v3146
  %v3148 = vpop.xlane.xlu0 %3147
  %v3149 = vsel %vm972, %v3013, -inf
  %3150 = vmax.xlane.f32.xlu0 %v3149
  %v3151 = vpop.xlane.xlu0 %3150
  %v3152 = vsel %vm972, %v3018, -inf
  %3153 = vmax.xlane.f32.xlu0 %v3152
  %v3154 = vpop.xlane.xlu0 %3153
  %v3155 = vsel %vm972, %v3023, -inf
  %3156 = vmax.xlane.f32.xlu0 %v3155
  %v3157 = vpop.xlane.xlu0 %3156
  %v3158 = vsel %vm972, %v3028, -inf
  %3159 = vmax.xlane.f32.xlu0 %v3158
  %v3160 = vpop.xlane.xlu0 %3159
  %v3161 = vsel %vm972, %v3033, -inf
  %3162 = vmax.xlane.f32.xlu0 %v3161
  %v3163 = vpop.xlane.xlu0 %3162
  %v3164 = vsel %vm972, %v3038, -inf
  %3165 = vmax.xlane.f32.xlu0 %v3164
  %v3166 = vpop.xlane.xlu0 %3165
  %v3167 = vsel %vm972, %v3043, -inf
  %3168 = vmax.xlane.f32.xlu0 %v3167
  %v3169 = vpop.xlane.xlu0 %3168
  %v3170 = vsel %vm972, %v3048, -inf
  %3171 = vmax.xlane.f32.xlu0 %v3170
  %v3172 = vpop.xlane.xlu0 %3171
  %v3173 = vsel %vm972, %v3053, -inf
  %3174 = vmax.xlane.f32.xlu0 %v3173
  %v3175 = vpop.xlane.xlu0 %3174
  %v3176 = vsub.f32 %v2858, %v3058
  %v3177 = vsub.f32 %v2863, %v3061
  %v3178 = vsub.f32 %v2868, %v3064
  %v3179 = vsub.f32 %v2873, %v3067
  %v3180 = vsub.f32 %v2878, %v3070
  %v3181 = vsub.f32 %v2883, %v3073
  %v3182 = vsub.f32 %v2888, %v3076
  %v3183 = vsub.f32 %v2893, %v3079
  %v3184 = vsub.f32 %v2898, %v3082
  %v3185 = vsub.f32 %v2903, %v3085
  %v3186 = vsub.f32 %v2908, %v3088
  %v3187 = vsub.f32 %v2913, %v3091
  %v3188 = vsub.f32 %v2918, %v3094
  %v3189 = vsub.f32 %v2923, %v3097
  %v3190 = vsub.f32 %v2928, %v3100
  %v3191 = vsub.f32 %v2933, %v3103
  %v3192 = vsub.f32 %v2938, %v3106
  %v3193 = vsub.f32 %v2943, %v3109
  %v3194 = vsub.f32 %v2948, %v3112
  %v3195 = vsub.f32 %v2953, %v3115
  %v3196 = vsub.f32 %v2958, %v3118
  %v3197 = vsub.f32 %v2963, %v3121
  %v3198 = vsub.f32 %v2968, %v3124
  %v3199 = vsub.f32 %v2973, %v3127
  %v3200 = vsub.f32 %v2978, %v3130
  %v3201 = vsub.f32 %v2983, %v3133
  %v3202 = vsub.f32 %v2988, %v3136
  %v3203 = vsub.f32 %v2993, %v3139
  %v3204 = vsub.f32 %v2998, %v3142
  %v3205 = vsub.f32 %v3003, %v3145
  %v3206 = vsub.f32 %v3008, %v3148
  %v3207 = vsub.f32 %v3013, %v3151
  %v3208 = vsub.f32 %v3018, %v3154
  %v3209 = vsub.f32 %v3023, %v3157
  %v3210 = vsub.f32 %v3028, %v3160
  %v3211 = vsub.f32 %v3033, %v3163
  %v3212 = vsub.f32 %v3038, %v3166
  %v3213 = vsub.f32 %v3043, %v3169
  %v3214 = vsub.f32 %v3048, %v3172
  %v3215 = vsub.f32 %v3053, %v3175
  %v3216 = vmul.f32 %v3176, 1.442695
  %v3217 = vpow.pop %v3216
  %v3218 = vmul.f32 %v3177, 1.442695
  %v3219 = vpow.pop %v3218
  %v3220 = vmul.f32 %v3178, 1.442695
  %v3221 = vpow.pop %v3220
  %v3222 = vmul.f32 %v3179, 1.442695
  %v3223 = vpow.pop %v3222
  %v3224 = vmul.f32 %v3180, 1.442695
  %v3225 = vpow.pop %v3224
  %v3226 = vmul.f32 %v3181, 1.442695
  %v3227 = vpow.pop %v3226
  %v3228 = vmul.f32 %v3182, 1.442695
  %v3229 = vpow.pop %v3228
  %v3230 = vmul.f32 %v3183, 1.442695
  %v3231 = vpow.pop %v3230
  %v3232 = vmul.f32 %v3184, 1.442695
  %v3233 = vpow.pop %v3232
  %v3234 = vmul.f32 %v3185, 1.442695
  %v3235 = vpow.pop %v3234
  %v3236 = vmul.f32 %v3186, 1.442695
  %v3237 = vpow.pop %v3236
  %v3238 = vmul.f32 %v3187, 1.442695
  %v3239 = vpow.pop %v3238
  %v3240 = vmul.f32 %v3188, 1.442695
  %v3241 = vpow.pop %v3240
  %v3242 = vmul.f32 %v3189, 1.442695
  %v3243 = vpow.pop %v3242
  %v3244 = vmul.f32 %v3190, 1.442695
  %v3245 = vpow.pop %v3244
  %v3246 = vmul.f32 %v3191, 1.442695
  %v3247 = vpow.pop %v3246
  %v3248 = vmul.f32 %v3192, 1.442695
  %v3249 = vpow.pop %v3248
  %v3250 = vmul.f32 %v3193, 1.442695
  %v3251 = vpow.pop %v3250
  %v3252 = vmul.f32 %v3194, 1.442695
  %v3253 = vpow.pop %v3252
  %v3254 = vmul.f32 %v3195, 1.442695
  %v3255 = vpow.pop %v3254
  %v3256 = vmul.f32 %v3196, 1.442695
  %v3257 = vpow.pop %v3256
  %v3258 = vmul.f32 %v3197, 1.442695
  %v3259 = vpow.pop %v3258
  %v3260 = vmul.f32 %v3198, 1.442695
  %v3261 = vpow.pop %v3260
  %v3262 = vmul.f32 %v3199, 1.442695
  %v3263 = vpow.pop %v3262
  %v3264 = vmul.f32 %v3200, 1.442695
  %v3265 = vpow.pop %v3264
  %v3266 = vmul.f32 %v3201, 1.442695
  %v3267 = vpow.pop %v3266
  %v3268 = vmul.f32 %v3202, 1.442695
  %v3269 = vpow.pop %v3268
  %v3270 = vmul.f32 %v3203, 1.442695
  %v3271 = vpow.pop %v3270
  %v3272 = vmul.f32 %v3204, 1.442695
  %v3273 = vpow.pop %v3272
  %v3274 = vmul.f32 %v3205, 1.442695
  %v3275 = vpow.pop %v3274
  %v3276 = vmul.f32 %v3206, 1.442695
  %v3277 = vpow.pop %v3276
  %v3278 = vmul.f32 %v3207, 1.442695
  %v3279 = vpow.pop %v3278
  %v3280 = vmul.f32 %v3208, 1.442695
  %v3281 = vpow.pop %v3280
  %v3282 = vmul.f32 %v3209, 1.442695
  %v3283 = vpow.pop %v3282
  %v3284 = vmul.f32 %v3210, 1.442695
  %v3285 = vpow.pop %v3284
  %v3286 = vmul.f32 %v3211, 1.442695
  %v3287 = vpow.pop %v3286
  %v3288 = vmul.f32 %v3212, 1.442695
  %v3289 = vpow.pop %v3288
  %v3290 = vmul.f32 %v3213, 1.442695
  %v3291 = vpow.pop %v3290
  %v3292 = vmul.f32 %v3214, 1.442695
  %v3293 = vpow.pop %v3292
  %v3294 = vmul.f32 %v3215, 1.442695
  %v3295 = vpow.pop %v3294
  %v3296 = vsel %vm972, %v3217, 0.0
  %3297 = vadd.xlane.f32.xlu0 %v3296
  %v3298 = vpop.xlane.xlu0 %3297
  %v3299 = vsel %vm972, %v3219, 0.0
  %3300 = vadd.xlane.f32.xlu0 %v3299
  %v3301 = vpop.xlane.xlu0 %3300
  %v3302 = vsel %vm972, %v3221, 0.0
  %3303 = vadd.xlane.f32.xlu0 %v3302
  %v3304 = vpop.xlane.xlu0 %3303
  %v3305 = vsel %vm972, %v3223, 0.0
  %3306 = vadd.xlane.f32.xlu0 %v3305
  %v3307 = vpop.xlane.xlu0 %3306
  %v3308 = vsel %vm972, %v3225, 0.0
  %3309 = vadd.xlane.f32.xlu0 %v3308
  %v3310 = vpop.xlane.xlu0 %3309
  %v3311 = vsel %vm972, %v3227, 0.0
  %3312 = vadd.xlane.f32.xlu0 %v3311
  %v3313 = vpop.xlane.xlu0 %3312
  %v3314 = vsel %vm972, %v3229, 0.0
  %3315 = vadd.xlane.f32.xlu0 %v3314
  %v3316 = vpop.xlane.xlu0 %3315
  %v3317 = vsel %vm972, %v3231, 0.0
  %3318 = vadd.xlane.f32.xlu0 %v3317
  %v3319 = vpop.xlane.xlu0 %3318
  %v3320 = vsel %vm972, %v3233, 0.0
  %3321 = vadd.xlane.f32.xlu0 %v3320
  %v3322 = vpop.xlane.xlu0 %3321
  %v3323 = vsel %vm972, %v3235, 0.0
  %3324 = vadd.xlane.f32.xlu0 %v3323
  %v3325 = vpop.xlane.xlu0 %3324
  %v3326 = vsel %vm972, %v3237, 0.0
  %3327 = vadd.xlane.f32.xlu0 %v3326
  %v3328 = vpop.xlane.xlu0 %3327
  %v3329 = vsel %vm972, %v3239, 0.0
  %3330 = vadd.xlane.f32.xlu0 %v3329
  %v3331 = vpop.xlane.xlu0 %3330
  %v3332 = vsel %vm972, %v3241, 0.0
  %3333 = vadd.xlane.f32.xlu0 %v3332
  %v3334 = vpop.xlane.xlu0 %3333
  %v3335 = vsel %vm972, %v3243, 0.0
  %3336 = vadd.xlane.f32.xlu0 %v3335
  %v3337 = vpop.xlane.xlu0 %3336
  %v3338 = vsel %vm972, %v3245, 0.0
  %3339 = vadd.xlane.f32.xlu0 %v3338
  %v3340 = vpop.xlane.xlu0 %3339
  %v3341 = vsel %vm972, %v3247, 0.0
  %3342 = vadd.xlane.f32.xlu0 %v3341
  %v3343 = vpop.xlane.xlu0 %3342
  %v3344 = vsel %vm972, %v3249, 0.0
  %3345 = vadd.xlane.f32.xlu0 %v3344
  %v3346 = vpop.xlane.xlu0 %3345
  %v3347 = vsel %vm972, %v3251, 0.0
  %3348 = vadd.xlane.f32.xlu0 %v3347
  %v3349 = vpop.xlane.xlu0 %3348
  %v3350 = vsel %vm972, %v3253, 0.0
  %3351 = vadd.xlane.f32.xlu0 %v3350
  %v3352 = vpop.xlane.xlu0 %3351
  %v3353 = vsel %vm972, %v3255, 0.0
  %3354 = vadd.xlane.f32.xlu0 %v3353
  %v3355 = vpop.xlane.xlu0 %3354
  %v3356 = vsel %vm972, %v3257, 0.0
  %3357 = vadd.xlane.f32.xlu0 %v3356
  %v3358 = vpop.xlane.xlu0 %3357
  %v3359 = vsel %vm972, %v3259, 0.0
  %3360 = vadd.xlane.f32.xlu0 %v3359
  %v3361 = vpop.xlane.xlu0 %3360
  %v3362 = vsel %vm972, %v3261, 0.0
  %3363 = vadd.xlane.f32.xlu0 %v3362
  %v3364 = vpop.xlane.xlu0 %3363
  %v3365 = vsel %vm972, %v3263, 0.0
  %3366 = vadd.xlane.f32.xlu0 %v3365
  %v3367 = vpop.xlane.xlu0 %3366
  %v3368 = vsel %vm972, %v3265, 0.0
  %3369 = vadd.xlane.f32.xlu0 %v3368
  %v3370 = vpop.xlane.xlu0 %3369
  %v3371 = vsel %vm972, %v3267, 0.0
  %3372 = vadd.xlane.f32.xlu0 %v3371
  %v3373 = vpop.xlane.xlu0 %3372
  %v3374 = vsel %vm972, %v3269, 0.0
  %3375 = vadd.xlane.f32.xlu0 %v3374
  %v3376 = vpop.xlane.xlu0 %3375
  %v3377 = vsel %vm972, %v3271, 0.0
  %3378 = vadd.xlane.f32.xlu0 %v3377
  %v3379 = vpop.xlane.xlu0 %3378
  %v3380 = vsel %vm972, %v3273, 0.0
  %3381 = vadd.xlane.f32.xlu0 %v3380
  %v3382 = vpop.xlane.xlu0 %3381
  %v3383 = vsel %vm972, %v3275, 0.0
  %3384 = vadd.xlane.f32.xlu0 %v3383
  %v3385 = vpop.xlane.xlu0 %3384
  %v3386 = vsel %vm972, %v3277, 0.0
  %3387 = vadd.xlane.f32.xlu0 %v3386
  %v3388 = vpop.xlane.xlu0 %3387
  %v3389 = vsel %vm972, %v3279, 0.0
  %3390 = vadd.xlane.f32.xlu0 %v3389
  %v3391 = vpop.xlane.xlu0 %3390
  %v3392 = vsel %vm972, %v3281, 0.0
  %3393 = vadd.xlane.f32.xlu0 %v3392
  %v3394 = vpop.xlane.xlu0 %3393
  %v3395 = vsel %vm972, %v3283, 0.0
  %3396 = vadd.xlane.f32.xlu0 %v3395
  %v3397 = vpop.xlane.xlu0 %3396
  %v3398 = vsel %vm972, %v3285, 0.0
  %3399 = vadd.xlane.f32.xlu0 %v3398
  %v3400 = vpop.xlane.xlu0 %3399
  %v3401 = vsel %vm972, %v3287, 0.0
  %3402 = vadd.xlane.f32.xlu0 %v3401
  %v3403 = vpop.xlane.xlu0 %3402
  %v3404 = vsel %vm972, %v3289, 0.0
  %3405 = vadd.xlane.f32.xlu0 %v3404
  %v3406 = vpop.xlane.xlu0 %3405
  %v3407 = vsel %vm972, %v3291, 0.0
  %3408 = vadd.xlane.f32.xlu0 %v3407
  %v3409 = vpop.xlane.xlu0 %3408
  %v3410 = vsel %vm972, %v3293, 0.0
  %3411 = vadd.xlane.f32.xlu0 %v3410
  %v3412 = vpop.xlane.xlu0 %3411
  %v3413 = vsel %vm972, %v3295, 0.0
  %3414 = vadd.xlane.f32.xlu0 %v3413
  %v3415 = vpop.xlane.xlu0 %3414
  %v3416 = vrcp.pop %v3298
  %v3417 = vrcp.pop %v3301
  %v3418 = vrcp.pop %v3304
  %v3419 = vrcp.pop %v3307
  %v3420 = vrcp.pop %v3310
  %v3421 = vrcp.pop %v3313
  %v3422 = vrcp.pop %v3316
  %v3423 = vrcp.pop %v3319
  %v3424 = vrcp.pop %v3322
  %v3425 = vrcp.pop %v3325
  %v3426 = vrcp.pop %v3328
  %v3427 = vrcp.pop %v3331
  %v3428 = vrcp.pop %v3334
  %v3429 = vrcp.pop %v3337
  %v3430 = vrcp.pop %v3340
  %v3431 = vrcp.pop %v3343
  %v3432 = vrcp.pop %v3346
  %v3433 = vrcp.pop %v3349
  %v3434 = vrcp.pop %v3352
  %v3435 = vrcp.pop %v3355
  %v3436 = vrcp.pop %v3358
  %v3437 = vrcp.pop %v3361
  %v3438 = vrcp.pop %v3364
  %v3439 = vrcp.pop %v3367
  %v3440 = vrcp.pop %v3370
  %v3441 = vrcp.pop %v3373
  %v3442 = vrcp.pop %v3376
  %v3443 = vrcp.pop %v3379
  %v3444 = vrcp.pop %v3382
  %v3445 = vrcp.pop %v3385
  %v3446 = vrcp.pop %v3388
  %v3447 = vrcp.pop %v3391
  %v3448 = vrcp.pop %v3394
  %v3449 = vrcp.pop %v3397
  %v3450 = vrcp.pop %v3400
  %v3451 = vrcp.pop %v3403
  %v3452 = vrcp.pop %v3406
  %v3453 = vrcp.pop %v3409
  %v3454 = vrcp.pop %v3412
  %v3455 = vrcp.pop %v3415
  %v3456 = vmul.f32 %v3416, 0.17677669
  %v3457 = vmul.f32 %v3417, 0.17677669
  %v3458 = vmul.f32 %v3418, 0.17677669
  %v3459 = vmul.f32 %v3419, 0.17677669
  %v3460 = vmul.f32 %v3420, 0.17677669
  %v3461 = vmul.f32 %v3421, 0.17677669
  %v3462 = vmul.f32 %v3422, 0.17677669
  %v3463 = vmul.f32 %v3423, 0.17677669
  %v3464 = vmul.f32 %v3424, 0.17677669
  %v3465 = vmul.f32 %v3425, 0.17677669
  %v3466 = vmul.f32 %v3426, 0.17677669
  %v3467 = vmul.f32 %v3427, 0.17677669
  %v3468 = vmul.f32 %v3428, 0.17677669
  %v3469 = vmul.f32 %v3429, 0.17677669
  %v3470 = vmul.f32 %v3430, 0.17677669
  %v3471 = vmul.f32 %v3431, 0.17677669
  %v3472 = vmul.f32 %v3432, 0.17677669
  %v3473 = vmul.f32 %v3433, 0.17677669
  %v3474 = vmul.f32 %v3434, 0.17677669
  %v3475 = vmul.f32 %v3435, 0.17677669
  %v3476 = vmul.f32 %v3436, 0.17677669
  %v3477 = vmul.f32 %v3437, 0.17677669
  %v3478 = vmul.f32 %v3438, 0.17677669
  %v3479 = vmul.f32 %v3439, 0.17677669
  %v3480 = vmul.f32 %v3440, 0.17677669
  %v3481 = vmul.f32 %v3441, 0.17677669
  %v3482 = vmul.f32 %v3442, 0.17677669
  %v3483 = vmul.f32 %v3443, 0.17677669
  %v3484 = vmul.f32 %v3444, 0.17677669
  %v3485 = vmul.f32 %v3445, 0.17677669
  %v3486 = vmul.f32 %v3446, 0.17677669
  %v3487 = vmul.f32 %v3447, 0.17677669
  %v3488 = vmul.f32 %v3448, 0.17677669
  %v3489 = vmul.f32 %v3449, 0.17677669
  %v3490 = vmul.f32 %v3450, 0.17677669
  %v3491 = vmul.f32 %v3451, 0.17677669
  %v3492 = vmul.f32 %v3452, 0.17677669
  %v3493 = vmul.f32 %v3453, 0.17677669
  %v3494 = vmul.f32 %v3454, 0.17677669
  %v3495 = vmul.f32 %v3455, 0.17677669
  %v3496 = vmul.f32 %v3217, %v3456
  %v3497 = vmul.f32 %v3219, %v3457
  %v3498 = vmul.f32 %v3221, %v3458
  %v3499 = vmul.f32 %v3223, %v3459
  %v3500 = vmul.f32 %v3225, %v3460
  %v3501 = vmul.f32 %v3227, %v3461
  %v3502 = vmul.f32 %v3229, %v3462
  %v3503 = vmul.f32 %v3231, %v3463
  %v3504 = vmul.f32 %v3233, %v3464
  %v3505 = vmul.f32 %v3235, %v3465
  %v3506 = vmul.f32 %v3237, %v3466
  %v3507 = vmul.f32 %v3239, %v3467
  %v3508 = vmul.f32 %v3241, %v3468
  %v3509 = vmul.f32 %v3243, %v3469
  %v3510 = vmul.f32 %v3245, %v3470
  %v3511 = vmul.f32 %v3247, %v3471
  %v3512 = vmul.f32 %v3249, %v3472
  %v3513 = vmul.f32 %v3251, %v3473
  %v3514 = vmul.f32 %v3253, %v3474
  %v3515 = vmul.f32 %v3255, %v3475
  %v3516 = vmul.f32 %v3257, %v3476
  %v3517 = vmul.f32 %v3259, %v3477
  %v3518 = vmul.f32 %v3261, %v3478
  %v3519 = vmul.f32 %v3263, %v3479
  %v3520 = vmul.f32 %v3265, %v3480
  %v3521 = vmul.f32 %v3267, %v3481
  %v3522 = vmul.f32 %v3269, %v3482
  %v3523 = vmul.f32 %v3271, %v3483
  %v3524 = vmul.f32 %v3273, %v3484
  %v3525 = vmul.f32 %v3275, %v3485
  %v3526 = vmul.f32 %v3277, %v3486
  %v3527 = vmul.f32 %v3279, %v3487
  %v3528 = vmul.f32 %v3281, %v3488
  %v3529 = vmul.f32 %v3283, %v3489
  %v3530 = vmul.f32 %v3285, %v3490
  %v3531 = vmul.f32 %v3287, %v3491
  %v3532 = vmul.f32 %v3289, %v3492
  %v3533 = vmul.f32 %v3291, %v3493
  %v3534 = vmul.f32 %v3293, %v3494
  %v3535 = vmul.f32 %v3295, %v3495
  %3536 = vrot.lane.b32.xlu0 %v2583, 64
  %v3537 = vpop.permute.xlu0 %3536
  %3538 = vrot.lane.b32.xlu0 %v2588, 64
  %v3539 = vpop.permute.xlu0 %3538
  %3540 = vrot.lane.b32.xlu0 %v2593, 64
  %v3541 = vpop.permute.xlu0 %3540
  %3542 = vrot.lane.b32.xlu0 %v2598, 64
  %v3543 = vpop.permute.xlu0 %3542
  %3544 = vrot.lane.b32.xlu0 %v2603, 64
  %v3545 = vpop.permute.xlu0 %3544
  %v3552 = vsel %vm972, %v3496, 0
  %v3555 = vsel %vm972, %v3497, 0
  %v3558 = vsel %vm972, %v3498, 0
  %v3561 = vsel %vm972, %v3499, 0
  %v3564 = vsel %vm972, %v3500, 0
  %v3567 = vsel %vm972, %v3501, 0
  %v3570 = vsel %vm972, %v3502, 0
  %v3573 = vsel %vm972, %v3503, 0
  %v3576 = vsel %vm972, %v3504, 0
  %v3579 = vsel %vm972, %v3505, 0
  %v3582 = vsel %vm972, %v3506, 0
  %v3585 = vsel %vm972, %v3507, 0
  %v3588 = vsel %vm972, %v3508, 0
  %v3591 = vsel %vm972, %v3509, 0
  %v3594 = vsel %vm972, %v3510, 0
  %v3597 = vsel %vm972, %v3511, 0
  %v3600 = vsel %vm972, %v3512, 0
  %v3603 = vsel %vm972, %v3513, 0
  %v3606 = vsel %vm972, %v3514, 0
  %v3609 = vsel %vm972, %v3515, 0
  %v3612 = vsel %vm972, %v3516, 0
  %v3615 = vsel %vm972, %v3517, 0
  %v3618 = vsel %vm972, %v3518, 0
  %v3621 = vsel %vm972, %v3519, 0
  %v3624 = vsel %vm972, %v3520, 0
  %v3627 = vsel %vm972, %v3521, 0
  %v3630 = vsel %vm972, %v3522, 0
  %v3633 = vsel %vm972, %v3523, 0
  %v3636 = vsel %vm972, %v3524, 0
  %v3639 = vsel %vm972, %v3525, 0
  %v3642 = vsel %vm972, %v3526, 0
  %v3645 = vsel %vm972, %v3527, 0
  %v3648 = vsel %vm972, %v3528, 0
  %v3651 = vsel %vm972, %v3529, 0
  %v3654 = vsel %vm972, %v3530, 0
  %v3657 = vsel %vm972, %v3531, 0
  %v3660 = vsel %vm972, %v3532, 0
  %v3663 = vsel %vm972, %v3533, 0
  %v3666 = vsel %vm972, %v3534, 0
  %v3669 = vsel %vm972, %v3535, 0
  %3671 = vmatprep.subr.mxu0 0.0
  %3672 = vmatpush1.msra.mxu0 0.0
  %3673 = vmatprep.subr.mxu0 0.0
  %3674 = vmatpush1.msra.mxu0 0.0
  %3675 = vmatprep.subr.mxu0 0.0
  %3676 = vmatpush1.msra.mxu0 0.0
  %3677 = vmatprep.subr.mxu0 0.0
  %3678 = vmatpush1.msra.mxu0 0.0
  %3679 = vmatprep.subr.mxu0 0.0
  %3680 = vmatpush1.msra.mxu0 0.0
  %3681 = vmatprep.subr.mxu0 0.0
  %3682 = vmatpush1.msra.mxu0 0.0
  %3683 = vmatprep.subr.mxu0 0.0
  %3684 = vmatpush1.msra.mxu0 0.0
  %3685 = vmatprep.subr.mxu0 0.0
  %3686 = vmatpush1.msra.mxu0 0.0
  %3687 = vmatprep.subr.mxu0 0.0
  %3688 = vmatpush1.msra.mxu0 0.0
  %3689 = vmatprep.subr.mxu0 0.0
  %3690 = vmatpush1.msra.mxu0 0.0
  %3691 = vmatprep.subr.mxu0 0.0
  %3692 = vmatpush1.msra.mxu0 0.0
  %3693 = vmatprep.subr.mxu0 0.0
  %3694 = vmatpush1.msra.mxu0 %v3545
  %3695 = vmatprep.subr.mxu0 0.0
  %3696 = vmatpush1.msra.mxu0 %v3543
  %3697 = vmatprep.subr.mxu0 0.0
  %3698 = vmatpush1.msra.mxu0 %v3541
  %3699 = vmatprep.subr.mxu0 0.0
  %3700 = vmatpush1.msra.mxu0 %v3539
  %3701 = vmatprep.subr.mxu0 0.0
  %3702 = vmatpush1.msra.mxu0 %v3537
  %3703 = vmatprep.subr.mxu0 0.0
  %3704 = vmatpush2.msra.mxu0 0.0
  %3705 = vmatprep.subr.mxu0 0.0
  %3706 = vmatpush2.msra.mxu0 0.0
  %3707 = vmatprep.subr.mxu0 0.0
  %3708 = vmatpush2.msra.mxu0 0.0
  %3709 = vmatprep.subr.mxu0 0.0
  %3710 = vmatpush2.msra.mxu0 0.0
  %3711 = vmatprep.subr.mxu0 0.0
  %3712 = vmatpush2.msra.mxu0 0.0
  %3713 = vmatprep.subr.mxu0 0.0
  %3714 = vmatpush2.msra.mxu0 0.0
  %3715 = vmatprep.subr.mxu0 0.0
  %3716 = vmatpush2.msra.mxu0 0.0
  %3717 = vmatprep.subr.mxu0 0.0
  %3718 = vmatpush2.msra.mxu0 0.0
  %3719 = vmatprep.subr.mxu0 0.0
  %3720 = vmatpush2.msra.mxu0 0.0
  %3721 = vmatprep.subr.mxu0 0.0
  %3722 = vmatpush2.msra.mxu0 0.0
  %3723 = vmatprep.subr.mxu0 0.0
  %3724 = vmatpush2.msra.mxu0 0.0
  %3725 = vmatprep.subr.mxu0 0.0
  %3726 = vmatpush2.msra.mxu0 0.0
  %3727 = vmatprep.subr.mxu0 0.0
  %3728 = vmatpush2.msra.mxu0 0.0
  %3729 = vmatprep.subr.mxu0 0.0
  %3730 = vmatpush2.msra.mxu0 0.0
  %3731 = vmatprep.subr.mxu0 0.0
  %3732 = vmatpush2.msra.mxu0 0.0
  %3733 = vmatprep.subr.mxu0 0.0
  %3734 = vmatpush2.msra.mxu0 0.0
  %3735 = vmatprep.mubr.f32.mxu0 0.0
  %3736 = vmatmul.mubr.f32.gmra.mxu0 %v3552
  %v3737 = vpop.f32.mrf.mxu0
  %v3738 = vadd.f32 0.0, %v3737
  %v3739 = vpop.f32.mrf.mxu0
  %3740 = vmatprep.mubr.f32.mxu0 0.0
  %3741 = vmatmul.mubr.f32.gmra.mxu0 %v3555
  %v3742 = vpop.f32.mrf.mxu0
  %v3743 = vadd.f32 0.0, %v3742
  %v3744 = vpop.f32.mrf.mxu0
  %3745 = vmatprep.mubr.f32.mxu0 0.0
  %3746 = vmatmul.mubr.f32.gmra.mxu0 %v3558
  %v3747 = vpop.f32.mrf.mxu0
  %v3748 = vadd.f32 0.0, %v3747
  %v3749 = vpop.f32.mrf.mxu0
  %3750 = vmatprep.mubr.f32.mxu0 0.0
  %3751 = vmatmul.mubr.f32.gmra.mxu0 %v3561
  %v3752 = vpop.f32.mrf.mxu0
  %v3753 = vadd.f32 0.0, %v3752
  %v3754 = vpop.f32.mrf.mxu0
  %3755 = vmatprep.mubr.f32.mxu0 0.0
  %3756 = vmatmul.mubr.f32.gmra.mxu0 %v3564
  %v3757 = vpop.f32.mrf.mxu0
  %v3758 = vadd.f32 0.0, %v3757
  %v3759 = vpop.f32.mrf.mxu0
  %3760 = vmatprep.mubr.f32.mxu0 0.0
  %3761 = vmatmul.mubr.f32.gmra.mxu0 %v3567
  %v3762 = vpop.f32.mrf.mxu0
  %v3763 = vadd.f32 0.0, %v3762
  %v3764 = vpop.f32.mrf.mxu0
  %3765 = vmatprep.mubr.f32.mxu0 0.0
  %3766 = vmatmul.mubr.f32.gmra.mxu0 %v3570
  %v3767 = vpop.f32.mrf.mxu0
  %v3768 = vadd.f32 0.0, %v3767
  %v3769 = vpop.f32.mrf.mxu0
  %3770 = vmatprep.mubr.f32.mxu0 0.0
  %3771 = vmatmul.mubr.f32.gmra.mxu0 %v3573
  %v3772 = vpop.f32.mrf.mxu0
  %v3773 = vadd.f32 0.0, %v3772
  %v3774 = vpop.f32.mrf.mxu0
  %3775 = vmatprep.mubr.f32.mxu0 0.0
  %3776 = vmatmul.mubr.f32.gmra.mxu0 %v3576
  %v3777 = vpop.f32.mrf.mxu0
  %v3778 = vadd.f32 0.0, %v3777
  %v3779 = vpop.f32.mrf.mxu0
  %3780 = vmatprep.mubr.f32.mxu0 0.0
  %3781 = vmatmul.mubr.f32.gmra.mxu0 %v3579
  %v3782 = vpop.f32.mrf.mxu0
  %v3783 = vadd.f32 0.0, %v3782
  %v3784 = vpop.f32.mrf.mxu0
  %3785 = vmatprep.mubr.f32.mxu0 0.0
  %3786 = vmatmul.mubr.f32.gmra.mxu0 %v3582
  %v3787 = vpop.f32.mrf.mxu0
  %v3788 = vadd.f32 0.0, %v3787
  %v3789 = vpop.f32.mrf.mxu0
  %3790 = vmatprep.mubr.f32.mxu0 0.0
  %3791 = vmatmul.mubr.f32.gmra.mxu0 %v3585
  %v3792 = vpop.f32.mrf.mxu0
  %v3793 = vadd.f32 0.0, %v3792
  %v3794 = vpop.f32.mrf.mxu0
  %3795 = vmatprep.mubr.f32.mxu0 0.0
  %3796 = vmatmul.mubr.f32.gmra.mxu0 %v3588
  %v3797 = vpop.f32.mrf.mxu0
  %v3798 = vadd.f32 0.0, %v3797
  %v3799 = vpop.f32.mrf.mxu0
  %3800 = vmatprep.mubr.f32.mxu0 0.0
  %3801 = vmatmul.mubr.f32.gmra.mxu0 %v3591
  %v3802 = vpop.f32.mrf.mxu0
  %v3803 = vadd.f32 0.0, %v3802
  %v3804 = vpop.f32.mrf.mxu0
  %3805 = vmatprep.mubr.f32.mxu0 0.0
  %3806 = vmatmul.mubr.f32.gmra.mxu0 %v3594
  %v3807 = vpop.f32.mrf.mxu0
  %v3808 = vadd.f32 0.0, %v3807
  %v3809 = vpop.f32.mrf.mxu0
  %3810 = vmatprep.mubr.f32.mxu0 0.0
  %3811 = vmatmul.mubr.f32.gmra.mxu0 %v3597
  %v3812 = vpop.f32.mrf.mxu0
  %v3813 = vadd.f32 0.0, %v3812
  %v3814 = vpop.f32.mrf.mxu0
  %3815 = vmatprep.mubr.f32.mxu0 0.0
  %3816 = vmatmul.mubr.f32.gmra.mxu0 %v3600
  %v3817 = vpop.f32.mrf.mxu0
  %v3818 = vadd.f32 0.0, %v3817
  %v3819 = vpop.f32.mrf.mxu0
  %3820 = vmatprep.mubr.f32.mxu0 0.0
  %3821 = vmatmul.mubr.f32.gmra.mxu0 %v3603
  %v3822 = vpop.f32.mrf.mxu0
  %v3823 = vadd.f32 0.0, %v3822
  %v3824 = vpop.f32.mrf.mxu0
  %3825 = vmatprep.mubr.f32.mxu0 0.0
  %3826 = vmatmul.mubr.f32.gmra.mxu0 %v3606
  %v3827 = vpop.f32.mrf.mxu0
  %v3828 = vadd.f32 0.0, %v3827
  %v3829 = vpop.f32.mrf.mxu0
  %3830 = vmatprep.mubr.f32.mxu0 0.0
  %3831 = vmatmul.mubr.f32.gmra.mxu0 %v3609
  %v3832 = vpop.f32.mrf.mxu0
  %v3833 = vadd.f32 0.0, %v3832
  %v3834 = vpop.f32.mrf.mxu0
  %3835 = vmatprep.mubr.f32.mxu0 0.0
  %3836 = vmatmul.mubr.f32.gmra.mxu0 %v3612
  %v3837 = vpop.f32.mrf.mxu0
  %v3838 = vadd.f32 0.0, %v3837
  %v3839 = vpop.f32.mrf.mxu0
  %3840 = vmatprep.mubr.f32.mxu0 0.0
  %3841 = vmatmul.mubr.f32.gmra.mxu0 %v3615
  %v3842 = vpop.f32.mrf.mxu0
  %v3843 = vadd.f32 0.0, %v3842
  %v3844 = vpop.f32.mrf.mxu0
  %3845 = vmatprep.mubr.f32.mxu0 0.0
  %3846 = vmatmul.mubr.f32.gmra.mxu0 %v3618
  %v3847 = vpop.f32.mrf.mxu0
  %v3848 = vadd.f32 0.0, %v3847
  %v3849 = vpop.f32.mrf.mxu0
  %3850 = vmatprep.mubr.f32.mxu0 0.0
  %3851 = vmatmul.mubr.f32.gmra.mxu0 %v3621
  %v3852 = vpop.f32.mrf.mxu0
  %v3853 = vadd.f32 0.0, %v3852
  %v3854 = vpop.f32.mrf.mxu0
  %3855 = vmatprep.mubr.f32.mxu0 0.0
  %3856 = vmatmul.mubr.f32.gmra.mxu0 %v3624
  %v3857 = vpop.f32.mrf.mxu0
  %v3858 = vadd.f32 0.0, %v3857
  %v3859 = vpop.f32.mrf.mxu0
  %3860 = vmatprep.mubr.f32.mxu0 0.0
  %3861 = vmatmul.mubr.f32.gmra.mxu0 %v3627
  %v3862 = vpop.f32.mrf.mxu0
  %v3863 = vadd.f32 0.0, %v3862
  %v3864 = vpop.f32.mrf.mxu0
  %3865 = vmatprep.mubr.f32.mxu0 0.0
  %3866 = vmatmul.mubr.f32.gmra.mxu0 %v3630
  %v3867 = vpop.f32.mrf.mxu0
  %v3868 = vadd.f32 0.0, %v3867
  %v3869 = vpop.f32.mrf.mxu0
  %3870 = vmatprep.mubr.f32.mxu0 0.0
  %3871 = vmatmul.mubr.f32.gmra.mxu0 %v3633
  %v3872 = vpop.f32.mrf.mxu0
  %v3873 = vadd.f32 0.0, %v3872
  %v3874 = vpop.f32.mrf.mxu0
  %3875 = vmatprep.mubr.f32.mxu0 0.0
  %3876 = vmatmul.mubr.f32.gmra.mxu0 %v3636
  %v3877 = vpop.f32.mrf.mxu0
  %v3878 = vadd.f32 0.0, %v3877
  %v3879 = vpop.f32.mrf.mxu0
  %3880 = vmatprep.mubr.f32.mxu0 0.0
  %3881 = vmatmul.mubr.f32.gmra.mxu0 %v3639
  %v3882 = vpop.f32.mrf.mxu0
  %v3883 = vadd.f32 0.0, %v3882
  %v3884 = vpop.f32.mrf.mxu0
  %3885 = vmatprep.mubr.f32.mxu0 0.0
  %3886 = vmatmul.mubr.f32.gmra.mxu0 %v3642
  %v3887 = vpop.f32.mrf.mxu0
  %v3888 = vadd.f32 0.0, %v3887
  %v3889 = vpop.f32.mrf.mxu0
  %3890 = vmatprep.mubr.f32.mxu0 0.0
  %3891 = vmatmul.mubr.f32.gmra.mxu0 %v3645
  %v3892 = vpop.f32.mrf.mxu0
  %v3893 = vadd.f32 0.0, %v3892
  %v3894 = vpop.f32.mrf.mxu0
  %3895 = vmatprep.mubr.f32.mxu0 0.0
  %3896 = vmatmul.mubr.f32.gmra.mxu0 %v3648
  %v3897 = vpop.f32.mrf.mxu0
  %v3898 = vadd.f32 0.0, %v3897
  %v3899 = vpop.f32.mrf.mxu0
  %3900 = vmatprep.mubr.f32.mxu0 0.0
  %3901 = vmatmul.mubr.f32.gmra.mxu0 %v3651
  %v3902 = vpop.f32.mrf.mxu0
  %v3903 = vadd.f32 0.0, %v3902
  %v3904 = vpop.f32.mrf.mxu0
  %3905 = vmatprep.mubr.f32.mxu0 0.0
  %3906 = vmatmul.mubr.f32.gmra.mxu0 %v3654
  %v3907 = vpop.f32.mrf.mxu0
  %v3908 = vadd.f32 0.0, %v3907
  %v3909 = vpop.f32.mrf.mxu0
  %3910 = vmatprep.mubr.f32.mxu0 0.0
  %3911 = vmatmul.mubr.f32.gmra.mxu0 %v3657
  %v3912 = vpop.f32.mrf.mxu0
  %v3913 = vadd.f32 0.0, %v3912
  %v3914 = vpop.f32.mrf.mxu0
  %3915 = vmatprep.mubr.f32.mxu0 0.0
  %3916 = vmatmul.mubr.f32.gmra.mxu0 %v3660
  %v3917 = vpop.f32.mrf.mxu0
  %v3918 = vadd.f32 0.0, %v3917
  %v3919 = vpop.f32.mrf.mxu0
  %3920 = vmatprep.mubr.f32.mxu0 0.0
  %3921 = vmatmul.mubr.f32.gmra.mxu0 %v3663
  %v3922 = vpop.f32.mrf.mxu0
  %v3923 = vadd.f32 0.0, %v3922
  %v3924 = vpop.f32.mrf.mxu0
  %3925 = vmatprep.mubr.f32.mxu0 0.0
  %3926 = vmatmul.mubr.f32.gmra.mxu0 %v3666
  %v3927 = vpop.f32.mrf.mxu0
  %v3928 = vadd.f32 0.0, %v3927
  %v3929 = vpop.f32.mrf.mxu0
  %3930 = vmatprep.mubr.f32.mxu0 0.0
  %3931 = vmatmul.mubr.f32.gmra.mxu0 %v3669
  %v3932 = vpop.f32.mrf.mxu0
  %v3933 = vadd.f32 0.0, %v3932
  %v3934 = vpop.f32.mrf.mxu0
  %3935 = vdwg.mxu0
  %v3936 = vmul.f32 %v3738, %v190
  %v3937 = vmul.f32 %v3743, %v190
  %v3938 = vmul.f32 %v3748, %v190
  %v3939 = vmul.f32 %v3753, %v190
  %v3940 = vmul.f32 %v3758, %v190
  %v3941 = vmul.f32 %v3763, %v195
  %v3942 = vmul.f32 %v3768, %v195
  %v3943 = vmul.f32 %v3773, %v195
  %v3944 = vmul.f32 %v3778, %v195
  %v3945 = vmul.f32 %v3783, %v195
  %v3946 = vadd.f32 %v3936, %v3941
  %v3947 = vadd.f32 %v3937, %v3942
  %v3948 = vadd.f32 %v3938, %v3943
  %v3949 = vadd.f32 %v3939, %v3944
  %v3950 = vadd.f32 %v3940, %v3945
  %v3951 = vmul.f32 %v3788, %v200
  %v3952 = vmul.f32 %v3793, %v200
  %v3953 = vmul.f32 %v3798, %v200
  %v3954 = vmul.f32 %v3803, %v200
  %v3955 = vmul.f32 %v3808, %v200
  %v3956 = vadd.f32 %v3946, %v3951
  %v3957 = vadd.f32 %v3947, %v3952
  %v3958 = vadd.f32 %v3948, %v3953
  %v3959 = vadd.f32 %v3949, %v3954
  %v3960 = vadd.f32 %v3950, %v3955
  %v3961 = vmul.f32 %v3813, %v205
  %v3962 = vmul.f32 %v3818, %v205
  %v3963 = vmul.f32 %v3823, %v205
  %v3964 = vmul.f32 %v3828, %v205
  %v3965 = vmul.f32 %v3833, %v205
  %v3966 = vadd.f32 %v3956, %v3961
  %v3967 = vadd.f32 %v3957, %v3962
  %v3968 = vadd.f32 %v3958, %v3963
  %v3969 = vadd.f32 %v3959, %v3964
  %v3970 = vadd.f32 %v3960, %v3965
  %v3971 = vmul.f32 %v3838, %v210
  %v3972 = vmul.f32 %v3843, %v210
  %v3973 = vmul.f32 %v3848, %v210
  %v3974 = vmul.f32 %v3853, %v210
  %v3975 = vmul.f32 %v3858, %v210
  %v3976 = vadd.f32 %v3966, %v3971
  %v3977 = vadd.f32 %v3967, %v3972
  %v3978 = vadd.f32 %v3968, %v3973
  %v3979 = vadd.f32 %v3969, %v3974
  %v3980 = vadd.f32 %v3970, %v3975
  %v3981 = vmul.f32 %v3863, %v215
  %v3982 = vmul.f32 %v3868, %v215
  %v3983 = vmul.f32 %v3873, %v215
  %v3984 = vmul.f32 %v3878, %v215
  %v3985 = vmul.f32 %v3883, %v215
  %v3986 = vadd.f32 %v3976, %v3981
  %v3987 = vadd.f32 %v3977, %v3982
  %v3988 = vadd.f32 %v3978, %v3983
  %v3989 = vadd.f32 %v3979, %v3984
  %v3990 = vadd.f32 %v3980, %v3985
  %v3991 = vmul.f32 %v3888, %v220
  %v3992 = vmul.f32 %v3893, %v220
  %v3993 = vmul.f32 %v3898, %v220
  %v3994 = vmul.f32 %v3903, %v220
  %v3995 = vmul.f32 %v3908, %v220
  %v3996 = vadd.f32 %v3986, %v3991
  %v3997 = vadd.f32 %v3987, %v3992
  %v3998 = vadd.f32 %v3988, %v3993
  %v3999 = vadd.f32 %v3989, %v3994
  %v4000 = vadd.f32 %v3990, %v3995
  %v4001 = vmul.f32 %v3913, %v225
  %v4002 = vmul.f32 %v3918, %v225
  %v4003 = vmul.f32 %v3923, %v225
  %v4004 = vmul.f32 %v3928, %v225
  %v4005 = vmul.f32 %v3933, %v225
  %v4006 = vadd.f32 %v3996, %v4001
  %v4007 = vadd.f32 %v3997, %v4002
  %v4008 = vadd.f32 %v3998, %v4003
  %v4009 = vadd.f32 %v3999, %v4004
  %v4010 = vadd.f32 %v4000, %v4005
  %v4011 = vadd.f32 %v4006, %v2483
  %v4012 = vadd.f32 %v4007, %v2484
  %v4013 = vadd.f32 %v4008, %v2485
  %v4014 = vadd.f32 %v4009, %v2486
  %v4015 = vadd.f32 %v4010, %v2487
  %s4016 = scalar_lea.vmem %s5, 32
  %v4017 = vld [vmem:[%s4016] sm:$0xff]
  %v4018 = vld [vmem:[%s4016 + $0x8] sm:$0xff]
  %v4019 = vld [vmem:[%s4016 + $0x10] sm:$0xff]
  %v4020 = vld [vmem:[%s4016 + $0x18] sm:$0xff]
  %s4021 = scalar_lea.vmem %s6, 1
  %v4022 = vld [vmem:[%s4021] sm:$0x1]
  %v4024 = vlaneseq
  %v4025 = vshrl.u32 %v4024, 7
  %v4026 = vsub.s32 0, %v4025
  %v4027 = vrot.slane %v4022, %v4026
  %v4030 = vsel %vm317, %v4011, 0
  %v4033 = vsel %vm317, %v4012, 0
  %v4036 = vsel %vm317, %v4013, 0
  %v4039 = vsel %vm317, %v4014, 0
  %v4042 = vsel %vm317, %v4015, 0
  %4044 = vmatprep.subr.mxu0 0.0
  %4045 = vmatpush1.msra.mxu0 0.0
  %4046 = vmatprep.subr.mxu0 0.0
  %4047 = vmatpush1.msra.mxu0 0.0
  %4048 = vmatprep.subr.mxu0 0.0
  %4049 = vmatpush1.msra.mxu0 0.0
  %4050 = vmatprep.subr.mxu0 0.0
  %4051 = vmatpush1.msra.mxu0 0.0
  %4052 = vmatprep.subr.mxu0 0.0
  %4053 = vmatpush1.msra.mxu0 0.0
  %4054 = vmatprep.subr.mxu0 0.0
  %4055 = vmatpush1.msra.mxu0 0.0
  %4056 = vmatprep.subr.mxu0 0.0
  %4057 = vmatpush1.msra.mxu0 0.0
  %4058 = vmatprep.subr.mxu0 0.0
  %4059 = vmatpush1.msra.mxu0 0.0
  %4060 = vmatprep.subr.mxu0 0.0
  %4061 = vmatpush1.msra.mxu0 0.0
  %4062 = vmatprep.subr.mxu0 0.0
  %4063 = vmatpush1.msra.mxu0 0.0
  %4064 = vmatprep.subr.mxu0 0.0
  %4065 = vmatpush1.msra.mxu0 0.0
  %4066 = vmatprep.subr.mxu0 0.0
  %4067 = vmatpush1.msra.mxu0 0.0
  %4068 = vmatprep.subr.mxu0 0.0
  %4069 = vmatpush1.msra.mxu0 %v4020
  %4070 = vmatprep.subr.mxu0 0.0
  %4071 = vmatpush1.msra.mxu0 %v4019
  %4072 = vmatprep.subr.mxu0 0.0
  %4073 = vmatpush1.msra.mxu0 %v4018
  %4074 = vmatprep.subr.mxu0 0.0
  %4075 = vmatpush1.msra.mxu0 %v4017
  %4076 = vmatprep.subr.mxu0 0.0
  %4077 = vmatpush2.msra.mxu0 0.0
  %4078 = vmatprep.subr.mxu0 0.0
  %4079 = vmatpush2.msra.mxu0 0.0
  %4080 = vmatprep.subr.mxu0 0.0
  %4081 = vmatpush2.msra.mxu0 0.0
  %4082 = vmatprep.subr.mxu0 0.0
  %4083 = vmatpush2.msra.mxu0 0.0
  %4084 = vmatprep.subr.mxu0 0.0
  %4085 = vmatpush2.msra.mxu0 0.0
  %4086 = vmatprep.subr.mxu0 0.0
  %4087 = vmatpush2.msra.mxu0 0.0
  %4088 = vmatprep.subr.mxu0 0.0
  %4089 = vmatpush2.msra.mxu0 0.0
  %4090 = vmatprep.subr.mxu0 0.0
  %4091 = vmatpush2.msra.mxu0 0.0
  %4092 = vmatprep.subr.mxu0 0.0
  %4093 = vmatpush2.msra.mxu0 0.0
  %4094 = vmatprep.subr.mxu0 0.0
  %4095 = vmatpush2.msra.mxu0 0.0
  %4096 = vmatprep.subr.mxu0 0.0
  %4097 = vmatpush2.msra.mxu0 0.0
  %4098 = vmatprep.subr.mxu0 0.0
  %4099 = vmatpush2.msra.mxu0 0.0
  %4100 = vmatprep.subr.mxu0 0.0
  %4101 = vmatpush2.msra.mxu0 0.0
  %4102 = vmatprep.subr.mxu0 0.0
  %4103 = vmatpush2.msra.mxu0 0.0
  %4104 = vmatprep.subr.mxu0 0.0
  %4105 = vmatpush2.msra.mxu0 0.0
  %4106 = vmatprep.subr.mxu0 0.0
  %4107 = vmatpush2.msra.mxu0 0.0
  %4108 = vmatprep.mubr.f32.mxu0 0.0
  %4109 = vmatmul.mubr.f32.gmra.mxu0 %v4030
  %v4110 = vpop.f32.mrf.mxu0
  %v4111 = vadd.f32 %v4027, %v4110
  %v4112 = vpop.f32.mrf.mxu0
  %4113 = vmatprep.mubr.f32.mxu0 0.0
  %4114 = vmatmul.mubr.f32.gmra.mxu0 %v4033
  %v4115 = vpop.f32.mrf.mxu0
  %v4116 = vadd.f32 %v4027, %v4115
  %v4117 = vpop.f32.mrf.mxu0
  %4118 = vmatprep.mubr.f32.mxu0 0.0
  %4119 = vmatmul.mubr.f32.gmra.mxu0 %v4036
  %v4120 = vpop.f32.mrf.mxu0
  %v4121 = vadd.f32 %v4027, %v4120
  %v4122 = vpop.f32.mrf.mxu0
  %4123 = vmatprep.mubr.f32.mxu0 0.0
  %4124 = vmatmul.mubr.f32.gmra.mxu0 %v4039
  %v4125 = vpop.f32.mrf.mxu0
  %v4126 = vadd.f32 %v4027, %v4125
  %v4127 = vpop.f32.mrf.mxu0
  %4128 = vmatprep.mubr.f32.mxu0 0.0
  %4129 = vmatmul.mubr.f32.gmra.mxu0 %v4042
  %v4130 = vpop.f32.mrf.mxu0
  %v4131 = vadd.f32 %v4027, %v4130
  %v4132 = vpop.f32.mrf.mxu0
  %4133 = vdwg.mxu0
  %s4134 = scalar_lea.vmem %s9, 1
  %v4135 = vld [vmem:[%s4134] sm:$0x1]
  %s4136 = scalar_lea.vmem %s10, 1
  %v4137 = vld [vmem:[%s4136] sm:$0x1]
  %v4138 = vsel %vm317, %v4111, 0.0
  %4139 = vadd.xlane.f32.xlu0 %v4138
  %v4140 = vpop.xlane.xlu0 %4139
  %v4141 = vsel %vm317, %v4116, 0.0
  %4142 = vadd.xlane.f32.xlu0 %v4141
  %v4143 = vpop.xlane.xlu0 %4142
  %v4144 = vsel %vm317, %v4121, 0.0
  %4145 = vadd.xlane.f32.xlu0 %v4144
  %v4146 = vpop.xlane.xlu0 %4145
  %v4147 = vsel %vm317, %v4126, 0.0
  %4148 = vadd.xlane.f32.xlu0 %v4147
  %v4149 = vpop.xlane.xlu0 %4148
  %v4150 = vsel %vm317, %v4131, 0.0
  %4151 = vadd.xlane.f32.xlu0 %v4150
  %v4152 = vpop.xlane.xlu0 %4151
  %v4153 = vmul.f32 %v4140, %v333
  %v4154 = vmul.f32 %v4143, %v333
  %v4155 = vmul.f32 %v4146, %v333
  %v4156 = vmul.f32 %v4149, %v333
  %v4157 = vmul.f32 %v4152, %v333
  %v4158 = vsub.f32 %v4111, %v4153
  %v4159 = vsub.f32 %v4116, %v4154
  %v4160 = vsub.f32 %v4121, %v4155
  %v4161 = vsub.f32 %v4126, %v4156
  %v4162 = vsub.f32 %v4131, %v4157
  %v4163 = vmul.f32 %v4158, %v4158
  %v4164 = vmul.f32 %v4159, %v4159
  %v4165 = vmul.f32 %v4160, %v4160
  %v4166 = vmul.f32 %v4161, %v4161
  %v4167 = vmul.f32 %v4162, %v4162
  %v4168 = vsel %vm317, %v4163, 0.0
  %4169 = vadd.xlane.f32.xlu0 %v4168
  %v4170 = vpop.xlane.xlu0 %4169
  %v4171 = vsel %vm317, %v4164, 0.0
  %4172 = vadd.xlane.f32.xlu0 %v4171
  %v4173 = vpop.xlane.xlu0 %4172
  %v4174 = vsel %vm317, %v4165, 0.0
  %4175 = vadd.xlane.f32.xlu0 %v4174
  %v4176 = vpop.xlane.xlu0 %4175
  %v4177 = vsel %vm317, %v4166, 0.0
  %4178 = vadd.xlane.f32.xlu0 %v4177
  %v4179 = vpop.xlane.xlu0 %4178
  %v4180 = vsel %vm317, %v4167, 0.0
  %4181 = vadd.xlane.f32.xlu0 %v4180
  %v4182 = vpop.xlane.xlu0 %4181
  %v4183 = vmul.f32 %v4170, %v333
  %v4184 = vmul.f32 %v4173, %v333
  %v4185 = vmul.f32 %v4176, %v333
  %v4186 = vmul.f32 %v4179, %v333
  %v4187 = vmul.f32 %v4182, %v333
  %v4188 = vadd.f32 %v4183, 1e-05
  %v4189 = vadd.f32 %v4184, 1e-05
  %v4190 = vadd.f32 %v4185, 1e-05
  %v4191 = vadd.f32 %v4186, 1e-05
  %v4192 = vadd.f32 %v4187, 1e-05
  %v4193 = vrsqrt.pop %v4188
  %v4194 = vrsqrt.pop %v4189
  %v4195 = vrsqrt.pop %v4190
  %v4196 = vrsqrt.pop %v4191
  %v4197 = vrsqrt.pop %v4192
  %v4198 = vmul.f32 %v4158, %v4193
  %v4199 = vmul.f32 %v4159, %v4194
  %v4200 = vmul.f32 %v4160, %v4195
  %v4201 = vmul.f32 %v4161, %v4196
  %v4202 = vmul.f32 %v4162, %v4197
  %v4204 = vlaneseq
  %v4205 = vshrl.u32 %v4204, 7
  %v4206 = vsub.s32 0, %v4205
  %v4207 = vrot.slane %v4135, %v4206
  %v4209 = vmul.f32 %v4198, %v4207
  %v4210 = vmul.f32 %v4199, %v4207
  %v4211 = vmul.f32 %v4200, %v4207
  %v4212 = vmul.f32 %v4201, %v4207
  %v4213 = vmul.f32 %v4202, %v4207
  %v4215 = vlaneseq
  %v4216 = vshrl.u32 %v4215, 7
  %v4217 = vsub.s32 0, %v4216
  %v4218 = vrot.slane %v4137, %v4217
  %v4220 = vadd.f32 %v4209, %v4218
  %v4221 = vadd.f32 %v4210, %v4218
  %v4222 = vadd.f32 %v4211, %v4218
  %v4223 = vadd.f32 %v4212, %v4218
  %v4224 = vadd.f32 %v4213, %v4218
  %s4225 = scalar_lea.vmem %s11, 32
  %v4226 = vld [vmem:[%s4225] sm:$0xff]
  %v4227 = vld [vmem:[%s4225 + $0x8] sm:$0xff]
  %v4228 = vld [vmem:[%s4225 + $0x10] sm:$0xff]
  %v4229 = vld [vmem:[%s4225 + $0x18] sm:$0xff]
  %s4230 = scalar_lea.vmem %s12, 1
  %v4231 = vld [vmem:[%s4230] sm:$0x1]
  %v4233 = vlaneseq
  %v4234 = vshrl.u32 %v4233, 7
  %v4235 = vsub.s32 0, %v4234
  %v4236 = vrot.slane %v4231, %v4235
  %v4239 = vsel %vm317, %v4220, 0
  %v4242 = vsel %vm317, %v4221, 0
  %v4245 = vsel %vm317, %v4222, 0
  %v4248 = vsel %vm317, %v4223, 0
  %v4251 = vsel %vm317, %v4224, 0
  %4253 = vmatprep.subr.mxu0 0.0
  %4254 = vmatpush1.msra.mxu0 0.0
  %4255 = vmatprep.subr.mxu0 0.0
  %4256 = vmatpush1.msra.mxu0 0.0
  %4257 = vmatprep.subr.mxu0 0.0
  %4258 = vmatpush1.msra.mxu0 0.0
  %4259 = vmatprep.subr.mxu0 0.0
  %4260 = vmatpush1.msra.mxu0 0.0
  %4261 = vmatprep.subr.mxu0 0.0
  %4262 = vmatpush1.msra.mxu0 0.0
  %4263 = vmatprep.subr.mxu0 0.0
  %4264 = vmatpush1.msra.mxu0 0.0
  %4265 = vmatprep.subr.mxu0 0.0
  %4266 = vmatpush1.msra.mxu0 0.0
  %4267 = vmatprep.subr.mxu0 0.0
  %4268 = vmatpush1.msra.mxu0 0.0
  %4269 = vmatprep.subr.mxu0 0.0
  %4270 = vmatpush1.msra.mxu0 0.0
  %4271 = vmatprep.subr.mxu0 0.0
  %4272 = vmatpush1.msra.mxu0 0.0
  %4273 = vmatprep.subr.mxu0 0.0
  %4274 = vmatpush1.msra.mxu0 0.0
  %4275 = vmatprep.subr.mxu0 0.0
  %4276 = vmatpush1.msra.mxu0 0.0
  %4277 = vmatprep.subr.mxu0 0.0
  %4278 = vmatpush1.msra.mxu0 %v4229
  %4279 = vmatprep.subr.mxu0 0.0
  %4280 = vmatpush1.msra.mxu0 %v4228
  %4281 = vmatprep.subr.mxu0 0.0
  %4282 = vmatpush1.msra.mxu0 %v4227
  %4283 = vmatprep.subr.mxu0 0.0
  %4284 = vmatpush1.msra.mxu0 %v4226
  %4285 = vmatprep.subr.mxu0 0.0
  %4286 = vmatpush2.msra.mxu0 0.0
  %4287 = vmatprep.subr.mxu0 0.0
  %4288 = vmatpush2.msra.mxu0 0.0
  %4289 = vmatprep.subr.mxu0 0.0
  %4290 = vmatpush2.msra.mxu0 0.0
  %4291 = vmatprep.subr.mxu0 0.0
  %4292 = vmatpush2.msra.mxu0 0.0
  %4293 = vmatprep.subr.mxu0 0.0
  %4294 = vmatpush2.msra.mxu0 0.0
  %4295 = vmatprep.subr.mxu0 0.0
  %4296 = vmatpush2.msra.mxu0 0.0
  %4297 = vmatprep.subr.mxu0 0.0
  %4298 = vmatpush2.msra.mxu0 0.0
  %4299 = vmatprep.subr.mxu0 0.0
  %4300 = vmatpush2.msra.mxu0 0.0
  %4301 = vmatprep.subr.mxu0 0.0
  %4302 = vmatpush2.msra.mxu0 0.0
  %4303 = vmatprep.subr.mxu0 0.0
  %4304 = vmatpush2.msra.mxu0 0.0
  %4305 = vmatprep.subr.mxu0 0.0
  %4306 = vmatpush2.msra.mxu0 0.0
  %4307 = vmatprep.subr.mxu0 0.0
  %4308 = vmatpush2.msra.mxu0 0.0
  %4309 = vmatprep.subr.mxu0 0.0
  %4310 = vmatpush2.msra.mxu0 0.0
  %4311 = vmatprep.subr.mxu0 0.0
  %4312 = vmatpush2.msra.mxu0 0.0
  %4313 = vmatprep.subr.mxu0 0.0
  %4314 = vmatpush2.msra.mxu0 0.0
  %4315 = vmatprep.subr.mxu0 0.0
  %4316 = vmatpush2.msra.mxu0 0.0
  %4317 = vmatprep.mubr.f32.mxu0 0.0
  %4318 = vmatmul.mubr.f32.gmra.mxu0 %v4239
  %v4319 = vpop.f32.mrf.mxu0
  %v4320 = vadd.f32 %v4236, %v4319
  %v4321 = vpop.f32.mrf.mxu0
  %4322 = vmatprep.mubr.f32.mxu0 0.0
  %4323 = vmatmul.mubr.f32.gmra.mxu0 %v4242
  %v4324 = vpop.f32.mrf.mxu0
  %v4325 = vadd.f32 %v4236, %v4324
  %v4326 = vpop.f32.mrf.mxu0
  %4327 = vmatprep.mubr.f32.mxu0 0.0
  %4328 = vmatmul.mubr.f32.gmra.mxu0 %v4245
  %v4329 = vpop.f32.mrf.mxu0
  %v4330 = vadd.f32 %v4236, %v4329
  %v4331 = vpop.f32.mrf.mxu0
  %4332 = vmatprep.mubr.f32.mxu0 0.0
  %4333 = vmatmul.mubr.f32.gmra.mxu0 %v4248
  %v4334 = vpop.f32.mrf.mxu0
  %v4335 = vadd.f32 %v4236, %v4334
  %v4336 = vpop.f32.mrf.mxu0
  %4337 = vmatprep.mubr.f32.mxu0 0.0
  %4338 = vmatmul.mubr.f32.gmra.mxu0 %v4251
  %v4339 = vpop.f32.mrf.mxu0
  %v4340 = vadd.f32 %v4236, %v4339
  %v4341 = vpop.f32.mrf.mxu0
  %4342 = vdwg.mxu0
  %v4343 = vmul.f32 %v4320, 0.5
  %v4344 = vmul.f32 %v4325, 0.5
  %v4345 = vmul.f32 %v4330, 0.5
  %v4346 = vmul.f32 %v4335, 0.5
  %v4347 = vmul.f32 %v4340, 0.5
  %v4348 = vmul.f32 %v4320, 0.70710677
  %v4349 = vmul.f32 %v4325, 0.70710677
  %v4350 = vmul.f32 %v4330, 0.70710677
  %v4351 = vmul.f32 %v4335, 0.70710677
  %v4352 = vmul.f32 %v4340, 0.70710677
  %v4353 = verf.f32.pop %v4348
  %v4354 = verf.f32.pop %v4349
  %v4355 = verf.f32.pop %v4350
  %v4356 = verf.f32.pop %v4351
  %v4357 = verf.f32.pop %v4352
  %v4358 = vadd.f32 %v4353, 1.0
  %v4359 = vadd.f32 %v4354, 1.0
  %v4360 = vadd.f32 %v4355, 1.0
  %v4361 = vadd.f32 %v4356, 1.0
  %v4362 = vadd.f32 %v4357, 1.0
  %v4363 = vmul.f32 %v4343, %v4358
  %v4364 = vmul.f32 %v4344, %v4359
  %v4365 = vmul.f32 %v4345, %v4360
  %v4366 = vmul.f32 %v4346, %v4361
  %v4367 = vmul.f32 %v4347, %v4362
  %s4368 = scalar_lea.vmem %s13, 128
  %v4369 = vld [vmem:[%s4368] sm:$0xff]
  %v4370 = vld [vmem:[%s4368 + $0x8] sm:$0xff]
  %v4371 = vld [vmem:[%s4368 + $0x10] sm:$0xff]
  %v4372 = vld [vmem:[%s4368 + $0x18] sm:$0xff]
  %v4373 = vld [vmem:[%s4368 + $0x20] sm:$0xff]
  %v4374 = vld [vmem:[%s4368 + $0x28] sm:$0xff]
  %v4375 = vld [vmem:[%s4368 + $0x30] sm:$0xff]
  %v4376 = vld [vmem:[%s4368 + $0x38] sm:$0xff]
  %v4377 = vld [vmem:[%s4368 + $0x40] sm:$0xff]
  %v4378 = vld [vmem:[%s4368 + $0x48] sm:$0xff]
  %v4379 = vld [vmem:[%s4368 + $0x50] sm:$0xff]
  %v4380 = vld [vmem:[%s4368 + $0x58] sm:$0xff]
  %v4381 = vld [vmem:[%s4368 + $0x60] sm:$0xff]
  %v4382 = vld [vmem:[%s4368 + $0x68] sm:$0xff]
  %v4383 = vld [vmem:[%s4368 + $0x70] sm:$0xff]
  %v4384 = vld [vmem:[%s4368 + $0x78] sm:$0xff]
  %s4385 = scalar_lea.vmem %s14, 1
  %v4386 = vld [vmem:[%s4385] sm:$0x1]
  %v4388 = vlaneseq
  %v4389 = vshrl.u32 %v4388, 7
  %v4390 = vsub.s32 0, %v4389
  %v4391 = vrot.slane %v4386, %v4390
  %4393 = vmatprep.subr.mxu0 0.0
  %4394 = vmatpush1.msra.mxu0 %v4384
  %4395 = vmatprep.subr.mxu0 0.0
  %4396 = vmatpush1.msra.mxu0 %v4383
  %4397 = vmatprep.subr.mxu0 0.0
  %4398 = vmatpush1.msra.mxu0 %v4382
  %4399 = vmatprep.subr.mxu0 0.0
  %4400 = vmatpush1.msra.mxu0 %v4381
  %4401 = vmatprep.subr.mxu0 0.0
  %4402 = vmatpush1.msra.mxu0 %v4380
  %4403 = vmatprep.subr.mxu0 0.0
  %4404 = vmatpush1.msra.mxu0 %v4379
  %4405 = vmatprep.subr.mxu0 0.0
  %4406 = vmatpush1.msra.mxu0 %v4378
  %4407 = vmatprep.subr.mxu0 0.0
  %4408 = vmatpush1.msra.mxu0 %v4377
  %4409 = vmatprep.subr.mxu0 0.0
  %4410 = vmatpush1.msra.mxu0 %v4376
  %4411 = vmatprep.subr.mxu0 0.0
  %4412 = vmatpush1.msra.mxu0 %v4375
  %4413 = vmatprep.subr.mxu0 0.0
  %4414 = vmatpush1.msra.mxu0 %v4374
  %4415 = vmatprep.subr.mxu0 0.0
  %4416 = vmatpush1.msra.mxu0 %v4373
  %4417 = vmatprep.subr.mxu0 0.0
  %4418 = vmatpush1.msra.mxu0 %v4372
  %4419 = vmatprep.subr.mxu0 0.0
  %4420 = vmatpush1.msra.mxu0 %v4371
  %4421 = vmatprep.subr.mxu0 0.0
  %4422 = vmatpush1.msra.mxu0 %v4370
  %4423 = vmatprep.subr.mxu0 0.0
  %4424 = vmatpush1.msra.mxu0 %v4369
  %4425 = vmatprep.subr.mxu0 0.0
  %4426 = vmatpush2.msra.mxu0 0.0
  %4427 = vmatprep.subr.mxu0 0.0
  %4428 = vmatpush2.msra.mxu0 0.0
  %4429 = vmatprep.subr.mxu0 0.0
  %4430 = vmatpush2.msra.mxu0 0.0
  %4431 = vmatprep.subr.mxu0 0.0
  %4432 = vmatpush2.msra.mxu0 0.0
  %4433 = vmatprep.subr.mxu0 0.0
  %4434 = vmatpush2.msra.mxu0 0.0
  %4435 = vmatprep.subr.mxu0 0.0
  %4436 = vmatpush2.msra.mxu0 0.0
  %4437 = vmatprep.subr.mxu0 0.0
  %4438 = vmatpush2.msra.mxu0 0.0
  %4439 = vmatprep.subr.mxu0 0.0
  %4440 = vmatpush2.msra.mxu0 0.0
  %4441 = vmatprep.subr.mxu0 0.0
  %4442 = vmatpush2.msra.mxu0 0.0
  %4443 = vmatprep.subr.mxu0 0.0
  %4444 = vmatpush2.msra.mxu0 0.0
  %4445 = vmatprep.subr.mxu0 0.0
  %4446 = vmatpush2.msra.mxu0 0.0
  %4447 = vmatprep.subr.mxu0 0.0
  %4448 = vmatpush2.msra.mxu0 0.0
  %4449 = vmatprep.subr.mxu0 0.0
  %4450 = vmatpush2.msra.mxu0 0.0
  %4451 = vmatprep.subr.mxu0 0.0
  %4452 = vmatpush2.msra.mxu0 0.0
  %4453 = vmatprep.subr.mxu0 0.0
  %4454 = vmatpush2.msra.mxu0 0.0
  %4455 = vmatprep.subr.mxu0 0.0
  %4456 = vmatpush2.msra.mxu0 0.0
  %4457 = vmatprep.mubr.f32.mxu0 0.0
  %4458 = vmatmul.mubr.f32.gmra.mxu0 %v4363
  %v4459 = vpop.f32.mrf.mxu0
  %v4460 = vadd.f32 %v4391, %v4459
  %v4461 = vpop.f32.mrf.mxu0
  %4462 = vmatprep.mubr.f32.mxu0 0.0
  %4463 = vmatmul.mubr.f32.gmra.mxu0 %v4364
  %v4464 = vpop.f32.mrf.mxu0
  %v4465 = vadd.f32 %v4391, %v4464
  %v4466 = vpop.f32.mrf.mxu0
  %4467 = vmatprep.mubr.f32.mxu0 0.0
  %4468 = vmatmul.mubr.f32.gmra.mxu0 %v4365
  %v4469 = vpop.f32.mrf.mxu0
  %v4470 = vadd.f32 %v4391, %v4469
  %v4471 = vpop.f32.mrf.mxu0
  %4472 = vmatprep.mubr.f32.mxu0 0.0
  %4473 = vmatmul.mubr.f32.gmra.mxu0 %v4366
  %v4474 = vpop.f32.mrf.mxu0
  %v4475 = vadd.f32 %v4391, %v4474
  %v4476 = vpop.f32.mrf.mxu0
  %4477 = vmatprep.mubr.f32.mxu0 0.0
  %4478 = vmatmul.mubr.f32.gmra.mxu0 %v4367
  %v4479 = vpop.f32.mrf.mxu0
  %v4480 = vadd.f32 %v4391, %v4479
  %v4481 = vpop.f32.mrf.mxu0
  %4482 = vdwg.mxu0
  %v4483 = vadd.f32 %v4460, %v4220
  %v4484 = vadd.f32 %v4465, %v4221
  %v4485 = vadd.f32 %v4470, %v4222
  %v4486 = vadd.f32 %v4475, %v4223
  %v4487 = vadd.f32 %v4480, %v4224
  %v4488 = vld [vmem:[%s15] sm:$0x1]
  %v4489 = vld [vmem:[%s16] sm:$0x1]
  %v4490 = vsel %vm317, %v4483, 0.0
  %4491 = vadd.xlane.f32.xlu0 %v4490
  %v4492 = vpop.xlane.xlu0 %4491
  %v4493 = vsel %vm317, %v4484, 0.0
  %4494 = vadd.xlane.f32.xlu0 %v4493
  %v4495 = vpop.xlane.xlu0 %4494
  %v4496 = vsel %vm317, %v4485, 0.0
  %4497 = vadd.xlane.f32.xlu0 %v4496
  %v4498 = vpop.xlane.xlu0 %4497
  %v4499 = vsel %vm317, %v4486, 0.0
  %4500 = vadd.xlane.f32.xlu0 %v4499
  %v4501 = vpop.xlane.xlu0 %4500
  %v4502 = vsel %vm317, %v4487, 0.0
  %4503 = vadd.xlane.f32.xlu0 %v4502
  %v4504 = vpop.xlane.xlu0 %4503
  %v4505 = vmul.f32 %v4492, %v333
  %v4506 = vmul.f32 %v4495, %v333
  %v4507 = vmul.f32 %v4498, %v333
  %v4508 = vmul.f32 %v4501, %v333
  %v4509 = vmul.f32 %v4504, %v333
  %v4510 = vsub.f32 %v4483, %v4505
  %v4511 = vsub.f32 %v4484, %v4506
  %v4512 = vsub.f32 %v4485, %v4507
  %v4513 = vsub.f32 %v4486, %v4508
  %v4514 = vsub.f32 %v4487, %v4509
  %v4515 = vmul.f32 %v4510, %v4510
  %v4516 = vmul.f32 %v4511, %v4511
  %v4517 = vmul.f32 %v4512, %v4512
  %v4518 = vmul.f32 %v4513, %v4513
  %v4519 = vmul.f32 %v4514, %v4514
  %v4520 = vsel %vm317, %v4515, 0.0
  %4521 = vadd.xlane.f32.xlu0 %v4520
  %v4522 = vpop.xlane.xlu0 %4521
  %v4523 = vsel %vm317, %v4516, 0.0
  %4524 = vadd.xlane.f32.xlu0 %v4523
  %v4525 = vpop.xlane.xlu0 %4524
  %v4526 = vsel %vm317, %v4517, 0.0
  %4527 = vadd.xlane.f32.xlu0 %v4526
  %v4528 = vpop.xlane.xlu0 %4527
  %v4529 = vsel %vm317, %v4518, 0.0
  %4530 = vadd.xlane.f32.xlu0 %v4529
  %v4531 = vpop.xlane.xlu0 %4530
  %v4532 = vsel %vm317, %v4519, 0.0
  %4533 = vadd.xlane.f32.xlu0 %v4532
  %v4534 = vpop.xlane.xlu0 %4533
  %v4535 = vmul.f32 %v4522, %v333
  %v4536 = vmul.f32 %v4525, %v333
  %v4537 = vmul.f32 %v4528, %v333
  %v4538 = vmul.f32 %v4531, %v333
  %v4539 = vmul.f32 %v4534, %v333
  %v4540 = vadd.f32 %v4535, 1e-05
  %v4541 = vadd.f32 %v4536, 1e-05
  %v4542 = vadd.f32 %v4537, 1e-05
  %v4543 = vadd.f32 %v4538, 1e-05
  %v4544 = vadd.f32 %v4539, 1e-05
  %v4545 = vrsqrt.pop %v4540
  %v4546 = vrsqrt.pop %v4541
  %v4547 = vrsqrt.pop %v4542
  %v4548 = vrsqrt.pop %v4543
  %v4549 = vrsqrt.pop %v4544
  %v4550 = vmul.f32 %v4510, %v4545
  %v4551 = vmul.f32 %v4511, %v4546
  %v4552 = vmul.f32 %v4512, %v4547
  %v4553 = vmul.f32 %v4513, %v4548
  %v4554 = vmul.f32 %v4514, %v4549
  %v4556 = vlaneseq
  %v4557 = vshrl.u32 %v4556, 7
  %v4558 = vsub.s32 0, %v4557
  %v4559 = vrot.slane %v4488, %v4558
  %v4561 = vmul.f32 %v4550, %v4559
  %v4562 = vmul.f32 %v4551, %v4559
  %v4563 = vmul.f32 %v4552, %v4559
  %v4564 = vmul.f32 %v4553, %v4559
  %v4565 = vmul.f32 %v4554, %v4559
  %v4567 = vlaneseq
  %v4568 = vshrl.u32 %v4567, 7
  %v4569 = vsub.s32 0, %v4568
  %v4570 = vrot.slane %v4489, %v4569
  %v4572 = vadd.f32 %v4561, %v4570
  %v4573 = vadd.f32 %v4562, %v4570
  %v4574 = vadd.f32 %v4563, %v4570
  %v4575 = vadd.f32 %v4564, %v4570
  %v4576 = vadd.f32 %v4565, %v4570
  %v4577 = vld [vmem:[%s17] sm:$0xff]
  %v4578 = vld [vmem:[%s17 + $0x8] sm:$0xff]
  %v4579 = vld [vmem:[%s17 + $0x10] sm:$0xff]
  %v4580 = vld [vmem:[%s17 + $0x18] sm:$0xff]
  %v4581 = vld [vmem:[%s18] sm:$0x1]
  %v4583 = vlaneseq
  %v4584 = vshrl.u32 %v4583, 7
  %v4585 = vsub.s32 0, %v4584
  %v4586 = vrot.slane %v4581, %v4585
  %v4589 = vsel %vm317, %v4572, 0
  %v4592 = vsel %vm317, %v4573, 0
  %v4595 = vsel %vm317, %v4574, 0
  %v4598 = vsel %vm317, %v4575, 0
  %v4601 = vsel %vm317, %v4576, 0
  %4603 = vmatprep.subr.mxu0 0.0
  %4604 = vmatpush1.msra.mxu0 0.0
  %4605 = vmatprep.subr.mxu0 0.0
  %4606 = vmatpush1.msra.mxu0 0.0
  %4607 = vmatprep.subr.mxu0 0.0
  %4608 = vmatpush1.msra.mxu0 0.0
  %4609 = vmatprep.subr.mxu0 0.0
  %4610 = vmatpush1.msra.mxu0 0.0
  %4611 = vmatprep.subr.mxu0 0.0
  %4612 = vmatpush1.msra.mxu0 0.0
  %4613 = vmatprep.subr.mxu0 0.0
  %4614 = vmatpush1.msra.mxu0 0.0
  %4615 = vmatprep.subr.mxu0 0.0
  %4616 = vmatpush1.msra.mxu0 0.0
  %4617 = vmatprep.subr.mxu0 0.0
  %4618 = vmatpush1.msra.mxu0 0.0
  %4619 = vmatprep.subr.mxu0 0.0
  %4620 = vmatpush1.msra.mxu0 0.0
  %4621 = vmatprep.subr.mxu0 0.0
  %4622 = vmatpush1.msra.mxu0 0.0
  %4623 = vmatprep.subr.mxu0 0.0
  %4624 = vmatpush1.msra.mxu0 0.0
  %4625 = vmatprep.subr.mxu0 0.0
  %4626 = vmatpush1.msra.mxu0 0.0
  %4627 = vmatprep.subr.mxu0 0.0
  %4628 = vmatpush1.msra.mxu0 %v4580
  %4629 = vmatprep.subr.mxu0 0.0
  %4630 = vmatpush1.msra.mxu0 %v4579
  %4631 = vmatprep.subr.mxu0 0.0
  %4632 = vmatpush1.msra.mxu0 %v4578
  %4633 = vmatprep.subr.mxu0 0.0
  %4634 = vmatpush1.msra.mxu0 %v4577
  %4635 = vmatprep.subr.mxu0 0.0
  %4636 = vmatpush2.msra.mxu0 0.0
  %4637 = vmatprep.subr.mxu0 0.0
  %4638 = vmatpush2.msra.mxu0 0.0
  %4639 = vmatprep.subr.mxu0 0.0
  %4640 = vmatpush2.msra.mxu0 0.0
  %4641 = vmatprep.subr.mxu0 0.0
  %4642 = vmatpush2.msra.mxu0 0.0
  %4643 = vmatprep.subr.mxu0 0.0
  %4644 = vmatpush2.msra.mxu0 0.0
  %4645 = vmatprep.subr.mxu0 0.0
  %4646 = vmatpush2.msra.mxu0 0.0
  %4647 = vmatprep.subr.mxu0 0.0
  %4648 = vmatpush2.msra.mxu0 0.0
  %4649 = vmatprep.subr.mxu0 0.0
  %4650 = vmatpush2.msra.mxu0 0.0
  %4651 = vmatprep.subr.mxu0 0.0
  %4652 = vmatpush2.msra.mxu0 0.0
  %4653 = vmatprep.subr.mxu0 0.0
  %4654 = vmatpush2.msra.mxu0 0.0
  %4655 = vmatprep.subr.mxu0 0.0
  %4656 = vmatpush2.msra.mxu0 0.0
  %4657 = vmatprep.subr.mxu0 0.0
  %4658 = vmatpush2.msra.mxu0 0.0
  %4659 = vmatprep.subr.mxu0 0.0
  %4660 = vmatpush2.msra.mxu0 0.0
  %4661 = vmatprep.subr.mxu0 0.0
  %4662 = vmatpush2.msra.mxu0 0.0
  %4663 = vmatprep.subr.mxu0 0.0
  %4664 = vmatpush2.msra.mxu0 0.0
  %4665 = vmatprep.subr.mxu0 0.0
  %4666 = vmatpush2.msra.mxu0 0.0
  %4667 = vmatprep.mubr.f32.mxu0 0.0
  %4668 = vmatmul.mubr.f32.gmra.mxu0 %v4589
  %v4669 = vpop.f32.mrf.mxu0
  %v4670 = vadd.f32 %v4586, %v4669
  %v4671 = vpop.f32.mrf.mxu0
  %4672 = vmatprep.mubr.f32.mxu0 0.0
  %4673 = vmatmul.mubr.f32.gmra.mxu0 %v4592
  %v4674 = vpop.f32.mrf.mxu0
  %v4675 = vadd.f32 %v4586, %v4674
  %v4676 = vpop.f32.mrf.mxu0
  %4677 = vmatprep.mubr.f32.mxu0 0.0
  %4678 = vmatmul.mubr.f32.gmra.mxu0 %v4595
  %v4679 = vpop.f32.mrf.mxu0
  %v4680 = vadd.f32 %v4586, %v4679
  %v4681 = vpop.f32.mrf.mxu0
  %4682 = vmatprep.mubr.f32.mxu0 0.0
  %4683 = vmatmul.mubr.f32.gmra.mxu0 %v4598
  %v4684 = vpop.f32.mrf.mxu0
  %v4685 = vadd.f32 %v4586, %v4684
  %v4686 = vpop.f32.mrf.mxu0
  %4687 = vmatprep.mubr.f32.mxu0 0.0
  %4688 = vmatmul.mubr.f32.gmra.mxu0 %v4601
  %v4689 = vpop.f32.mrf.mxu0
  %v4690 = vadd.f32 %v4586, %v4689
  %v4691 = vpop.f32.mrf.mxu0
  %4692 = vdwg.mxu0
  %4693 = vst [vmem:[%s19] sm:$0xff] %v4670
  %4694 = vst [vmem:[%s19 + $0x8] sm:$0xff] %v4675
  %4695 = vst [vmem:[%s19 + $0x10] sm:$0xff] %v4680
  %4696 = vst [vmem:[%s19 + $0x18] sm:$0xff] %v4685
  %4697 = vst [vmem:[%s19 + $0x20] sm:$0xff] %v4690
  // Predicated region
  $region78: #{vit_forward.1} parent=0 // pred_check
    _
  $region79: #{vit_forward.1} parent=0 // pred_check_branch
    %4699 = sbr.rel (0) target = $region81
  $region80: #{vit_forward.1} parent=0 // pred_region
    _
  $region81: #{vit_forward.1} parent=0 // pred_fallthru
    _
  // Predicated region
  $region82: #{vit_forward.1} parent=0 // pred_check
    _
  $region83: #{vit_forward.1} parent=0 // pred_check_branch
    %4701 = sbr.rel (0) target = $region85
  $region84: #{vit_forward.1} parent=0 // pred_region
    _
  $region85: #{vit_forward.1} parent=0 // pred_fallthru
    _

</llo_original>
